<compile_context>
chip_gen: v5e
topology: v5e:2x2
jax: 0.10.0
libtpu: 0.0.40
codegen_flags: <defaults>
</compile_context>

<pallas_src>
import math

import jax
import jax.numpy as jnp
import numpy as np
from jax import lax
from jax.experimental import pallas as pl
from jax.experimental.pallas import tpu as pltpu

# --- config: INR(input_dim=5, output_dim=3, hidden_dim=32, hidden_layers=4,
#              max_order=3, time=10.0, skip=True) ; SphericalHarmonicsLayer(tpdim=2) ---
MAX_ORDER = 3
TPDIM = 2                       # time/pressure features
D_IN = TPDIM + 3                # + (x, y, z)
HSH = (MAX_ORDER + 1) ** 2      # 16
HID = 32
OUT_DIM = 3
HIDDEN_LAYERS = 4
OMEGA = 10.0                    # `time` argument of INR -> omega of the SH layer
SKIP_IDX = math.ceil(HIDDEN_LAYERS / 2)   # hidden layer that consumes cat([h, x_in])

TILE_N = 1024                   # points per grid step (lane axis); multiple of 256

# --- packed weight slab: one (SLAB_ROWS, SLAB_COLS) f32 array.
#     Each layer's weight (out, in) lives at rows [ROW_*, ROW_*+out), cols [0, in);
#     its bias lives in column COL_BIAS of the same rows.  Row offsets are
#     sublane-aligned (multiples of 8). ---
ROW_WTP = 0                     # (HSH, TPDIM)
ROW_W1 = ROW_WTP + HSH          # 16  (HID, HSH)
ROW_W2 = ROW_W1 + HID           # 48  (HID, HID)
ROW_W3 = ROW_W2 + HID           # 80  (HID, HID + D_IN)  [skip layer: cols 0:HID -> h, HID: -> x_in]
ROW_W4 = ROW_W3 + HID           # 112 (HID, HID)
ROW_W5 = ROW_W4 + HID           # 144 (OUT_DIM, HID)
SLAB_ROWS = ROW_W5 + 8          # 152 (OUT_DIM=3 padded to 8)
COL_BIAS = HID + D_IN           # 37  (max fan-in = skip layer)
SLAB_COLS = COL_BIAS + 1        # 38


# ---------------------------------------------------------------------------
# spherical-harmonics math (static python unroll -> pure elementwise jnp ops)
# ---------------------------------------------------------------------------
def _assoc_legendre(l, m, ct, st):
    """Associated Legendre P_l^m(cos(theta)) (no Condon–Shortley phase), static recurrence."""
    pmm = jnp.ones_like(ct)
    if m > 0:
        dfact = 1.0
        for k in range(1, m + 1):
            dfact *= 2 * k - 1
        pmm = dfact * st ** m
    if l == m:
        return pmm
    pm1 = (2 * m + 1) * ct * pmm
    if l == m + 1:
        return pm1
    pprev2, pprev1 = pmm, pm1
    for ll in range(m + 2, l + 1):
        cur = ((2 * ll - 1) * ct * pprev1 - (ll + m - 1) * pprev2) / (ll - m)
        pprev2, pprev1 = pprev1, cur
    return pprev1


def _sh_norm(l, m_abs):
    return math.sqrt((2 * l + 1) / (4 * math.pi)
                     * math.factorial(l - m_abs) / math.factorial(l + m_abs))


def _sh_columns(ct, st, cos_m, sin_m):
    """Real orthonormal SH Y_l^m, l=0..MAX_ORDER, m=-l..l -> list of HSH elementwise arrays."""
    cols = []
    for l in range(MAX_ORDER + 1):
        for m in range(-l, l + 1):
            ma = abs(m)
            P = _assoc_legendre(l, ma, ct, st)
            nrm = _sh_norm(l, ma)
            if m == 0:
                cols.append(nrm * P)
            elif m > 0:
                cols.append(math.sqrt(2.0) * nrm * P * cos_m[ma])
            else:
                cols.append(math.sqrt(2.0) * nrm * P * sin_m[ma])
    return cols


# ---------------------------------------------------------------------------
# Pallas kernel: whole INR forward for one tile of points (feature-major layout)
# ---------------------------------------------------------------------------
def inr_kernel(x_ref, w_ref, o_ref):
    x = x_ref[...]                                    # (D_IN, T) feature-major, lane-dense
    tp = x[:TPDIM, :]                                 # (TPDIM, T)
    px = x[TPDIM:TPDIM + 1, :]                        # (1, T)
    py = x[TPDIM + 1:TPDIM + 2, :]
    pz = x[TPDIM + 2:TPDIM + 3, :]

    # spherical angles via rsqrt (EUP slot, essentially free) instead of sqrt/div chains
    eps = 1e-12
    rho2 = px * px + py * py
    inv_r = lax.rsqrt(rho2 + pz * pz + eps)           # 1/r   (r == 1 for unit-sphere inputs)
    inv_rho = lax.rsqrt(rho2 + eps)                   # 1/rho
    ct = jnp.clip(pz * inv_r, -1.0, 1.0)              # cos(theta), clipped for parity with arccos
    st = rho2 * inv_rho * inv_r                       # sin(theta) = rho / r  >= 0
    cphi = jnp.where(rho2 < eps, 1.0, px * inv_rho)   # cos(phi)  (pole convention phi = 0)
    sphi = jnp.where(rho2 < eps, 0.0, py * inv_rho)   # sin(phi)

    # cos(m*phi), sin(m*phi) via Chebyshev-style recurrence (no atan2 needed)
    cos_m = [jnp.ones_like(cphi), cphi]
    sin_m = [jnp.zeros_like(sphi), sphi]
    for m in range(2, MAX_ORDER + 1):
        c_prev, s_prev = cos_m[-1], sin_m[-1]
        cos_m.append(c_prev * cphi - s_prev * sphi)
        sin_m.append(s_prev * cphi + c_prev * sphi)

    # SH basis: stack the HSH lane-dense rows along sublanes -> (HSH, T)
    sh = jnp.concatenate(_sh_columns(ct, st, cos_m, sin_m), axis=0)

    # linear_tp(time_pressure): tiny-K (=TPDIM) outer-product unroll on the VPU
    wtp = w_ref[ROW_WTP:ROW_WTP + HSH, 0:TPDIM]                       # (HSH, TPDIM)
    btp = w_ref[ROW_WTP:ROW_WTP + HSH, COL_BIAS:COL_BIAS + 1]         # (HSH, 1)
    lin_tp = btp
    for j in range(TPDIM):
        lin_tp = lin_tp + wtp[:, j:j + 1] * tp[j:j + 1, :]
    h = sh * jnp.sin(OMEGA * lin_tp)                  # SphericalHarmonicsLayer output (HSH, T)

    def dense(row, n_out, n_in, act):
        w = w_ref[row:row + n_out, 0:n_in]                            # (n_out, n_in)
        b = w_ref[row:row + n_out, COL_BIAS:COL_BIAS + 1]             # (n_out, 1)
        return jnp.dot(w, act, preferred_element_type=jnp.float32) + b

    # ReLU MLP trunk (MXU matmuls with N = TILE_N on the lane axis)
    h = jnp.maximum(dense(ROW_W1, HID, HSH, h), 0.0)
    h = jnp.maximum(dense(ROW_W2, HID, HID, h), 0.0)
    # skip: cat([h, x_in], -1) @ W3^T  ==  W3[:, :HID] @ h + W3[:, HID:] @ x_in
    w3x = w_ref[ROW_W3:ROW_W3 + HID, HID:HID + D_IN]
    h = jnp.maximum(dense(ROW_W3, HID, HID, h)
                    + jnp.dot(w3x, x, preferred_element_type=jnp.float32), 0.0)
    h = jnp.maximum(dense(ROW_W4, HID, HID, h), 0.0)
    o_ref[...] = dense(ROW_W5, OUT_DIM, HID, h)       # (OUT_DIM, T): lane-dense unmasked stores


# ---------------------------------------------------------------------------
# wrapper: pads ragged N, transposes to feature-major, runs the tiled kernel
# ---------------------------------------------------------------------------
@jax.jit
def inr_forward(x, w_slab):
    """x: (N, D_IN) rows of [time, pressure, x, y, z]  ->  (N, OUT_DIM)."""
    n = x.shape[0]
    n_pad = -(-n // TILE_N) * TILE_N                  # round up; padded tail rows are discarded
    xt = jnp.pad(x.astype(jnp.float32), ((0, n_pad - n), (0, 0))).T   # (D_IN, n_pad)
    out_t = pl.pallas_call(
        inr_kernel,
        out_shape=jax.ShapeDtypeStruct((OUT_DIM, n_pad), jnp.float32),
        grid_spec=pltpu.PrefetchScalarGridSpec(
            num_scalar_prefetch=0,
            grid=(n_pad // TILE_N,),
            in_specs=[
                pl.BlockSpec((D_IN, TILE_N), lambda i: (0, i)),
                # constant index_map -> single resident weight slab, DMA elided after step 0
                pl.BlockSpec((SLAB_ROWS, SLAB_COLS), lambda i: (0, 0)),
            ],
            out_specs=pl.BlockSpec((OUT_DIM, TILE_N), lambda i: (0, i)),
        ),
        compiler_params=pltpu.CompilerParams(dimension_semantics=("parallel",)),
    )(xt, w_slab)
    return out_t[:, :n].T


# ---------------------------------------------------------------------------
# deterministic parameter init (mirrors nn.Linear defaults; linear_tp.weight ~ U(-1,1))
# weights are PyTorch-oriented: (out_features, in_features); biases (out_features,)
# ---------------------------------------------------------------------------
def init_params(key):
    ks = jax.random.split(key, 12)

    def linear(kw, kb, fan_in, fan_out):
        bound = 1.0 / math.sqrt(fan_in)
        w = jax.random.uniform(kw, (fan_out, fan_in), jnp.float32, -bound, bound)
        b = jax.random.uniform(kb, (fan_out,), jnp.float32, -bound, bound)
        return w, b

    wtp = jax.random.uniform(ks[0], (HSH, TPDIM), jnp.float32, -1.0, 1.0)
    btp = jax.random.uniform(ks[1], (HSH,), jnp.float32,
                             -1.0 / math.sqrt(TPDIM), 1.0 / math.sqrt(TPDIM))
    w1, b1 = linear(ks[2], ks[3], HSH, HID)            # ReLU layer i=0
    w2, b2 = linear(ks[4], ks[5], HID, HID)            # ReLU layer i=1
    w3, b3 = linear(ks[6], ks[7], HID + D_IN, HID)     # ReLU layer i=SKIP_IDX (skip concat)
    w4, b4 = linear(ks[8], ks[9], HID, HID)            # ReLU layer i=3
    w5, b5 = linear(ks[10], ks[11], HID, OUT_DIM)      # final linear
    return dict(wtp=wtp, btp=btp, w1=w1, b1=b1, w2=w2, b2=b2,
                w3=w3, b3=b3, w4=w4, b4=b4, w5=w5, b5=b5)


def pack_params(p):
    """Pack all weights/biases into one (SLAB_ROWS, SLAB_COLS) f32 slab."""
    slab = jnp.zeros((SLAB_ROWS, SLAB_COLS), jnp.float32)

    def put(slab, row, w, b):
        n_out, n_in = w.shape
        slab = slab.at[row:row + n_out, 0:n_in].set(w)
        slab = slab.at[row:row + n_out, COL_BIAS].set(b)
        return slab

    slab = put(slab, ROW_WTP, p["wtp"], p["btp"])
    slab = put(slab, ROW_W1, p["w1"], p["b1"])
    slab = put(slab, ROW_W2, p["w2"], p["b2"])
    slab = put(slab, ROW_W3, p["w3"], p["b3"])
    slab = put(slab, ROW_W4, p["w4"], p["b4"])
    slab = put(slab, ROW_W5, p["w5"], p["b5"])
    return slab


# ---------------------------------------------------------------------------
# pure-JAX reference (uses arccos/atan2 + explicit cos/sin(m*phi)) for correctness check
# ---------------------------------------------------------------------------
def reference_forward(x, p):
    tp = x[:, :TPDIM]
    xyz = x[:, TPDIM:]
    r = jnp.linalg.norm(xyz, axis=-1, keepdims=True)
    theta = jnp.arccos(jnp.clip(xyz[:, 2:3] / r, -1.0, 1.0))
    phi = jnp.arctan2(xyz[:, 1:2], xyz[:, 0:1])
    ct, st = jnp.cos(theta), jnp.sin(theta)
    cos_m = [jnp.cos(m * phi) for m in range(MAX_ORDER + 1)]
    sin_m = [jnp.sin(m * phi) for m in range(MAX_ORDER + 1)]
    sh = jnp.concatenate(_sh_columns(ct, st, cos_m, sin_m), axis=-1)
    h = sh * jnp.sin(OMEGA * (tp @ p["wtp"].T + p["btp"]))
    h = jax.nn.relu(h @ p["w1"].T + p["b1"])
    h = jax.nn.relu(h @ p["w2"].T + p["b2"])
    h = jax.nn.relu(jnp.concatenate([h, x], axis=-1) @ p["w3"].T + p["b3"])  # cat([h, x_in]) @ W3^T
    h = jax.nn.relu(h @ p["w4"].T + p["b4"])
    return h @ p["w5"].T + p["b5"]


if __name__ == "__main__":
    key = jax.random.PRNGKey(0)
    kx, ktp, kp = jax.random.split(key, 3)

    N = 2000   # non-multiple of TILE_N -> exercises the padded tail; 2 grid steps after padding
    xyz = jax.random.normal(kx, (N, 3), jnp.float32)
    xyz = xyz / jnp.linalg.norm(xyz, axis=-1, keepdims=True)   # points on the unit sphere
    tp = jax.random.normal(ktp, (N, TPDIM), jnp.float32)
    x = jnp.concatenate([tp, xyz], axis=-1)                    # (N, 5): [time, pressure, x, y, z]

    params = init_params(kp)
    w_slab = pack_params(params)

    out = jax.block_until_ready(inr_forward(x, w_slab))
    ref = reference_forward(x, params)

    assert out.shape == (N, OUT_DIM)
    np.testing.assert_allclose(np.asarray(out), np.asarray(ref), rtol=3e-4, atol=3e-4)
    print("KERNEL_OK")
</pallas_src>

<mosaic_0001>
module attributes {stable_mosaic.version = 11 : i64} {
  func.func @inr_kernel(%arg0: i32, %arg1: memref<5x1024xf32, #tpu.memory_space<vmem>>, %arg2: memref<152x38xf32, #tpu.memory_space<vmem>>, %arg3: memref<3x1024xf32, #tpu.memory_space<vmem>>) attributes {dimension_semantics = [#tpu.dimension_semantics<parallel>], iteration_bounds = array<i64: 2>, scalar_prefetch = 0 : i64, scratch_operands = 0 : i64, tpu.core_type = #tpu.core_type<tc>, window_params = [{transform_indices = @transform_0, window_bounds = array<i64: 5, 1024>}, {pipeline_mode = #tpu.pipeline_mode<synchronous>, transform_indices = @transform_1, window_bounds = array<i64: 152, 38>}, {transform_indices = @transform_2, window_bounds = array<i64: 3, 1024>}]} {
    %c0 = arith.constant 0 : index
    %c0_0 = arith.constant 0 : index
    %0 = vector.load %arg1[%c0, %c0_0] : memref<5x1024xf32, #tpu.memory_space<vmem>>, vector<5x1024xf32>
    %1 = vector.extract_strided_slice %0 {offsets = [0, 0], sizes = [2, 1024], strides = [1, 1]} : vector<5x1024xf32> to vector<2x1024xf32>
    %2 = vector.extract_strided_slice %0 {offsets = [2, 0], sizes = [1, 1024], strides = [1, 1]} : vector<5x1024xf32> to vector<1x1024xf32>
    %3 = vector.extract_strided_slice %0 {offsets = [3, 0], sizes = [1, 1024], strides = [1, 1]} : vector<5x1024xf32> to vector<1x1024xf32>
    %4 = vector.extract_strided_slice %0 {offsets = [4, 0], sizes = [1, 1024], strides = [1, 1]} : vector<5x1024xf32> to vector<1x1024xf32>
    %5 = arith.mulf %2, %2 : vector<1x1024xf32>
    %6 = arith.mulf %3, %3 : vector<1x1024xf32>
    %7 = arith.addf %5, %6 : vector<1x1024xf32>
    %8 = arith.mulf %4, %4 : vector<1x1024xf32>
    %9 = arith.addf %7, %8 : vector<1x1024xf32>
    %cst = arith.constant 9.99999996E-13 : f32
    %10 = vector.broadcast %cst : f32 to vector<1x1024xf32>
    %11 = arith.addf %9, %10 : vector<1x1024xf32>
    %12 = math.rsqrt %11 : vector<1x1024xf32>
    %cst_1 = arith.constant 9.99999996E-13 : f32
    %13 = vector.broadcast %cst_1 : f32 to vector<1x1024xf32>
    %14 = arith.addf %7, %13 : vector<1x1024xf32>
    %15 = math.rsqrt %14 : vector<1x1024xf32>
    %16 = arith.mulf %4, %12 : vector<1x1024xf32>
    %cst_2 = arith.constant -1.000000e+00 : f32
    %cst_3 = arith.constant 1.000000e+00 : f32
    %17 = vector.broadcast %cst_2 : f32 to vector<1x1024xf32>
    %18 = arith.maximumf %17, %16 : vector<1x1024xf32>
    %19 = vector.broadcast %cst_3 : f32 to vector<1x1024xf32>
    %20 = arith.minimumf %19, %18 : vector<1x1024xf32>
    %21 = arith.mulf %7, %15 : vector<1x1024xf32>
    %22 = arith.mulf %21, %12 : vector<1x1024xf32>
    %cst_4 = arith.constant 9.99999996E-13 : f32
    %23 = vector.broadcast %cst_4 : f32 to vector<1x1024xf32>
    %24 = arith.cmpf olt, %7, %23 : vector<1x1024xf32>
    %25 = arith.mulf %2, %15 : vector<1x1024xf32>
    %cst_5 = arith.constant 1.000000e+00 : f32
    %26 = vector.broadcast %cst_5 : f32 to vector<1x1024xf32>
    %27 = arith.select %24, %26, %25 : vector<1x1024xi1>, vector<1x1024xf32>
    %cst_6 = arith.constant 9.99999996E-13 : f32
    %28 = vector.broadcast %cst_6 : f32 to vector<1x1024xf32>
    %29 = arith.cmpf olt, %7, %28 : vector<1x1024xf32>
    %30 = arith.mulf %3, %15 : vector<1x1024xf32>
    %cst_7 = arith.constant 0.000000e+00 : f32
    %31 = vector.broadcast %cst_7 : f32 to vector<1x1024xf32>
    %32 = arith.select %29, %31, %30 : vector<1x1024xi1>, vector<1x1024xf32>
    %33 = arith.mulf %27, %27 : vector<1x1024xf32>
    %34 = arith.mulf %32, %32 : vector<1x1024xf32>
    %35 = arith.subf %33, %34 : vector<1x1024xf32>
    %36 = arith.mulf %32, %27 : vector<1x1024xf32>
    %37 = arith.mulf %27, %32 : vector<1x1024xf32>
    %38 = arith.addf %36, %37 : vector<1x1024xf32>
    %39 = arith.mulf %35, %27 : vector<1x1024xf32>
    %40 = arith.mulf %38, %32 : vector<1x1024xf32>
    %41 = arith.subf %39, %40 : vector<1x1024xf32>
    %42 = arith.mulf %38, %27 : vector<1x1024xf32>
    %43 = arith.mulf %35, %32 : vector<1x1024xf32>
    %44 = arith.addf %42, %43 : vector<1x1024xf32>
    %cst_8 = arith.constant 1.000000e+00 : f32
    %45 = vector.broadcast %cst_8 : f32 to vector<1x1024xf32>
    %cst_9 = arith.constant 0.282094806 : f32
    %46 = vector.broadcast %cst_9 : f32 to vector<1x1024xf32>
    %47 = arith.mulf %46, %45 : vector<1x1024xf32>
    %cst_10 = arith.constant 1.000000e+00 : f32
    %48 = vector.broadcast %cst_10 : f32 to vector<1x1024xf32>
    %49 = arith.mulf %48, %22 : vector<1x1024xf32>
    %cst_11 = arith.constant 0.488602519 : f32
    %50 = vector.broadcast %cst_11 : f32 to vector<1x1024xf32>
    %51 = arith.mulf %50, %49 : vector<1x1024xf32>
    %52 = arith.mulf %51, %32 : vector<1x1024xf32>
    %cst_12 = arith.constant 1.000000e+00 : f32
    %53 = vector.broadcast %cst_12 : f32 to vector<1x1024xf32>
    %cst_13 = arith.constant 1.000000e+00 : f32
    %54 = vector.broadcast %cst_13 : f32 to vector<1x1024xf32>
    %55 = arith.mulf %54, %20 : vector<1x1024xf32>
    %56 = arith.mulf %55, %53 : vector<1x1024xf32>
    %cst_14 = arith.constant 0.488602519 : f32
    %57 = vector.broadcast %cst_14 : f32 to vector<1x1024xf32>
    %58 = arith.mulf %57, %56 : vector<1x1024xf32>
    %cst_15 = arith.constant 1.000000e+00 : f32
    %59 = vector.broadcast %cst_15 : f32 to vector<1x1024xf32>
    %60 = arith.mulf %59, %22 : vector<1x1024xf32>
    %cst_16 = arith.constant 0.488602519 : f32
    %61 = vector.broadcast %cst_16 : f32 to vector<1x1024xf32>
    %62 = arith.mulf %61, %60 : vector<1x1024xf32>
    %63 = arith.mulf %62, %27 : vector<1x1024xf32>
    %64 = arith.mulf %22, %22 : vector<1x1024xf32>
    %cst_17 = arith.constant 3.000000e+00 : f32
    %65 = vector.broadcast %cst_17 : f32 to vector<1x1024xf32>
    %66 = arith.mulf %65, %64 : vector<1x1024xf32>
    %cst_18 = arith.constant 0.1820914 : f32
    %67 = vector.broadcast %cst_18 : f32 to vector<1x1024xf32>
    %68 = arith.mulf %67, %66 : vector<1x1024xf32>
    %69 = arith.mulf %68, %38 : vector<1x1024xf32>
    %cst_19 = arith.constant 1.000000e+00 : f32
    %70 = vector.broadcast %cst_19 : f32 to vector<1x1024xf32>
    %71 = arith.mulf %70, %22 : vector<1x1024xf32>
    %cst_20 = arith.constant 3.000000e+00 : f32
    %72 = vector.broadcast %cst_20 : f32 to vector<1x1024xf32>
    %73 = arith.mulf %72, %20 : vector<1x1024xf32>
    %74 = arith.mulf %73, %71 : vector<1x1024xf32>
    %cst_21 = arith.constant 0.3641828 : f32
    %75 = vector.broadcast %cst_21 : f32 to vector<1x1024xf32>
    %76 = arith.mulf %75, %74 : vector<1x1024xf32>
    %77 = arith.mulf %76, %32 : vector<1x1024xf32>
    %cst_22 = arith.constant 1.000000e+00 : f32
    %78 = vector.broadcast %cst_22 : f32 to vector<1x1024xf32>
    %cst_23 = arith.constant 1.000000e+00 : f32
    %79 = vector.broadcast %cst_23 : f32 to vector<1x1024xf32>
    %80 = arith.mulf %79, %20 : vector<1x1024xf32>
    %81 = arith.mulf %80, %78 : vector<1x1024xf32>
    %cst_24 = arith.constant 3.000000e+00 : f32
    %82 = vector.broadcast %cst_24 : f32 to vector<1x1024xf32>
    %83 = arith.mulf %82, %20 : vector<1x1024xf32>
    %84 = arith.mulf %83, %81 : vector<1x1024xf32>
    %cst_25 = arith.constant 1.000000e+00 : f32
    %85 = vector.broadcast %cst_25 : f32 to vector<1x1024xf32>
    %86 = arith.mulf %85, %78 : vector<1x1024xf32>
    %87 = arith.subf %84, %86 : vector<1x1024xf32>
    %cst_26 = arith.constant 2.000000e+00 : f32
    %88 = vector.broadcast %cst_26 : f32 to vector<1x1024xf32>
    %89 = arith.divf %87, %88 : vector<1x1024xf32>
    %cst_27 = arith.constant 0.63078314 : f32
    %90 = vector.broadcast %cst_27 : f32 to vector<1x1024xf32>
    %91 = arith.mulf %90, %89 : vector<1x1024xf32>
    %cst_28 = arith.constant 1.000000e+00 : f32
    %92 = vector.broadcast %cst_28 : f32 to vector<1x1024xf32>
    %93 = arith.mulf %92, %22 : vector<1x1024xf32>
    %cst_29 = arith.constant 3.000000e+00 : f32
    %94 = vector.broadcast %cst_29 : f32 to vector<1x1024xf32>
    %95 = arith.mulf %94, %20 : vector<1x1024xf32>
    %96 = arith.mulf %95, %93 : vector<1x1024xf32>
    %cst_30 = arith.constant 0.3641828 : f32
    %97 = vector.broadcast %cst_30 : f32 to vector<1x1024xf32>
    %98 = arith.mulf %97, %96 : vector<1x1024xf32>
    %99 = arith.mulf %98, %27 : vector<1x1024xf32>
    %100 = arith.mulf %22, %22 : vector<1x1024xf32>
    %cst_31 = arith.constant 3.000000e+00 : f32
    %101 = vector.broadcast %cst_31 : f32 to vector<1x1024xf32>
    %102 = arith.mulf %101, %100 : vector<1x1024xf32>
    %cst_32 = arith.constant 0.1820914 : f32
    %103 = vector.broadcast %cst_32 : f32 to vector<1x1024xf32>
    %104 = arith.mulf %103, %102 : vector<1x1024xf32>
    %105 = arith.mulf %104, %35 : vector<1x1024xf32>
    %106 = arith.mulf %22, %22 : vector<1x1024xf32>
    %107 = arith.mulf %22, %106 : vector<1x1024xf32>
    %cst_33 = arith.constant 1.500000e+01 : f32
    %108 = vector.broadcast %cst_33 : f32 to vector<1x1024xf32>
    %109 = arith.mulf %108, %107 : vector<1x1024xf32>
    %cst_34 = arith.constant 0.0393362381 : f32
    %110 = vector.broadcast %cst_34 : f32 to vector<1x1024xf32>
    %111 = arith.mulf %110, %109 : vector<1x1024xf32>
    %112 = arith.mulf %111, %44 : vector<1x1024xf32>
    %113 = arith.mulf %22, %22 : vector<1x1024xf32>
    %cst_35 = arith.constant 3.000000e+00 : f32
    %114 = vector.broadcast %cst_35 : f32 to vector<1x1024xf32>
    %115 = arith.mulf %114, %113 : vector<1x1024xf32>
    %cst_36 = arith.constant 5.000000e+00 : f32
    %116 = vector.broadcast %cst_36 : f32 to vector<1x1024xf32>
    %117 = arith.mulf %116, %20 : vector<1x1024xf32>
    %118 = arith.mulf %117, %115 : vector<1x1024xf32>
    %cst_37 = arith.constant 0.0963537171 : f32
    %119 = vector.broadcast %cst_37 : f32 to vector<1x1024xf32>
    %120 = arith.mulf %119, %118 : vector<1x1024xf32>
    %121 = arith.mulf %120, %38 : vector<1x1024xf32>
    %cst_38 = arith.constant 1.000000e+00 : f32
    %122 = vector.broadcast %cst_38 : f32 to vector<1x1024xf32>
    %123 = arith.mulf %122, %22 : vector<1x1024xf32>
    %cst_39 = arith.constant 3.000000e+00 : f32
    %124 = vector.broadcast %cst_39 : f32 to vector<1x1024xf32>
    %125 = arith.mulf %124, %20 : vector<1x1024xf32>
    %126 = arith.mulf %125, %123 : vector<1x1024xf32>
    %cst_40 = arith.constant 5.000000e+00 : f32
    %127 = vector.broadcast %cst_40 : f32 to vector<1x1024xf32>
    %128 = arith.mulf %127, %20 : vector<1x1024xf32>
    %129 = arith.mulf %128, %126 : vector<1x1024xf32>
    %cst_41 = arith.constant 3.000000e+00 : f32
    %130 = vector.broadcast %cst_41 : f32 to vector<1x1024xf32>
    %131 = arith.mulf %130, %123 : vector<1x1024xf32>
    %132 = arith.subf %129, %131 : vector<1x1024xf32>
    %cst_42 = arith.constant 2.000000e+00 : f32
    %133 = vector.broadcast %cst_42 : f32 to vector<1x1024xf32>
    %134 = arith.divf %132, %133 : vector<1x1024xf32>
    %cst_43 = arith.constant 0.304697186 : f32
    %135 = vector.broadcast %cst_43 : f32 to vector<1x1024xf32>
    %136 = arith.mulf %135, %134 : vector<1x1024xf32>
    %137 = arith.mulf %136, %32 : vector<1x1024xf32>
    %cst_44 = arith.constant 1.000000e+00 : f32
    %138 = vector.broadcast %cst_44 : f32 to vector<1x1024xf32>
    %cst_45 = arith.constant 1.000000e+00 : f32
    %139 = vector.broadcast %cst_45 : f32 to vector<1x1024xf32>
    %140 = arith.mulf %139, %20 : vector<1x1024xf32>
    %141 = arith.mulf %140, %138 : vector<1x1024xf32>
    %cst_46 = arith.constant 3.000000e+00 : f32
    %142 = vector.broadcast %cst_46 : f32 to vector<1x1024xf32>
    %143 = arith.mulf %142, %20 : vector<1x1024xf32>
    %144 = arith.mulf %143, %141 : vector<1x1024xf32>
    %cst_47 = arith.constant 1.000000e+00 : f32
    %145 = vector.broadcast %cst_47 : f32 to vector<1x1024xf32>
    %146 = arith.mulf %145, %138 : vector<1x1024xf32>
    %147 = arith.subf %144, %146 : vector<1x1024xf32>
    %cst_48 = arith.constant 2.000000e+00 : f32
    %148 = vector.broadcast %cst_48 : f32 to vector<1x1024xf32>
    %149 = arith.divf %147, %148 : vector<1x1024xf32>
    %cst_49 = arith.constant 5.000000e+00 : f32
    %150 = vector.broadcast %cst_49 : f32 to vector<1x1024xf32>
    %151 = arith.mulf %150, %20 : vector<1x1024xf32>
    %152 = arith.mulf %151, %149 : vector<1x1024xf32>
    %cst_50 = arith.constant 2.000000e+00 : f32
    %153 = vector.broadcast %cst_50 : f32 to vector<1x1024xf32>
    %154 = arith.mulf %153, %141 : vector<1x1024xf32>
    %155 = arith.subf %152, %154 : vector<1x1024xf32>
    %cst_51 = arith.constant 3.000000e+00 : f32
    %156 = vector.broadcast %cst_51 : f32 to vector<1x1024xf32>
    %157 = arith.divf %155, %156 : vector<1x1024xf32>
    %cst_52 = arith.constant 0.746352672 : f32
    %158 = vector.broadcast %cst_52 : f32 to vector<1x1024xf32>
    %159 = arith.mulf %158, %157 : vector<1x1024xf32>
    %cst_53 = arith.constant 1.000000e+00 : f32
    %160 = vector.broadcast %cst_53 : f32 to vector<1x1024xf32>
    %161 = arith.mulf %160, %22 : vector<1x1024xf32>
    %cst_54 = arith.constant 3.000000e+00 : f32
    %162 = vector.broadcast %cst_54 : f32 to vector<1x1024xf32>
    %163 = arith.mulf %162, %20 : vector<1x1024xf32>
    %164 = arith.mulf %163, %161 : vector<1x1024xf32>
    %cst_55 = arith.constant 5.000000e+00 : f32
    %165 = vector.broadcast %cst_55 : f32 to vector<1x1024xf32>
    %166 = arith.mulf %165, %20 : vector<1x1024xf32>
    %167 = arith.mulf %166, %164 : vector<1x1024xf32>
    %cst_56 = arith.constant 3.000000e+00 : f32
    %168 = vector.broadcast %cst_56 : f32 to vector<1x1024xf32>
    %169 = arith.mulf %168, %161 : vector<1x1024xf32>
    %170 = arith.subf %167, %169 : vector<1x1024xf32>
    %cst_57 = arith.constant 2.000000e+00 : f32
    %171 = vector.broadcast %cst_57 : f32 to vector<1x1024xf32>
    %172 = arith.divf %170, %171 : vector<1x1024xf32>
    %cst_58 = arith.constant 0.304697186 : f32
    %173 = vector.broadcast %cst_58 : f32 to vector<1x1024xf32>
    %174 = arith.mulf %173, %172 : vector<1x1024xf32>
    %175 = arith.mulf %174, %27 : vector<1x1024xf32>
    %176 = arith.mulf %22, %22 : vector<1x1024xf32>
    %cst_59 = arith.constant 3.000000e+00 : f32
    %177 = vector.broadcast %cst_59 : f32 to vector<1x1024xf32>
    %178 = arith.mulf %177, %176 : vector<1x1024xf32>
    %cst_60 = arith.constant 5.000000e+00 : f32
    %179 = vector.broadcast %cst_60 : f32 to vector<1x1024xf32>
    %180 = arith.mulf %179, %20 : vector<1x1024xf32>
    %181 = arith.mulf %180, %178 : vector<1x1024xf32>
    %cst_61 = arith.constant 0.0963537171 : f32
    %182 = vector.broadcast %cst_61 : f32 to vector<1x1024xf32>
    %183 = arith.mulf %182, %181 : vector<1x1024xf32>
    %184 = arith.mulf %183, %35 : vector<1x1024xf32>
    %185 = arith.mulf %22, %22 : vector<1x1024xf32>
    %186 = arith.mulf %22, %185 : vector<1x1024xf32>
    %cst_62 = arith.constant 1.500000e+01 : f32
    %187 = vector.broadcast %cst_62 : f32 to vector<1x1024xf32>
    %188 = arith.mulf %187, %186 : vector<1x1024xf32>
    %cst_63 = arith.constant 0.0393362381 : f32
    %189 = vector.broadcast %cst_63 : f32 to vector<1x1024xf32>
    %190 = arith.mulf %189, %188 : vector<1x1024xf32>
    %191 = arith.mulf %190, %41 : vector<1x1024xf32>
    %192 = tpu.concatenate %47, %52, %58, %63, %69, %77, %91, %99, %105, %112, %121, %137, %159, %175, %184, %191 in 0 : vector<1x1024xf32>, vector<1x1024xf32>, vector<1x1024xf32>, vector<1x1024xf32>, vector<1x1024xf32>, vector<1x1024xf32>, vector<1x1024xf32>, vector<1x1024xf32>, vector<1x1024xf32>, vector<1x1024xf32>, vector<1x1024xf32>, vector<1x1024xf32>, vector<1x1024xf32>, vector<1x1024xf32>, vector<1x1024xf32>, vector<1x1024xf32> -> vector<16x1024xf32>
    %c0_64 = arith.constant 0 : index
    %c0_65 = arith.constant 0 : index
    %193 = vector.load %arg2[%c0_64, %c0_65] : memref<152x38xf32, #tpu.memory_space<vmem>>, vector<16x2xf32>
    %c0_66 = arith.constant 0 : index
    %c37 = arith.constant 37 : index
    %194 = vector.load %arg2[%c0_66, %c37] : memref<152x38xf32, #tpu.memory_space<vmem>>, vector<16x1xf32>
    %195 = vector.extract_strided_slice %193 {offsets = [0, 0], sizes = [16, 1], strides = [1, 1]} : vector<16x2xf32> to vector<16x1xf32>
    %196 = vector.extract_strided_slice %1 {offsets = [0, 0], sizes = [1, 1024], strides = [1, 1]} : vector<2x1024xf32> to vector<1x1024xf32>
    %197 = vector.broadcast %195 : vector<16x1xf32> to vector<16x1024xf32>
    %198 = vector.broadcast %196 : vector<1x1024xf32> to vector<16x1024xf32>
    %199 = arith.mulf %197, %198 : vector<16x1024xf32>
    %200 = vector.broadcast %194 : vector<16x1xf32> to vector<16x1024xf32>
    %201 = arith.addf %200, %199 : vector<16x1024xf32>
    %202 = vector.extract_strided_slice %193 {offsets = [0, 1], sizes = [16, 1], strides = [1, 1]} : vector<16x2xf32> to vector<16x1xf32>
    %203 = vector.extract_strided_slice %1 {offsets = [1, 0], sizes = [1, 1024], strides = [1, 1]} : vector<2x1024xf32> to vector<1x1024xf32>
    %204 = vector.broadcast %202 : vector<16x1xf32> to vector<16x1024xf32>
    %205 = vector.broadcast %203 : vector<1x1024xf32> to vector<16x1024xf32>
    %206 = arith.mulf %204, %205 : vector<16x1024xf32>
    %207 = arith.addf %201, %206 : vector<16x1024xf32>
    %cst_67 = arith.constant 1.000000e+01 : f32
    %208 = vector.broadcast %cst_67 : f32 to vector<16x1024xf32>
    %209 = arith.mulf %208, %207 : vector<16x1024xf32>
    %210 = math.sin %209 : vector<16x1024xf32>
    %211 = arith.mulf %192, %210 : vector<16x1024xf32>
    %c16 = arith.constant 16 : index
    %c0_68 = arith.constant 0 : index
    %212 = vector.load %arg2[%c16, %c0_68] : memref<152x38xf32, #tpu.memory_space<vmem>>, vector<32x16xf32>
    %c16_69 = arith.constant 16 : index
    %c37_70 = arith.constant 37 : index
    %213 = vector.load %arg2[%c16_69, %c37_70] : memref<152x38xf32, #tpu.memory_space<vmem>>, vector<32x1xf32>
    %cst_71 = arith.constant dense<0.000000e+00> : vector<32x1024xf32>
    %214 = tpu.matmul %212, %211, %cst_71 {dimension_numbers = #tpu.dot_dimension_numbers<[1], [0], [0], [1], [0, 0, 1, 1], [], []>} : vector<32x16xf32>, vector<16x1024xf32>, vector<32x1024xf32> -> vector<32x1024xf32>
    %215 = vector.broadcast %213 : vector<32x1xf32> to vector<32x1024xf32>
    %216 = arith.addf %214, %215 : vector<32x1024xf32>
    %cst_72 = arith.constant 0.000000e+00 : f32
    %217 = vector.broadcast %cst_72 : f32 to vector<32x1024xf32>
    %218 = arith.maximumf %216, %217 : vector<32x1024xf32>
    %c48 = arith.constant 48 : index
    %c0_73 = arith.constant 0 : index
    %219 = vector.load %arg2[%c48, %c0_73] : memref<152x38xf32, #tpu.memory_space<vmem>>, vector<32x32xf32>
    %c48_74 = arith.constant 48 : index
    %c37_75 = arith.constant 37 : index
    %220 = vector.load %arg2[%c48_74, %c37_75] : memref<152x38xf32, #tpu.memory_space<vmem>>, vector<32x1xf32>
    %cst_76 = arith.constant dense<0.000000e+00> : vector<32x1024xf32>
    %221 = tpu.matmul %219, %218, %cst_76 {dimension_numbers = #tpu.dot_dimension_numbers<[1], [0], [0], [1], [0, 0, 1, 1], [], []>} : vector<32x32xf32>, vector<32x1024xf32>, vector<32x1024xf32> -> vector<32x1024xf32>
    %222 = vector.broadcast %220 : vector<32x1xf32> to vector<32x1024xf32>
    %223 = arith.addf %221, %222 : vector<32x1024xf32>
    %cst_77 = arith.constant 0.000000e+00 : f32
    %224 = vector.broadcast %cst_77 : f32 to vector<32x1024xf32>
    %225 = arith.maximumf %223, %224 : vector<32x1024xf32>
    %c80 = arith.constant 80 : index
    %c32 = arith.constant 32 : index
    %226 = vector.load %arg2[%c80, %c32] : memref<152x38xf32, #tpu.memory_space<vmem>>, vector<32x5xf32>
    %c80_78 = arith.constant 80 : index
    %c0_79 = arith.constant 0 : index
    %227 = vector.load %arg2[%c80_78, %c0_79] : memref<152x38xf32, #tpu.memory_space<vmem>>, vector<32x32xf32>
    %c80_80 = arith.constant 80 : index
    %c37_81 = arith.constant 37 : index
    %228 = vector.load %arg2[%c80_80, %c37_81] : memref<152x38xf32, #tpu.memory_space<vmem>>, vector<32x1xf32>
    %cst_82 = arith.constant dense<0.000000e+00> : vector<32x1024xf32>
    %229 = tpu.matmul %227, %225, %cst_82 {dimension_numbers = #tpu.dot_dimension_numbers<[1], [0], [0], [1], [0, 0, 1, 1], [], []>} : vector<32x32xf32>, vector<32x1024xf32>, vector<32x1024xf32> -> vector<32x1024xf32>
    %230 = vector.broadcast %228 : vector<32x1xf32> to vector<32x1024xf32>
    %231 = arith.addf %229, %230 : vector<32x1024xf32>
    %cst_83 = arith.constant dense<0.000000e+00> : vector<32x1024xf32>
    %232 = tpu.matmul %226, %0, %cst_83 {dimension_numbers = #tpu.dot_dimension_numbers<[1], [0], [0], [1], [0, 0, 1, 1], [], []>} : vector<32x5xf32>, vector<5x1024xf32>, vector<32x1024xf32> -> vector<32x1024xf32>
    %233 = arith.addf %231, %232 : vector<32x1024xf32>
    %cst_84 = arith.constant 0.000000e+00 : f32
    %234 = vector.broadcast %cst_84 : f32 to vector<32x1024xf32>
    %235 = arith.maximumf %233, %234 : vector<32x1024xf32>
    %c112 = arith.constant 112 : index
    %c0_85 = arith.constant 0 : index
    %236 = vector.load %arg2[%c112, %c0_85] : memref<152x38xf32, #tpu.memory_space<vmem>>, vector<32x32xf32>
    %c112_86 = arith.constant 112 : index
    %c37_87 = arith.constant 37 : index
    %237 = vector.load %arg2[%c112_86, %c37_87] : memref<152x38xf32, #tpu.memory_space<vmem>>, vector<32x1xf32>
    %cst_88 = arith.constant dense<0.000000e+00> : vector<32x1024xf32>
    %238 = tpu.matmul %236, %235, %cst_88 {dimension_numbers = #tpu.dot_dimension_numbers<[1], [0], [0], [1], [0, 0, 1, 1], [], []>} : vector<32x32xf32>, vector<32x1024xf32>, vector<32x1024xf32> -> vector<32x1024xf32>
    %239 = vector.broadcast %237 : vector<32x1xf32> to vector<32x1024xf32>
    %240 = arith.addf %238, %239 : vector<32x1024xf32>
    %cst_89 = arith.constant 0.000000e+00 : f32
    %241 = vector.broadcast %cst_89 : f32 to vector<32x1024xf32>
    %242 = arith.maximumf %240, %241 : vector<32x1024xf32>
    %c144 = arith.constant 144 : index
    %c0_90 = arith.constant 0 : index
    %243 = vector.load %arg2[%c144, %c0_90] : memref<152x38xf32, #tpu.memory_space<vmem>>, vector<3x32xf32>
    %c144_91 = arith.constant 144 : index
    %c37_92 = arith.constant 37 : index
    %244 = vector.load %arg2[%c144_91, %c37_92] : memref<152x38xf32, #tpu.memory_space<vmem>>, vector<3x1xf32>
    %cst_93 = arith.constant dense<0.000000e+00> : vector<3x1024xf32>
    %245 = tpu.matmul %243, %242, %cst_93 {dimension_numbers = #tpu.dot_dimension_numbers<[1], [0], [0], [1], [0, 0, 1, 1], [], []>} : vector<3x32xf32>, vector<32x1024xf32>, vector<3x1024xf32> -> vector<3x1024xf32>
    %246 = vector.broadcast %244 : vector<3x1xf32> to vector<3x1024xf32>
    %247 = arith.addf %245, %246 : vector<3x1024xf32>
    %c0_94 = arith.constant 0 : index
    %c0_95 = arith.constant 0 : index
    %248 = vector.load %arg3[%c0_94, %c0_95] : memref<3x1024xf32, #tpu.memory_space<vmem>>, vector<3x1024xf32>
    tpu.vector_store %arg3[%c0_94, %c0_95], %247 {strides = array<i32>} : memref<3x1024xf32, #tpu.memory_space<vmem>>, vector<3x1024xf32>,
    return
  }
  func.func @transform_0(%arg0: i32) -> (i32, i32) {
    %c0_i32 = arith.constant 0 : i32
    %c0_i32_0 = arith.constant 0 : i32
    return %c0_i32, %arg0 : i32, i32
  }
  func.func @transform_1(%arg0: i32) -> (i32, i32) {
    %c0_i32 = arith.constant 0 : i32
    %c0_i32_0 = arith.constant 0 : i32
    %c0_i32_1 = arith.constant 0 : i32
    return %c0_i32, %c0_i32_0 : i32, i32
  }
  func.func @transform_2(%arg0: i32) -> (i32, i32) {
    %c0_i32 = arith.constant 0 : i32
    %c0_i32_0 = arith.constant 0 : i32
    return %c0_i32, %arg0 : i32, i32
  }
}

</mosaic_0001>

<llo_original>
// kernel: inr_forward.1
$region0: #{inr_forward.1}
  #allocation0 [shape = 'u32[]', space=smem, size = 0x4, offset = 0x4, fixed_abs, tag = 'smem constant byte address 0x4 - core index']
  #allocation1 [shape = 'u32[72,128]{1,0:T(1,128)}', space=vmem, size = 0x9000, scoped, tag = 'internal scratch']
  %s0 = inlined_call_operand.vmem [shape: f32[5,2048], index: 0, kind: input, shape index: {}]
  %s1 = inlined_call_operand.vmem [shape: f32[152,38], index: 1, kind: input, shape index: {}]
  %s2 = inlined_call_operand.vmem [shape: f32[3,2048], index: 2, kind: output, shape index: {}]
  %s3 = sld [smem:[#allocation0]]
  $region41: #{inr_forward.1} parent=0
    _
  %s5 = ssub.s32 1, %s3
  %s6 = scalar_select 0, %s5, %s3
  loop: start=0, step=1, limit=4
  $region2: #{inr_forward.1} parent=0 // loop_pre_header
    _
  $region3: #{inr_forward.1} parent=0 // loop_header
    %s8 = sphi 0, %s12
    %p9 = scmp.ge.s32.totalorder %s8, 4
    %s18 = sphi 0, %s20
    %s21 = sphi 0, %s18
    %s22 = sphi 0, %s21
    %s38 = sphi 0, %s22
    %s42 = sphi 0, %s42
    %s44 = sphi 0, %s42
    %s45 = sphi 0, %s44
    %s59 = sphi 0, %s45
    %s65 = sphi 0, %s67
    %s68 = sphi 0, %s65
    %s69 = sphi 0, %s68
    %s85 = sphi 0, %s69
  $region4: #{inr_forward.1} parent=0 // loop_header_branch
    %11 = sbr.rel (%p9) target = $region8
  $region5: #{inr_forward.1} parent=0 // loop_body
    %s13 = ssub.s32 %s8, 1
    %s14 = ssub.s32 %s8, 2
    %s15 = sadd.s32 %s8, 1
    %s16 = ssub.s32 %s8, %s15
    %p17 = scmp.eq.s32.totalorder %s16, 0
    %s19 = sadd.s32 %s18, 1
    %s20 = scalar_select %p17, %s18, %s19
    %p23 = pneg %p17
    %p24 = scmp.eq.s32.totalorder %s8, 1
    %p25 = por %p23, %p24
    %p26 = scmp.ne.s32.totalorder %s18, %s21
    %p27 = scmp.eq.s32.totalorder %s8, 0
    %p28 = por %p26, %p27
    %p29 = scmp.ne.s32.totalorder %s18, %s21
    %p30 = scmp.eq.s32.totalorder %s13, 1
    %p31 = por %p29, %p30
    %p32 = scmp.ne.s32.totalorder %s21, %s22
    %p33 = scmp.eq.s32.totalorder %s13, 0
    %p34 = por %p32, %p33
    %p35 = scmp.ne.s32.totalorder %s21, %s22
    %p36 = scmp.eq.s32.totalorder %s14, 1
    %p37 = por %p35, %p36
    %p39 = scmp.ne.s32.totalorder %s22, %s38
    %p40 = scmp.eq.s32.totalorder %s14, 0
    %p41 = por %p39, %p40
    %s43 = sadd.s32 %s42, 1
    %p46 = scmp.eq.s32.totalorder %s8, 1
    %p47 = scmp.ne.s32.totalorder %s42, %s44
    %p48 = scmp.eq.s32.totalorder %s8, 0
    %p49 = por %p47, %p48
    %p50 = scmp.ne.s32.totalorder %s42, %s44
    %p51 = scmp.eq.s32.totalorder %s13, 1
    %p52 = por %p50, %p51
    %p53 = scmp.ne.s32.totalorder %s44, %s45
    %p54 = scmp.eq.s32.totalorder %s13, 0
    %p55 = por %p53, %p54
    %p56 = scmp.ne.s32.totalorder %s44, %s45
    %p57 = scmp.eq.s32.totalorder %s14, 1
    %p58 = por %p56, %p57
    %p60 = scmp.ne.s32.totalorder %s45, %s59
    %p61 = scmp.eq.s32.totalorder %s14, 0
    %p62 = por %p60, %p61
    %s63 = ssub.s32 %s8, %s15
    %p64 = scmp.eq.s32.totalorder %s63, 0
    %s66 = sadd.s32 %s65, 1
    %s67 = scalar_select %p64, %s65, %s66
    %p70 = pneg %p64
    %p71 = scmp.eq.s32.totalorder %s8, 1
    %p72 = por %p70, %p71
    %p73 = scmp.ne.s32.totalorder %s65, %s68
    %p74 = scmp.eq.s32.totalorder %s8, 0
    %p75 = por %p73, %p74
    %p76 = scmp.ne.s32.totalorder %s65, %s68
    %p77 = scmp.eq.s32.totalorder %s13, 1
    %p78 = por %p76, %p77
    %p79 = scmp.ne.s32.totalorder %s68, %s69
    %p80 = scmp.eq.s32.totalorder %s13, 0
    %p81 = por %p79, %p80
    %p82 = scmp.ne.s32.totalorder %s68, %s69
    %p83 = scmp.eq.s32.totalorder %s14, 1
    %p84 = por %p82, %p83
    %p86 = scmp.ne.s32.totalorder %s69, %s85
    %p87 = scmp.eq.s32.totalorder %s14, 0
    %p88 = por %p86, %p87
    %p89 = scmp.le.s32.totalorder 1, %s8
    %p90 = scmp.lt.s32.totalorder %s8, 3
    %p91 = pnand %p89, %p90
    %p92 = pneg %p91
    // Predicated region
    $region9: #{inr_forward.1} parent=5 // pred_check
      _
    $region10: #{inr_forward.1} parent=5 // pred_check_branch
      %94 = sbr.rel (%p91) target = $region12
    $region11: #{inr_forward.1} parent=5 // pred_region
      %s95 = ssub.s32 %s8, 1
      // Predicated region
      $region13: #{inr_forward.1} parent=11 // pred_check
        %p96 = pneg %p55
      $region14: #{inr_forward.1} parent=11 // pred_check_branch
        %98 = sbr.rel (%p96) target = $region16
      $region15: #{inr_forward.1} parent=11 // pred_region
        _
      $region16: #{inr_forward.1} parent=11 // pred_fallthru
        _
    $region12: #{inr_forward.1} parent=5 // pred_fallthru
      _
    %p99 = scmp.lt.s32.totalorder %s8, 2
    // Predicated region
    $region17: #{inr_forward.1} parent=5 // pred_check
      %p100 = pneg %p99
    $region18: #{inr_forward.1} parent=5 // pred_check_branch
      %102 = sbr.rel (%p100) target = $region20
    $region19: #{inr_forward.1} parent=5 // pred_region
      // Predicated region
      $region21: #{inr_forward.1} parent=19 // pred_check
        %p103 = pneg %p28
      $region22: #{inr_forward.1} parent=19 // pred_check_branch
        %105 = sbr.rel (%p103) target = $region24
      $region23: #{inr_forward.1} parent=19 // pred_region
        %s106 = smul.u32 8, %s8
        %p107 = scmp.lt.s32.totalorder %s106, 15
        %s108 = scalar_select %p107, %s106, 15
        %s109 = smul.addr %s108, 8
        %s110 = scalar_lea.vmem %s0, %s109
        %s111 = smul.u32 8, %s8
      $region24: #{inr_forward.1} parent=19 // pred_fallthru
        _
    $region20: #{inr_forward.1} parent=5 // pred_fallthru
      _
    %p112 = scmp.le.s32.totalorder 1, %s8
    %p113 = scmp.lt.s32.totalorder %s8, 3
    %p114 = pnand %p112, %p113
    %p115 = pneg %p114
    // Predicated region
    $region25: #{inr_forward.1} parent=5 // pred_check
      _
    $region26: #{inr_forward.1} parent=5 // pred_check_branch
      %117 = sbr.rel (%p114) target = $region28
    $region27: #{inr_forward.1} parent=5 // pred_region
      %s118 = ssub.s32 %s8, 1
      %s119 = smul.u32 8, %s13
      %p120 = scmp.lt.s32.totalorder %s119, 15
      %s121 = scalar_select %p120, %s119, 15
      %s122 = smul.addr %s121, 8
      %s123 = scalar_lea.vmem %s0, %s122
      %p124 = pneg %p34
      %p125 = pneg %p31
      %p126 = pneg %p55
      %p127 = pneg %p52
      %p128 = pneg %p81
      %p129 = pneg %p78
      %s130 = smul.u32 8, %s13
      %p131 = scmp.lt.s32.totalorder %s130, 15
      %s132 = scalar_select %p131, %s130, 15
      %s133 = smul.addr %s132, 4
      %s134 = scalar_lea.vmem %s2, %s133
      %s135 = smul.u32 8, %s13
      %p136 = scmp.lt.s32.totalorder %s135, 15
      %s137 = scalar_select %p136, %s135, 15
      %s138 = smul.addr %s137, 8
      %s139 = scalar_lea.vmem %s0, %s138
      %s140 = smul.u32 8, %s13
      %s141 = smul.u32 8, %s13
      %p142 = scmp.lt.s32.totalorder %s141, 15
      %s143 = scalar_select %p142, %s141, 15
      %s144 = smul.addr %s143, 4
      %s145 = scalar_lea.vmem %s2, %s144
      %s146 = smul.u32 8, %s13
      %v147 = vld [vmem:[%s139] sm:$0x1f]
      %v148 = vld [vmem:[%s139 + $0x8] sm:$0x1f]
      %v149 = vld [vmem:[%s139 + $0x10] sm:$0x1f]
      %v150 = vld [vmem:[%s139 + $0x18] sm:$0x1f]
      %v151 = vld [vmem:[%s139 + $0x20] sm:$0x1f]
      %v152 = vld [vmem:[%s139 + $0x28] sm:$0x1f]
      %v153 = vld [vmem:[%s139 + $0x30] sm:$0x1f]
      %v154 = vld [vmem:[%s139 + $0x38] sm:$0x1f]
      %v155 = vmul.f32 %v147, %v147
      %v156 = vmul.f32 %v148, %v148
      %v157 = vmul.f32 %v149, %v149
      %v158 = vmul.f32 %v150, %v150
      %v159 = vmul.f32 %v151, %v151
      %v160 = vmul.f32 %v152, %v152
      %v161 = vmul.f32 %v153, %v153
      %v162 = vmul.f32 %v154, %v154
      %v171 = vrot.slane %v155, 1
      %v172 = vrot.slane %v156, 1
      %v173 = vrot.slane %v157, 1
      %v174 = vrot.slane %v158, 1
      %v175 = vrot.slane %v159, 1
      %v176 = vrot.slane %v160, 1
      %v177 = vrot.slane %v161, 1
      %v178 = vrot.slane %v162, 1
      %v187 = vadd.f32 %v155, %v171
      %v188 = vadd.f32 %v156, %v172
      %v189 = vadd.f32 %v157, %v173
      %v190 = vadd.f32 %v158, %v174
      %v191 = vadd.f32 %v159, %v175
      %v192 = vadd.f32 %v160, %v176
      %v193 = vadd.f32 %v161, %v177
      %v194 = vadd.f32 %v162, %v178
      %v195 = vrot.slane %v155, 2
      %v196 = vrot.slane %v156, 2
      %v197 = vrot.slane %v157, 2
      %v198 = vrot.slane %v158, 2
      %v199 = vrot.slane %v159, 2
      %v200 = vrot.slane %v160, 2
      %v201 = vrot.slane %v161, 2
      %v202 = vrot.slane %v162, 2
      %v211 = vadd.f32 %v187, %v195
      %v212 = vadd.f32 %v188, %v196
      %v213 = vadd.f32 %v189, %v197
      %v214 = vadd.f32 %v190, %v198
      %v215 = vadd.f32 %v191, %v199
      %v216 = vadd.f32 %v192, %v200
      %v217 = vadd.f32 %v193, %v201
      %v218 = vadd.f32 %v194, %v202
      %v219 = vadd.f32 %v211, 1e-12
      %v220 = vadd.f32 %v212, 1e-12
      %v221 = vadd.f32 %v213, 1e-12
      %v222 = vadd.f32 %v214, 1e-12
      %v223 = vadd.f32 %v215, 1e-12
      %v224 = vadd.f32 %v216, 1e-12
      %v225 = vadd.f32 %v217, 1e-12
      %v226 = vadd.f32 %v218, 1e-12
      %v227 = vrsqrt.pop %v219
      %v228 = vmul.f32 %v227, %v219
      %v229 = vmul.f32 %v228, %v227
      %v230 = vmul.f32 0.5, %v229
      %v231 = vsub.f32 1.5, %v230
      %v232 = vmul.f32 %v227, %v231
      %vm233 = vweird.f32 %v219
      %vm234 = vweird.f32 %v227
      %vm235 = vmor %vm233, %vm234
      %v236 = vsel %vm235, %v227, %v232
      %v237 = vrsqrt.pop %v220
      %v238 = vmul.f32 %v237, %v220
      %v239 = vmul.f32 %v238, %v237
      %v240 = vmul.f32 0.5, %v239
      %v241 = vsub.f32 1.5, %v240
      %v242 = vmul.f32 %v237, %v241
      %vm243 = vweird.f32 %v220
      %vm244 = vweird.f32 %v237
      %vm245 = vmor %vm243, %vm244
      %v246 = vsel %vm245, %v237, %v242
      %v247 = vrsqrt.pop %v221
      %v248 = vmul.f32 %v247, %v221
      %v249 = vmul.f32 %v248, %v247
      %v250 = vmul.f32 0.5, %v249
      %v251 = vsub.f32 1.5, %v250
      %v252 = vmul.f32 %v247, %v251
      %vm253 = vweird.f32 %v221
      %vm254 = vweird.f32 %v247
      %vm255 = vmor %vm253, %vm254
      %v256 = vsel %vm255, %v247, %v252
      %v257 = vrsqrt.pop %v222
      %v258 = vmul.f32 %v257, %v222
      %v259 = vmul.f32 %v258, %v257
      %v260 = vmul.f32 0.5, %v259
      %v261 = vsub.f32 1.5, %v260
      %v262 = vmul.f32 %v257, %v261
      %vm263 = vweird.f32 %v222
      %vm264 = vweird.f32 %v257
      %vm265 = vmor %vm263, %vm264
      %v266 = vsel %vm265, %v257, %v262
      %v267 = vrsqrt.pop %v223
      %v268 = vmul.f32 %v267, %v223
      %v269 = vmul.f32 %v268, %v267
      %v270 = vmul.f32 0.5, %v269
      %v271 = vsub.f32 1.5, %v270
      %v272 = vmul.f32 %v267, %v271
      %vm273 = vweird.f32 %v223
      %vm274 = vweird.f32 %v267
      %vm275 = vmor %vm273, %vm274
      %v276 = vsel %vm275, %v267, %v272
      %v277 = vrsqrt.pop %v224
      %v278 = vmul.f32 %v277, %v224
      %v279 = vmul.f32 %v278, %v277
      %v280 = vmul.f32 0.5, %v279
      %v281 = vsub.f32 1.5, %v280
      %v282 = vmul.f32 %v277, %v281
      %vm283 = vweird.f32 %v224
      %vm284 = vweird.f32 %v277
      %vm285 = vmor %vm283, %vm284
      %v286 = vsel %vm285, %v277, %v282
      %v287 = vrsqrt.pop %v225
      %v288 = vmul.f32 %v287, %v225
      %v289 = vmul.f32 %v288, %v287
      %v290 = vmul.f32 0.5, %v289
      %v291 = vsub.f32 1.5, %v290
      %v292 = vmul.f32 %v287, %v291
      %vm293 = vweird.f32 %v225
      %vm294 = vweird.f32 %v287
      %vm295 = vmor %vm293, %vm294
      %v296 = vsel %vm295, %v287, %v292
      %v297 = vrsqrt.pop %v226
      %v298 = vmul.f32 %v297, %v226
      %v299 = vmul.f32 %v298, %v297
      %v300 = vmul.f32 0.5, %v299
      %v301 = vsub.f32 1.5, %v300
      %v302 = vmul.f32 %v297, %v301
      %vm303 = vweird.f32 %v226
      %vm304 = vweird.f32 %v297
      %vm305 = vmor %vm303, %vm304
      %v306 = vsel %vm305, %v297, %v302
      %v307 = vadd.f32 %v187, 1e-12
      %v308 = vadd.f32 %v188, 1e-12
      %v309 = vadd.f32 %v189, 1e-12
      %v310 = vadd.f32 %v190, 1e-12
      %v311 = vadd.f32 %v191, 1e-12
      %v312 = vadd.f32 %v192, 1e-12
      %v313 = vadd.f32 %v193, 1e-12
      %v314 = vadd.f32 %v194, 1e-12
      %v315 = vrsqrt.pop %v307
      %v316 = vmul.f32 %v315, %v307
      %v317 = vmul.f32 %v316, %v315
      %v318 = vmul.f32 0.5, %v317
      %v319 = vsub.f32 1.5, %v318
      %v320 = vmul.f32 %v315, %v319
      %vm321 = vweird.f32 %v307
      %vm322 = vweird.f32 %v315
      %vm323 = vmor %vm321, %vm322
      %v324 = vsel %vm323, %v315, %v320
      %v325 = vrsqrt.pop %v308
      %v326 = vmul.f32 %v325, %v308
      %v327 = vmul.f32 %v326, %v325
      %v328 = vmul.f32 0.5, %v327
      %v329 = vsub.f32 1.5, %v328
      %v330 = vmul.f32 %v325, %v329
      %vm331 = vweird.f32 %v308
      %vm332 = vweird.f32 %v325
      %vm333 = vmor %vm331, %vm332
      %v334 = vsel %vm333, %v325, %v330
      %v335 = vrsqrt.pop %v309
      %v336 = vmul.f32 %v335, %v309
      %v337 = vmul.f32 %v336, %v335
      %v338 = vmul.f32 0.5, %v337
      %v339 = vsub.f32 1.5, %v338
      %v340 = vmul.f32 %v335, %v339
      %vm341 = vweird.f32 %v309
      %vm342 = vweird.f32 %v335
      %vm343 = vmor %vm341, %vm342
      %v344 = vsel %vm343, %v335, %v340
      %v345 = vrsqrt.pop %v310
      %v346 = vmul.f32 %v345, %v310
      %v347 = vmul.f32 %v346, %v345
      %v348 = vmul.f32 0.5, %v347
      %v349 = vsub.f32 1.5, %v348
      %v350 = vmul.f32 %v345, %v349
      %vm351 = vweird.f32 %v310
      %vm352 = vweird.f32 %v345
      %vm353 = vmor %vm351, %vm352
      %v354 = vsel %vm353, %v345, %v350
      %v355 = vrsqrt.pop %v311
      %v356 = vmul.f32 %v355, %v311
      %v357 = vmul.f32 %v356, %v355
      %v358 = vmul.f32 0.5, %v357
      %v359 = vsub.f32 1.5, %v358
      %v360 = vmul.f32 %v355, %v359
      %vm361 = vweird.f32 %v311
      %vm362 = vweird.f32 %v355
      %vm363 = vmor %vm361, %vm362
      %v364 = vsel %vm363, %v355, %v360
      %v365 = vrsqrt.pop %v312
      %v366 = vmul.f32 %v365, %v312
      %v367 = vmul.f32 %v366, %v365
      %v368 = vmul.f32 0.5, %v367
      %v369 = vsub.f32 1.5, %v368
      %v370 = vmul.f32 %v365, %v369
      %vm371 = vweird.f32 %v312
      %vm372 = vweird.f32 %v365
      %vm373 = vmor %vm371, %vm372
      %v374 = vsel %vm373, %v365, %v370
      %v375 = vrsqrt.pop %v313
      %v376 = vmul.f32 %v375, %v313
      %v377 = vmul.f32 %v376, %v375
      %v378 = vmul.f32 0.5, %v377
      %v379 = vsub.f32 1.5, %v378
      %v380 = vmul.f32 %v375, %v379
      %vm381 = vweird.f32 %v313
      %vm382 = vweird.f32 %v375
      %vm383 = vmor %vm381, %vm382
      %v384 = vsel %vm383, %v375, %v380
      %v385 = vrsqrt.pop %v314
      %v386 = vmul.f32 %v385, %v314
      %v387 = vmul.f32 %v386, %v385
      %v388 = vmul.f32 0.5, %v387
      %v389 = vsub.f32 1.5, %v388
      %v390 = vmul.f32 %v385, %v389
      %vm391 = vweird.f32 %v314
      %vm392 = vweird.f32 %v385
      %vm393 = vmor %vm391, %vm392
      %v394 = vsel %vm393, %v385, %v390
      %v403 = vrot.slane %v236, 6
      %v404 = vrot.slane %v246, 6
      %v405 = vrot.slane %v256, 6
      %v406 = vrot.slane %v266, 6
      %v407 = vrot.slane %v276, 6
      %v408 = vrot.slane %v286, 6
      %v409 = vrot.slane %v296, 6
      %v410 = vrot.slane %v306, 6
      %v419 = vmul.f32 %v147, %v403
      %v420 = vmul.f32 %v148, %v404
      %v421 = vmul.f32 %v149, %v405
      %v422 = vmul.f32 %v150, %v406
      %v423 = vmul.f32 %v151, %v407
      %v424 = vmul.f32 %v152, %v408
      %v425 = vmul.f32 %v153, %v409
      %v426 = vmul.f32 %v154, %v410
      %v427 = vmax.f32 %v419, -1.0
      %v428 = vmax.f32 %v420, -1.0
      %v429 = vmax.f32 %v421, -1.0
      %v430 = vmax.f32 %v422, -1.0
      %v431 = vmax.f32 %v423, -1.0
      %v432 = vmax.f32 %v424, -1.0
      %v433 = vmax.f32 %v425, -1.0
      %v434 = vmax.f32 %v426, -1.0
      %v435 = vmin.f32 %v427, 1.0
      %v436 = vmin.f32 %v428, 1.0
      %v437 = vmin.f32 %v429, 1.0
      %v438 = vmin.f32 %v430, 1.0
      %v439 = vmin.f32 %v431, 1.0
      %v440 = vmin.f32 %v432, 1.0
      %v441 = vmin.f32 %v433, 1.0
      %v442 = vmin.f32 %v434, 1.0
      %v443 = vmul.f32 %v187, %v324
      %v444 = vmul.f32 %v188, %v334
      %v445 = vmul.f32 %v189, %v344
      %v446 = vmul.f32 %v190, %v354
      %v447 = vmul.f32 %v191, %v364
      %v448 = vmul.f32 %v192, %v374
      %v449 = vmul.f32 %v193, %v384
      %v450 = vmul.f32 %v194, %v394
      %v451 = vmul.f32 %v443, %v236
      %v452 = vmul.f32 %v444, %v246
      %v453 = vmul.f32 %v445, %v256
      %v454 = vmul.f32 %v446, %v266
      %v455 = vmul.f32 %v447, %v276
      %v456 = vmul.f32 %v448, %v286
      %v457 = vmul.f32 %v449, %v296
      %v458 = vmul.f32 %v450, %v306
      %vm459 = vcmp.lt.f32.partialorder %v187, 1e-12
      %vm460 = vcmp.lt.f32.partialorder %v188, 1e-12
      %vm461 = vcmp.lt.f32.partialorder %v189, 1e-12
      %vm462 = vcmp.lt.f32.partialorder %v190, 1e-12
      %vm463 = vcmp.lt.f32.partialorder %v191, 1e-12
      %vm464 = vcmp.lt.f32.partialorder %v192, 1e-12
      %vm465 = vcmp.lt.f32.partialorder %v193, 1e-12
      %vm466 = vcmp.lt.f32.partialorder %v194, 1e-12
      %v467 = vmul.f32 %v147, %v324
      %v468 = vmul.f32 %v148, %v334
      %v469 = vmul.f32 %v149, %v344
      %v470 = vmul.f32 %v150, %v354
      %v471 = vmul.f32 %v151, %v364
      %v472 = vmul.f32 %v152, %v374
      %v473 = vmul.f32 %v153, %v384
      %v474 = vmul.f32 %v154, %v394
      %v475 = vsel %vm459, 1.0, %v467
      %v476 = vsel %vm460, 1.0, %v468
      %v477 = vsel %vm461, 1.0, %v469
      %v478 = vsel %vm462, 1.0, %v470
      %v479 = vsel %vm463, 1.0, %v471
      %v480 = vsel %vm464, 1.0, %v472
      %v481 = vsel %vm465, 1.0, %v473
      %v482 = vsel %vm466, 1.0, %v474
      %v491 = vrot.slane %v324, 7
      %v492 = vrot.slane %v334, 7
      %v493 = vrot.slane %v344, 7
      %v494 = vrot.slane %v354, 7
      %v495 = vrot.slane %v364, 7
      %v496 = vrot.slane %v374, 7
      %v497 = vrot.slane %v384, 7
      %v498 = vrot.slane %v394, 7
      %v507 = vmul.f32 %v147, %v491
      %v508 = vmul.f32 %v148, %v492
      %v509 = vmul.f32 %v149, %v493
      %v510 = vmul.f32 %v150, %v494
      %v511 = vmul.f32 %v151, %v495
      %v512 = vmul.f32 %v152, %v496
      %v513 = vmul.f32 %v153, %v497
      %v514 = vmul.f32 %v154, %v498
      %v523 = vrot.slane %v507, 1
      %v524 = vrot.slane %v508, 1
      %v525 = vrot.slane %v509, 1
      %v526 = vrot.slane %v510, 1
      %v527 = vrot.slane %v511, 1
      %v528 = vrot.slane %v512, 1
      %v529 = vrot.slane %v513, 1
      %v530 = vrot.slane %v514, 1
      %v539 = vsel %vm459, 0.0, %v523
      %v540 = vsel %vm460, 0.0, %v524
      %v541 = vsel %vm461, 0.0, %v525
      %v542 = vsel %vm462, 0.0, %v526
      %v543 = vsel %vm463, 0.0, %v527
      %v544 = vsel %vm464, 0.0, %v528
      %v545 = vsel %vm465, 0.0, %v529
      %v546 = vsel %vm466, 0.0, %v530
      %v547 = vmul.f32 %v475, %v475
      %v548 = vmul.f32 %v476, %v476
      %v549 = vmul.f32 %v477, %v477
      %v550 = vmul.f32 %v478, %v478
      %v551 = vmul.f32 %v479, %v479
      %v552 = vmul.f32 %v480, %v480
      %v553 = vmul.f32 %v481, %v481
      %v554 = vmul.f32 %v482, %v482
      %v555 = vmul.f32 %v539, %v539
      %v556 = vmul.f32 %v540, %v540
      %v557 = vmul.f32 %v541, %v541
      %v558 = vmul.f32 %v542, %v542
      %v559 = vmul.f32 %v543, %v543
      %v560 = vmul.f32 %v544, %v544
      %v561 = vmul.f32 %v545, %v545
      %v562 = vmul.f32 %v546, %v546
      %v563 = vsub.f32 %v547, %v555
      %v564 = vsub.f32 %v548, %v556
      %v565 = vsub.f32 %v549, %v557
      %v566 = vsub.f32 %v550, %v558
      %v567 = vsub.f32 %v551, %v559
      %v568 = vsub.f32 %v552, %v560
      %v569 = vsub.f32 %v553, %v561
      %v570 = vsub.f32 %v554, %v562
      %v571 = vmul.f32 %v539, %v475
      %v572 = vmul.f32 %v540, %v476
      %v573 = vmul.f32 %v541, %v477
      %v574 = vmul.f32 %v542, %v478
      %v575 = vmul.f32 %v543, %v479
      %v576 = vmul.f32 %v544, %v480
      %v577 = vmul.f32 %v545, %v481
      %v578 = vmul.f32 %v546, %v482
      %v579 = vadd.f32 %v571, %v571
      %v580 = vadd.f32 %v572, %v572
      %v581 = vadd.f32 %v573, %v573
      %v582 = vadd.f32 %v574, %v574
      %v583 = vadd.f32 %v575, %v575
      %v584 = vadd.f32 %v576, %v576
      %v585 = vadd.f32 %v577, %v577
      %v586 = vadd.f32 %v578, %v578
      %v587 = vmul.f32 %v563, %v475
      %v588 = vmul.f32 %v564, %v476
      %v589 = vmul.f32 %v565, %v477
      %v590 = vmul.f32 %v566, %v478
      %v591 = vmul.f32 %v567, %v479
      %v592 = vmul.f32 %v568, %v480
      %v593 = vmul.f32 %v569, %v481
      %v594 = vmul.f32 %v570, %v482
      %v595 = vmul.f32 %v579, %v539
      %v596 = vmul.f32 %v580, %v540
      %v597 = vmul.f32 %v581, %v541
      %v598 = vmul.f32 %v582, %v542
      %v599 = vmul.f32 %v583, %v543
      %v600 = vmul.f32 %v584, %v544
      %v601 = vmul.f32 %v585, %v545
      %v602 = vmul.f32 %v586, %v546
      %v603 = vsub.f32 %v587, %v595
      %v604 = vsub.f32 %v588, %v596
      %v605 = vsub.f32 %v589, %v597
      %v606 = vsub.f32 %v590, %v598
      %v607 = vsub.f32 %v591, %v599
      %v608 = vsub.f32 %v592, %v600
      %v609 = vsub.f32 %v593, %v601
      %v610 = vsub.f32 %v594, %v602
      %v611 = vmul.f32 %v579, %v475
      %v612 = vmul.f32 %v580, %v476
      %v613 = vmul.f32 %v581, %v477
      %v614 = vmul.f32 %v582, %v478
      %v615 = vmul.f32 %v583, %v479
      %v616 = vmul.f32 %v584, %v480
      %v617 = vmul.f32 %v585, %v481
      %v618 = vmul.f32 %v586, %v482
      %v619 = vmul.f32 %v563, %v539
      %v620 = vmul.f32 %v564, %v540
      %v621 = vmul.f32 %v565, %v541
      %v622 = vmul.f32 %v566, %v542
      %v623 = vmul.f32 %v567, %v543
      %v624 = vmul.f32 %v568, %v544
      %v625 = vmul.f32 %v569, %v545
      %v626 = vmul.f32 %v570, %v546
      %v627 = vadd.f32 %v611, %v619
      %v628 = vadd.f32 %v612, %v620
      %v629 = vadd.f32 %v613, %v621
      %v630 = vadd.f32 %v614, %v622
      %v631 = vadd.f32 %v615, %v623
      %v632 = vadd.f32 %v616, %v624
      %v633 = vadd.f32 %v617, %v625
      %v634 = vadd.f32 %v618, %v626
      %v635 = vmul.f32 %v451, 0.48860252
      %v636 = vmul.f32 %v452, 0.48860252
      %v637 = vmul.f32 %v453, 0.48860252
      %v638 = vmul.f32 %v454, 0.48860252
      %v639 = vmul.f32 %v455, 0.48860252
      %v640 = vmul.f32 %v456, 0.48860252
      %v641 = vmul.f32 %v457, 0.48860252
      %v642 = vmul.f32 %v458, 0.48860252
      %v643 = vmul.f32 %v635, %v539
      %v644 = vmul.f32 %v636, %v540
      %v645 = vmul.f32 %v637, %v541
      %v646 = vmul.f32 %v638, %v542
      %v647 = vmul.f32 %v639, %v543
      %v648 = vmul.f32 %v640, %v544
      %v649 = vmul.f32 %v641, %v545
      %v650 = vmul.f32 %v642, %v546
      %v651 = vmul.f32 %v435, 0.48860252
      %v652 = vmul.f32 %v436, 0.48860252
      %v653 = vmul.f32 %v437, 0.48860252
      %v654 = vmul.f32 %v438, 0.48860252
      %v655 = vmul.f32 %v439, 0.48860252
      %v656 = vmul.f32 %v440, 0.48860252
      %v657 = vmul.f32 %v441, 0.48860252
      %v658 = vmul.f32 %v442, 0.48860252
      %v659 = vmul.f32 %v635, %v475
      %v660 = vmul.f32 %v636, %v476
      %v661 = vmul.f32 %v637, %v477
      %v662 = vmul.f32 %v638, %v478
      %v663 = vmul.f32 %v639, %v479
      %v664 = vmul.f32 %v640, %v480
      %v665 = vmul.f32 %v641, %v481
      %v666 = vmul.f32 %v642, %v482
      %v667 = vmul.f32 %v451, %v451
      %v668 = vmul.f32 %v452, %v452
      %v669 = vmul.f32 %v453, %v453
      %v670 = vmul.f32 %v454, %v454
      %v671 = vmul.f32 %v455, %v455
      %v672 = vmul.f32 %v456, %v456
      %v673 = vmul.f32 %v457, %v457
      %v674 = vmul.f32 %v458, %v458
      %v675 = vmul.f32 %v667, 3.0
      %v676 = vmul.f32 %v668, 3.0
      %v677 = vmul.f32 %v669, 3.0
      %v678 = vmul.f32 %v670, 3.0
      %v679 = vmul.f32 %v671, 3.0
      %v680 = vmul.f32 %v672, 3.0
      %v681 = vmul.f32 %v673, 3.0
      %v682 = vmul.f32 %v674, 3.0
      %v683 = vmul.f32 %v675, 0.1820914
      %v684 = vmul.f32 %v676, 0.1820914
      %v685 = vmul.f32 %v677, 0.1820914
      %v686 = vmul.f32 %v678, 0.1820914
      %v687 = vmul.f32 %v679, 0.1820914
      %v688 = vmul.f32 %v680, 0.1820914
      %v689 = vmul.f32 %v681, 0.1820914
      %v690 = vmul.f32 %v682, 0.1820914
      %v691 = vmul.f32 %v683, %v579
      %v692 = vmul.f32 %v684, %v580
      %v693 = vmul.f32 %v685, %v581
      %v694 = vmul.f32 %v686, %v582
      %v695 = vmul.f32 %v687, %v583
      %v696 = vmul.f32 %v688, %v584
      %v697 = vmul.f32 %v689, %v585
      %v698 = vmul.f32 %v690, %v586
      %v699 = vmul.f32 %v435, 3.0
      %v700 = vmul.f32 %v436, 3.0
      %v701 = vmul.f32 %v437, 3.0
      %v702 = vmul.f32 %v438, 3.0
      %v703 = vmul.f32 %v439, 3.0
      %v704 = vmul.f32 %v440, 3.0
      %v705 = vmul.f32 %v441, 3.0
      %v706 = vmul.f32 %v442, 3.0
      %v715 = vrot.slane %v451, 6
      %v716 = vrot.slane %v452, 6
      %v717 = vrot.slane %v453, 6
      %v718 = vrot.slane %v454, 6
      %v719 = vrot.slane %v455, 6
      %v720 = vrot.slane %v456, 6
      %v721 = vrot.slane %v457, 6
      %v722 = vrot.slane %v458, 6
      %v731 = vmul.f32 %v699, %v715
      %v732 = vmul.f32 %v700, %v716
      %v733 = vmul.f32 %v701, %v717
      %v734 = vmul.f32 %v702, %v718
      %v735 = vmul.f32 %v703, %v719
      %v736 = vmul.f32 %v704, %v720
      %v737 = vmul.f32 %v705, %v721
      %v738 = vmul.f32 %v706, %v722
      %v739 = vmul.f32 %v731, 0.3641828
      %v740 = vmul.f32 %v732, 0.3641828
      %v741 = vmul.f32 %v733, 0.3641828
      %v742 = vmul.f32 %v734, 0.3641828
      %v743 = vmul.f32 %v735, 0.3641828
      %v744 = vmul.f32 %v736, 0.3641828
      %v745 = vmul.f32 %v737, 0.3641828
      %v746 = vmul.f32 %v738, 0.3641828
      %v755 = vrot.slane %v539, 6
      %v756 = vrot.slane %v540, 6
      %v757 = vrot.slane %v541, 6
      %v758 = vrot.slane %v542, 6
      %v759 = vrot.slane %v543, 6
      %v760 = vrot.slane %v544, 6
      %v761 = vrot.slane %v545, 6
      %v762 = vrot.slane %v546, 6
      %v771 = vmul.f32 %v739, %v755
      %v772 = vmul.f32 %v740, %v756
      %v773 = vmul.f32 %v741, %v757
      %v774 = vmul.f32 %v742, %v758
      %v775 = vmul.f32 %v743, %v759
      %v776 = vmul.f32 %v744, %v760
      %v777 = vmul.f32 %v745, %v761
      %v778 = vmul.f32 %v746, %v762
      %v779 = vmul.f32 %v699, %v435
      %v780 = vmul.f32 %v700, %v436
      %v781 = vmul.f32 %v701, %v437
      %v782 = vmul.f32 %v702, %v438
      %v783 = vmul.f32 %v703, %v439
      %v784 = vmul.f32 %v704, %v440
      %v785 = vmul.f32 %v705, %v441
      %v786 = vmul.f32 %v706, %v442
      %v787 = vsub.f32 %v779, 1.0
      %v788 = vsub.f32 %v780, 1.0
      %v789 = vsub.f32 %v781, 1.0
      %v790 = vsub.f32 %v782, 1.0
      %v791 = vsub.f32 %v783, 1.0
      %v792 = vsub.f32 %v784, 1.0
      %v793 = vsub.f32 %v785, 1.0
      %v794 = vsub.f32 %v786, 1.0
      %v795 = vrcp.pop 2.0
      %v796 = vmul.f32 2.0, %v795
      %v797 = vsub.f32 1.0, %v796
      %v798 = vmul.f32 %v795, %v797
      %v799 = vadd.f32 %v795, %v798
      %vm800 = vweird.f32 %v795
      %v801 = vsel %vm800, %v795, %v799
      %v802 = vmul.f32 %v787, %v801
      %v803 = vmul.f32 %v788, %v801
      %v804 = vmul.f32 %v789, %v801
      %v805 = vmul.f32 %v790, %v801
      %v806 = vmul.f32 %v791, %v801
      %v807 = vmul.f32 %v792, %v801
      %v808 = vmul.f32 %v793, %v801
      %v809 = vmul.f32 %v794, %v801
      %v810 = vmul.f32 %v802, 0.63078314
      %v811 = vmul.f32 %v803, 0.63078314
      %v812 = vmul.f32 %v804, 0.63078314
      %v813 = vmul.f32 %v805, 0.63078314
      %v814 = vmul.f32 %v806, 0.63078314
      %v815 = vmul.f32 %v807, 0.63078314
      %v816 = vmul.f32 %v808, 0.63078314
      %v817 = vmul.f32 %v809, 0.63078314
      %v826 = vrot.slane %v475, 6
      %v827 = vrot.slane %v476, 6
      %v828 = vrot.slane %v477, 6
      %v829 = vrot.slane %v478, 6
      %v830 = vrot.slane %v479, 6
      %v831 = vrot.slane %v480, 6
      %v832 = vrot.slane %v481, 6
      %v833 = vrot.slane %v482, 6
      %v842 = vmul.f32 %v739, %v826
      %v843 = vmul.f32 %v740, %v827
      %v844 = vmul.f32 %v741, %v828
      %v845 = vmul.f32 %v742, %v829
      %v846 = vmul.f32 %v743, %v830
      %v847 = vmul.f32 %v744, %v831
      %v848 = vmul.f32 %v745, %v832
      %v849 = vmul.f32 %v746, %v833
      %v850 = vmul.f32 %v683, %v563
      %v851 = vmul.f32 %v684, %v564
      %v852 = vmul.f32 %v685, %v565
      %v853 = vmul.f32 %v686, %v566
      %v854 = vmul.f32 %v687, %v567
      %v855 = vmul.f32 %v688, %v568
      %v856 = vmul.f32 %v689, %v569
      %v857 = vmul.f32 %v690, %v570
      %v858 = vmul.f32 %v451, %v667
      %v859 = vmul.f32 %v452, %v668
      %v860 = vmul.f32 %v453, %v669
      %v861 = vmul.f32 %v454, %v670
      %v862 = vmul.f32 %v455, %v671
      %v863 = vmul.f32 %v456, %v672
      %v864 = vmul.f32 %v457, %v673
      %v865 = vmul.f32 %v458, %v674
      %v866 = vmul.f32 %v858, 15.0
      %v867 = vmul.f32 %v859, 15.0
      %v868 = vmul.f32 %v860, 15.0
      %v869 = vmul.f32 %v861, 15.0
      %v870 = vmul.f32 %v862, 15.0
      %v871 = vmul.f32 %v863, 15.0
      %v872 = vmul.f32 %v864, 15.0
      %v873 = vmul.f32 %v865, 15.0
      %v874 = vmul.f32 %v866, 0.039336238
      %v875 = vmul.f32 %v867, 0.039336238
      %v876 = vmul.f32 %v868, 0.039336238
      %v877 = vmul.f32 %v869, 0.039336238
      %v878 = vmul.f32 %v870, 0.039336238
      %v879 = vmul.f32 %v871, 0.039336238
      %v880 = vmul.f32 %v872, 0.039336238
      %v881 = vmul.f32 %v873, 0.039336238
      %v882 = vmul.f32 %v874, %v627
      %v883 = vmul.f32 %v875, %v628
      %v884 = vmul.f32 %v876, %v629
      %v885 = vmul.f32 %v877, %v630
      %v886 = vmul.f32 %v878, %v631
      %v887 = vmul.f32 %v879, %v632
      %v888 = vmul.f32 %v880, %v633
      %v889 = vmul.f32 %v881, %v634
      %v890 = vmul.f32 %v435, 5.0
      %v891 = vmul.f32 %v436, 5.0
      %v892 = vmul.f32 %v437, 5.0
      %v893 = vmul.f32 %v438, 5.0
      %v894 = vmul.f32 %v439, 5.0
      %v895 = vmul.f32 %v440, 5.0
      %v896 = vmul.f32 %v441, 5.0
      %v897 = vmul.f32 %v442, 5.0
      %v906 = vrot.slane %v675, 6
      %v907 = vrot.slane %v676, 6
      %v908 = vrot.slane %v677, 6
      %v909 = vrot.slane %v678, 6
      %v910 = vrot.slane %v679, 6
      %v911 = vrot.slane %v680, 6
      %v912 = vrot.slane %v681, 6
      %v913 = vrot.slane %v682, 6
      %v922 = vmul.f32 %v890, %v906
      %v923 = vmul.f32 %v891, %v907
      %v924 = vmul.f32 %v892, %v908
      %v925 = vmul.f32 %v893, %v909
      %v926 = vmul.f32 %v894, %v910
      %v927 = vmul.f32 %v895, %v911
      %v928 = vmul.f32 %v896, %v912
      %v929 = vmul.f32 %v897, %v913
      %v930 = vmul.f32 %v922, 0.09635372
      %v931 = vmul.f32 %v923, 0.09635372
      %v932 = vmul.f32 %v924, 0.09635372
      %v933 = vmul.f32 %v925, 0.09635372
      %v934 = vmul.f32 %v926, 0.09635372
      %v935 = vmul.f32 %v927, 0.09635372
      %v936 = vmul.f32 %v928, 0.09635372
      %v937 = vmul.f32 %v929, 0.09635372
      %v946 = vrot.slane %v579, 6
      %v947 = vrot.slane %v580, 6
      %v948 = vrot.slane %v581, 6
      %v949 = vrot.slane %v582, 6
      %v950 = vrot.slane %v583, 6
      %v951 = vrot.slane %v584, 6
      %v952 = vrot.slane %v585, 6
      %v953 = vrot.slane %v586, 6
      %v962 = vmul.f32 %v930, %v946
      %v963 = vmul.f32 %v931, %v947
      %v964 = vmul.f32 %v932, %v948
      %v965 = vmul.f32 %v933, %v949
      %v966 = vmul.f32 %v934, %v950
      %v967 = vmul.f32 %v935, %v951
      %v968 = vmul.f32 %v936, %v952
      %v969 = vmul.f32 %v937, %v953
      %v970 = vmul.f32 %v890, %v731
      %v971 = vmul.f32 %v891, %v732
      %v972 = vmul.f32 %v892, %v733
      %v973 = vmul.f32 %v893, %v734
      %v974 = vmul.f32 %v894, %v735
      %v975 = vmul.f32 %v895, %v736
      %v976 = vmul.f32 %v896, %v737
      %v977 = vmul.f32 %v897, %v738
      %v978 = vmul.f32 %v451, 3.0
      %v979 = vmul.f32 %v452, 3.0
      %v980 = vmul.f32 %v453, 3.0
      %v981 = vmul.f32 %v454, 3.0
      %v982 = vmul.f32 %v455, 3.0
      %v983 = vmul.f32 %v456, 3.0
      %v984 = vmul.f32 %v457, 3.0
      %v985 = vmul.f32 %v458, 3.0
      %v994 = vrot.slane %v978, 6
      %v995 = vrot.slane %v979, 6
      %v996 = vrot.slane %v980, 6
      %v997 = vrot.slane %v981, 6
      %v998 = vrot.slane %v982, 6
      %v999 = vrot.slane %v983, 6
      %v1000 = vrot.slane %v984, 6
      %v1001 = vrot.slane %v985, 6
      %v1010 = vsub.f32 %v970, %v994
      %v1011 = vsub.f32 %v971, %v995
      %v1012 = vsub.f32 %v972, %v996
      %v1013 = vsub.f32 %v973, %v997
      %v1014 = vsub.f32 %v974, %v998
      %v1015 = vsub.f32 %v975, %v999
      %v1016 = vsub.f32 %v976, %v1000
      %v1017 = vsub.f32 %v977, %v1001
      %v1018 = vmul.f32 %v1010, %v801
      %v1019 = vmul.f32 %v1011, %v801
      %v1020 = vmul.f32 %v1012, %v801
      %v1021 = vmul.f32 %v1013, %v801
      %v1022 = vmul.f32 %v1014, %v801
      %v1023 = vmul.f32 %v1015, %v801
      %v1024 = vmul.f32 %v1016, %v801
      %v1025 = vmul.f32 %v1017, %v801
      %v1026 = vmul.f32 %v1018, 0.3046972
      %v1027 = vmul.f32 %v1019, 0.3046972
      %v1028 = vmul.f32 %v1020, 0.3046972
      %v1029 = vmul.f32 %v1021, 0.3046972
      %v1030 = vmul.f32 %v1022, 0.3046972
      %v1031 = vmul.f32 %v1023, 0.3046972
      %v1032 = vmul.f32 %v1024, 0.3046972
      %v1033 = vmul.f32 %v1025, 0.3046972
      %v1034 = vmul.f32 %v1026, %v755
      %v1035 = vmul.f32 %v1027, %v756
      %v1036 = vmul.f32 %v1028, %v757
      %v1037 = vmul.f32 %v1029, %v758
      %v1038 = vmul.f32 %v1030, %v759
      %v1039 = vmul.f32 %v1031, %v760
      %v1040 = vmul.f32 %v1032, %v761
      %v1041 = vmul.f32 %v1033, %v762
      %v1042 = vmul.f32 %v890, %v802
      %v1043 = vmul.f32 %v891, %v803
      %v1044 = vmul.f32 %v892, %v804
      %v1045 = vmul.f32 %v893, %v805
      %v1046 = vmul.f32 %v894, %v806
      %v1047 = vmul.f32 %v895, %v807
      %v1048 = vmul.f32 %v896, %v808
      %v1049 = vmul.f32 %v897, %v809
      %v1050 = vmul.f32 %v435, 2.0
      %v1051 = vmul.f32 %v436, 2.0
      %v1052 = vmul.f32 %v437, 2.0
      %v1053 = vmul.f32 %v438, 2.0
      %v1054 = vmul.f32 %v439, 2.0
      %v1055 = vmul.f32 %v440, 2.0
      %v1056 = vmul.f32 %v441, 2.0
      %v1057 = vmul.f32 %v442, 2.0
      %v1058 = vsub.f32 %v1042, %v1050
      %v1059 = vsub.f32 %v1043, %v1051
      %v1060 = vsub.f32 %v1044, %v1052
      %v1061 = vsub.f32 %v1045, %v1053
      %v1062 = vsub.f32 %v1046, %v1054
      %v1063 = vsub.f32 %v1047, %v1055
      %v1064 = vsub.f32 %v1048, %v1056
      %v1065 = vsub.f32 %v1049, %v1057
      %v1066 = vrcp.pop 3.0
      %v1067 = vmul.f32 3.0, %v1066
      %v1068 = vsub.f32 1.0, %v1067
      %v1069 = vmul.f32 %v1066, %v1068
      %v1070 = vadd.f32 %v1066, %v1069
      %vm1071 = vweird.f32 %v1066
      %v1072 = vsel %vm1071, %v1066, %v1070
      %v1073 = vmul.f32 %v1058, %v1072
      %v1074 = vmul.f32 %v1059, %v1072
      %v1075 = vmul.f32 %v1060, %v1072
      %v1076 = vmul.f32 %v1061, %v1072
      %v1077 = vmul.f32 %v1062, %v1072
      %v1078 = vmul.f32 %v1063, %v1072
      %v1079 = vmul.f32 %v1064, %v1072
      %v1080 = vmul.f32 %v1065, %v1072
      %v1081 = vmul.f32 %v1073, 0.7463527
      %v1082 = vmul.f32 %v1074, 0.7463527
      %v1083 = vmul.f32 %v1075, 0.7463527
      %v1084 = vmul.f32 %v1076, 0.7463527
      %v1085 = vmul.f32 %v1077, 0.7463527
      %v1086 = vmul.f32 %v1078, 0.7463527
      %v1087 = vmul.f32 %v1079, 0.7463527
      %v1088 = vmul.f32 %v1080, 0.7463527
      %v1089 = vmul.f32 %v1026, %v826
      %v1090 = vmul.f32 %v1027, %v827
      %v1091 = vmul.f32 %v1028, %v828
      %v1092 = vmul.f32 %v1029, %v829
      %v1093 = vmul.f32 %v1030, %v830
      %v1094 = vmul.f32 %v1031, %v831
      %v1095 = vmul.f32 %v1032, %v832
      %v1096 = vmul.f32 %v1033, %v833
      %v1105 = vrot.slane %v563, 6
      %v1106 = vrot.slane %v564, 6
      %v1107 = vrot.slane %v565, 6
      %v1108 = vrot.slane %v566, 6
      %v1109 = vrot.slane %v567, 6
      %v1110 = vrot.slane %v568, 6
      %v1111 = vrot.slane %v569, 6
      %v1112 = vrot.slane %v570, 6
      %v1121 = vmul.f32 %v930, %v1105
      %v1122 = vmul.f32 %v931, %v1106
      %v1123 = vmul.f32 %v932, %v1107
      %v1124 = vmul.f32 %v933, %v1108
      %v1125 = vmul.f32 %v934, %v1109
      %v1126 = vmul.f32 %v935, %v1110
      %v1127 = vmul.f32 %v936, %v1111
      %v1128 = vmul.f32 %v937, %v1112
      %v1129 = vmul.f32 %v874, %v603
      %v1130 = vmul.f32 %v875, %v604
      %v1131 = vmul.f32 %v876, %v605
      %v1132 = vmul.f32 %v877, %v606
      %v1133 = vmul.f32 %v878, %v607
      %v1134 = vmul.f32 %v879, %v608
      %v1135 = vmul.f32 %v880, %v609
      %v1136 = vmul.f32 %v881, %v610
      %v1145 = vrot.slane %v643, 1
      %v1146 = vrot.slane %v644, 1
      %v1147 = vrot.slane %v645, 1
      %v1148 = vrot.slane %v646, 1
      %v1149 = vrot.slane %v647, 1
      %v1150 = vrot.slane %v648, 1
      %v1151 = vrot.slane %v649, 1
      %v1152 = vrot.slane %v650, 1
      %v1169 = vrot.slane %v651, 2
      %v1170 = vrot.slane %v652, 2
      %v1171 = vrot.slane %v653, 2
      %v1172 = vrot.slane %v654, 2
      %v1173 = vrot.slane %v655, 2
      %v1174 = vrot.slane %v656, 2
      %v1175 = vrot.slane %v657, 2
      %v1176 = vrot.slane %v658, 2
      %v1193 = vrot.slane %v659, 7
      %v1194 = vrot.slane %v660, 7
      %v1195 = vrot.slane %v661, 7
      %v1196 = vrot.slane %v662, 7
      %v1197 = vrot.slane %v663, 7
      %v1198 = vrot.slane %v664, 7
      %v1199 = vrot.slane %v665, 7
      %v1200 = vrot.slane %v666, 7
      %v1217 = vrot.slane %v691, 6
      %v1218 = vrot.slane %v692, 6
      %v1219 = vrot.slane %v693, 6
      %v1220 = vrot.slane %v694, 6
      %v1221 = vrot.slane %v695, 6
      %v1222 = vrot.slane %v696, 6
      %v1223 = vrot.slane %v697, 6
      %v1224 = vrot.slane %v698, 6
      %v1241 = vrot.slane %v771, 7
      %v1242 = vrot.slane %v772, 7
      %v1243 = vrot.slane %v773, 7
      %v1244 = vrot.slane %v774, 7
      %v1245 = vrot.slane %v775, 7
      %v1246 = vrot.slane %v776, 7
      %v1247 = vrot.slane %v777, 7
      %v1248 = vrot.slane %v778, 7
      %v1265 = vrot.slane %v810, 6
      %v1266 = vrot.slane %v811, 6
      %v1267 = vrot.slane %v812, 6
      %v1268 = vrot.slane %v813, 6
      %v1269 = vrot.slane %v814, 6
      %v1270 = vrot.slane %v815, 6
      %v1271 = vrot.slane %v816, 6
      %v1272 = vrot.slane %v817, 6
      %v1289 = vrot.slane %v842, 5
      %v1290 = vrot.slane %v843, 5
      %v1291 = vrot.slane %v844, 5
      %v1292 = vrot.slane %v845, 5
      %v1293 = vrot.slane %v846, 5
      %v1294 = vrot.slane %v847, 5
      %v1295 = vrot.slane %v848, 5
      %v1296 = vrot.slane %v849, 5
      %v1313 = vrot.slane %v850, 2
      %v1314 = vrot.slane %v851, 2
      %v1315 = vrot.slane %v852, 2
      %v1316 = vrot.slane %v853, 2
      %v1317 = vrot.slane %v854, 2
      %v1318 = vrot.slane %v855, 2
      %v1319 = vrot.slane %v856, 2
      %v1320 = vrot.slane %v857, 2
      %v1337 = vrot.slane %v882, 1
      %v1338 = vrot.slane %v883, 1
      %v1339 = vrot.slane %v884, 1
      %v1340 = vrot.slane %v885, 1
      %v1341 = vrot.slane %v886, 1
      %v1342 = vrot.slane %v887, 1
      %v1343 = vrot.slane %v888, 1
      %v1344 = vrot.slane %v889, 1
      %v1361 = vrot.slane %v962, 2
      %v1362 = vrot.slane %v963, 2
      %v1363 = vrot.slane %v964, 2
      %v1364 = vrot.slane %v965, 2
      %v1365 = vrot.slane %v966, 2
      %v1366 = vrot.slane %v967, 2
      %v1367 = vrot.slane %v968, 2
      %v1368 = vrot.slane %v969, 2
      %v1385 = vrot.slane %v1034, 1
      %v1386 = vrot.slane %v1035, 1
      %v1387 = vrot.slane %v1036, 1
      %v1388 = vrot.slane %v1037, 1
      %v1389 = vrot.slane %v1038, 1
      %v1390 = vrot.slane %v1039, 1
      %v1391 = vrot.slane %v1040, 1
      %v1392 = vrot.slane %v1041, 1
      %v1409 = vrot.slane %v1089, 7
      %v1410 = vrot.slane %v1090, 7
      %v1411 = vrot.slane %v1091, 7
      %v1412 = vrot.slane %v1092, 7
      %v1413 = vrot.slane %v1093, 7
      %v1414 = vrot.slane %v1094, 7
      %v1415 = vrot.slane %v1095, 7
      %v1416 = vrot.slane %v1096, 7
      %v1433 = vrot.slane %v1121, 6
      %v1434 = vrot.slane %v1122, 6
      %v1435 = vrot.slane %v1123, 6
      %v1436 = vrot.slane %v1124, 6
      %v1437 = vrot.slane %v1125, 6
      %v1438 = vrot.slane %v1126, 6
      %v1439 = vrot.slane %v1127, 6
      %v1440 = vrot.slane %v1128, 6
      %v1457 = vrot.slane %v1129, 3
      %v1458 = vrot.slane %v1130, 3
      %v1459 = vrot.slane %v1131, 3
      %v1460 = vrot.slane %v1132, 3
      %v1461 = vrot.slane %v1133, 3
      %v1462 = vrot.slane %v1134, 3
      %v1463 = vrot.slane %v1135, 3
      %v1464 = vrot.slane %v1136, 3
      %vm1473 = vcmask 1040384
      %v1474 = vsel %vm1473, 0.2820948, %v1145
      %v1475 = vsel %vm1473, 0.2820948, %v1146
      %v1476 = vsel %vm1473, 0.2820948, %v1147
      %v1477 = vsel %vm1473, 0.2820948, %v1148
      %v1478 = vsel %vm1473, 0.2820948, %v1149
      %v1479 = vsel %vm1473, 0.2820948, %v1150
      %v1480 = vsel %vm1473, 0.2820948, %v1151
      %v1481 = vsel %vm1473, 0.2820948, %v1152
      %vm1482 = vcmask 1041408
      %v1483 = vsel %vm1482, %v1474, %v1169
      %v1484 = vsel %vm1482, %v1475, %v1170
      %v1485 = vsel %vm1482, %v1476, %v1171
      %v1486 = vsel %vm1482, %v1477, %v1172
      %v1487 = vsel %vm1482, %v1478, %v1173
      %v1488 = vsel %vm1482, %v1479, %v1174
      %v1489 = vsel %vm1482, %v1480, %v1175
      %v1490 = vsel %vm1482, %v1481, %v1176
      %vm1491 = vcmask 1042432
      %v1492 = vsel %vm1491, %v1483, %v1193
      %v1493 = vsel %vm1491, %v1484, %v1194
      %v1494 = vsel %vm1491, %v1485, %v1195
      %v1495 = vsel %vm1491, %v1486, %v1196
      %v1496 = vsel %vm1491, %v1487, %v1197
      %v1497 = vsel %vm1491, %v1488, %v1198
      %v1498 = vsel %vm1491, %v1489, %v1199
      %v1499 = vsel %vm1491, %v1490, %v1200
      %vm1500 = vcmask 1043456
      %v1501 = vsel %vm1500, %v1492, %v1217
      %v1502 = vsel %vm1500, %v1493, %v1218
      %v1503 = vsel %vm1500, %v1494, %v1219
      %v1504 = vsel %vm1500, %v1495, %v1220
      %v1505 = vsel %vm1500, %v1496, %v1221
      %v1506 = vsel %vm1500, %v1497, %v1222
      %v1507 = vsel %vm1500, %v1498, %v1223
      %v1508 = vsel %vm1500, %v1499, %v1224
      %vm1509 = vcmask 1044480
      %v1510 = vsel %vm1509, %v1501, %v1241
      %v1511 = vsel %vm1509, %v1502, %v1242
      %v1512 = vsel %vm1509, %v1503, %v1243
      %v1513 = vsel %vm1509, %v1504, %v1244
      %v1514 = vsel %vm1509, %v1505, %v1245
      %v1515 = vsel %vm1509, %v1506, %v1246
      %v1516 = vsel %vm1509, %v1507, %v1247
      %v1517 = vsel %vm1509, %v1508, %v1248
      %vm1518 = vcmask 1045504
      %v1519 = vsel %vm1518, %v1510, %v1265
      %v1520 = vsel %vm1518, %v1511, %v1266
      %v1521 = vsel %vm1518, %v1512, %v1267
      %v1522 = vsel %vm1518, %v1513, %v1268
      %v1523 = vsel %vm1518, %v1514, %v1269
      %v1524 = vsel %vm1518, %v1515, %v1270
      %v1525 = vsel %vm1518, %v1516, %v1271
      %v1526 = vsel %vm1518, %v1517, %v1272
      %vm1527 = vcmask 1046528
      %v1528 = vsel %vm1527, %v1519, %v1289
      %v1529 = vsel %vm1527, %v1520, %v1290
      %v1530 = vsel %vm1527, %v1521, %v1291
      %v1531 = vsel %vm1527, %v1522, %v1292
      %v1532 = vsel %vm1527, %v1523, %v1293
      %v1533 = vsel %vm1527, %v1524, %v1294
      %v1534 = vsel %vm1527, %v1525, %v1295
      %v1535 = vsel %vm1527, %v1526, %v1296
      %v1536 = vsel %vm1473, %v1313, %v1337
      %v1537 = vsel %vm1473, %v1314, %v1338
      %v1538 = vsel %vm1473, %v1315, %v1339
      %v1539 = vsel %vm1473, %v1316, %v1340
      %v1540 = vsel %vm1473, %v1317, %v1341
      %v1541 = vsel %vm1473, %v1318, %v1342
      %v1542 = vsel %vm1473, %v1319, %v1343
      %v1543 = vsel %vm1473, %v1320, %v1344
      %v1544 = vsel %vm1482, %v1536, %v1361
      %v1545 = vsel %vm1482, %v1537, %v1362
      %v1546 = vsel %vm1482, %v1538, %v1363
      %v1547 = vsel %vm1482, %v1539, %v1364
      %v1548 = vsel %vm1482, %v1540, %v1365
      %v1549 = vsel %vm1482, %v1541, %v1366
      %v1550 = vsel %vm1482, %v1542, %v1367
      %v1551 = vsel %vm1482, %v1543, %v1368
      %v1552 = vsel %vm1491, %v1544, %v1385
      %v1553 = vsel %vm1491, %v1545, %v1386
      %v1554 = vsel %vm1491, %v1546, %v1387
      %v1555 = vsel %vm1491, %v1547, %v1388
      %v1556 = vsel %vm1491, %v1548, %v1389
      %v1557 = vsel %vm1491, %v1549, %v1390
      %v1558 = vsel %vm1491, %v1550, %v1391
      %v1559 = vsel %vm1491, %v1551, %v1392
      %v1560 = vsel %vm1500, %v1552, %v1081
      %v1561 = vsel %vm1500, %v1553, %v1082
      %v1562 = vsel %vm1500, %v1554, %v1083
      %v1563 = vsel %vm1500, %v1555, %v1084
      %v1564 = vsel %vm1500, %v1556, %v1085
      %v1565 = vsel %vm1500, %v1557, %v1086
      %v1566 = vsel %vm1500, %v1558, %v1087
      %v1567 = vsel %vm1500, %v1559, %v1088
      %v1568 = vsel %vm1509, %v1560, %v1409
      %v1569 = vsel %vm1509, %v1561, %v1410
      %v1570 = vsel %vm1509, %v1562, %v1411
      %v1571 = vsel %vm1509, %v1563, %v1412
      %v1572 = vsel %vm1509, %v1564, %v1413
      %v1573 = vsel %vm1509, %v1565, %v1414
      %v1574 = vsel %vm1509, %v1566, %v1415
      %v1575 = vsel %vm1509, %v1567, %v1416
      %v1576 = vsel %vm1518, %v1568, %v1433
      %v1577 = vsel %vm1518, %v1569, %v1434
      %v1578 = vsel %vm1518, %v1570, %v1435
      %v1579 = vsel %vm1518, %v1571, %v1436
      %v1580 = vsel %vm1518, %v1572, %v1437
      %v1581 = vsel %vm1518, %v1573, %v1438
      %v1582 = vsel %vm1518, %v1574, %v1439
      %v1583 = vsel %vm1518, %v1575, %v1440
      %v1584 = vsel %vm1527, %v1576, %v1457
      %v1585 = vsel %vm1527, %v1577, %v1458
      %v1586 = vsel %vm1527, %v1578, %v1459
      %v1587 = vsel %vm1527, %v1579, %v1460
      %v1588 = vsel %vm1527, %v1580, %v1461
      %v1589 = vsel %vm1527, %v1581, %v1462
      %v1590 = vsel %vm1527, %v1582, %v1463
      %v1591 = vsel %vm1527, %v1583, %v1464
      %v1592 = vld [vmem:[%s1] sm:$0xff]
      %v1593 = vld [vmem:[%s1 + $0x8] sm:$0xff]
      %1595 = vset.pattern.permute.xlu0 0
      %1596 = vperm.xlu0 %1595, %v1592
      %v1597 = vpop.permute.xlu0 %1596
      %1600 = vset.pattern.permute.xlu0 0
      %1601 = vperm.xlu0 %1600, %v1593
      %v1602 = vpop.permute.xlu0 %1601
      %v1604 = vperm.slane %v147, 0
      %v1605 = vperm.slane %v148, 0
      %v1606 = vperm.slane %v149, 0
      %v1607 = vperm.slane %v150, 0
      %v1608 = vperm.slane %v151, 0
      %v1609 = vperm.slane %v152, 0
      %v1610 = vperm.slane %v153, 0
      %v1611 = vperm.slane %v154, 0
      %v1612 = vmul.f32 %v1597, %v1604
      %v1613 = vmul.f32 %v1597, %v1605
      %v1614 = vmul.f32 %v1597, %v1606
      %v1615 = vmul.f32 %v1597, %v1607
      %v1616 = vmul.f32 %v1597, %v1608
      %v1617 = vmul.f32 %v1597, %v1609
      %v1618 = vmul.f32 %v1597, %v1610
      %v1619 = vmul.f32 %v1597, %v1611
      %v1620 = vmul.f32 %v1602, %v1604
      %v1621 = vmul.f32 %v1602, %v1605
      %v1622 = vmul.f32 %v1602, %v1606
      %v1623 = vmul.f32 %v1602, %v1607
      %v1624 = vmul.f32 %v1602, %v1608
      %v1625 = vmul.f32 %v1602, %v1609
      %v1626 = vmul.f32 %v1602, %v1610
      %v1627 = vmul.f32 %v1602, %v1611
      %1628 = vset.pattern.permute.xlu0 37
      %1629 = vperm.xlu0 %1628, %v1592
      %v1630 = vpop.permute.xlu0 %1629
      %1632 = vset.pattern.permute.xlu0 37
      %1633 = vperm.xlu0 %1632, %v1593
      %v1634 = vpop.permute.xlu0 %1633
      %v1636 = vadd.f32 %v1630, %v1612
      %v1637 = vadd.f32 %v1630, %v1613
      %v1638 = vadd.f32 %v1630, %v1614
      %v1639 = vadd.f32 %v1630, %v1615
      %v1640 = vadd.f32 %v1630, %v1616
      %v1641 = vadd.f32 %v1630, %v1617
      %v1642 = vadd.f32 %v1630, %v1618
      %v1643 = vadd.f32 %v1630, %v1619
      %v1644 = vadd.f32 %v1634, %v1620
      %v1645 = vadd.f32 %v1634, %v1621
      %v1646 = vadd.f32 %v1634, %v1622
      %v1647 = vadd.f32 %v1634, %v1623
      %v1648 = vadd.f32 %v1634, %v1624
      %v1649 = vadd.f32 %v1634, %v1625
      %v1650 = vadd.f32 %v1634, %v1626
      %v1651 = vadd.f32 %v1634, %v1627
      %1652 = vset.pattern.permute.xlu0 1
      %1653 = vperm.xlu0 %1652, %v1592
      %v1654 = vpop.permute.xlu0 %1653
      %1656 = vset.pattern.permute.xlu0 1
      %1657 = vperm.xlu0 %1656, %v1593
      %v1658 = vpop.permute.xlu0 %1657
      %v1660 = vperm.slane %v147, 1
      %v1661 = vperm.slane %v148, 1
      %v1662 = vperm.slane %v149, 1
      %v1663 = vperm.slane %v150, 1
      %v1664 = vperm.slane %v151, 1
      %v1665 = vperm.slane %v152, 1
      %v1666 = vperm.slane %v153, 1
      %v1667 = vperm.slane %v154, 1
      %v1668 = vmul.f32 %v1654, %v1660
      %v1669 = vmul.f32 %v1654, %v1661
      %v1670 = vmul.f32 %v1654, %v1662
      %v1671 = vmul.f32 %v1654, %v1663
      %v1672 = vmul.f32 %v1654, %v1664
      %v1673 = vmul.f32 %v1654, %v1665
      %v1674 = vmul.f32 %v1654, %v1666
      %v1675 = vmul.f32 %v1654, %v1667
      %v1676 = vmul.f32 %v1658, %v1660
      %v1677 = vmul.f32 %v1658, %v1661
      %v1678 = vmul.f32 %v1658, %v1662
      %v1679 = vmul.f32 %v1658, %v1663
      %v1680 = vmul.f32 %v1658, %v1664
      %v1681 = vmul.f32 %v1658, %v1665
      %v1682 = vmul.f32 %v1658, %v1666
      %v1683 = vmul.f32 %v1658, %v1667
      %v1684 = vadd.f32 %v1636, %v1668
      %v1685 = vadd.f32 %v1637, %v1669
      %v1686 = vadd.f32 %v1638, %v1670
      %v1687 = vadd.f32 %v1639, %v1671
      %v1688 = vadd.f32 %v1640, %v1672
      %v1689 = vadd.f32 %v1641, %v1673
      %v1690 = vadd.f32 %v1642, %v1674
      %v1691 = vadd.f32 %v1643, %v1675
      %v1692 = vadd.f32 %v1644, %v1676
      %v1693 = vadd.f32 %v1645, %v1677
      %v1694 = vadd.f32 %v1646, %v1678
      %v1695 = vadd.f32 %v1647, %v1679
      %v1696 = vadd.f32 %v1648, %v1680
      %v1697 = vadd.f32 %v1649, %v1681
      %v1698 = vadd.f32 %v1650, %v1682
      %v1699 = vadd.f32 %v1651, %v1683
      %v1700 = vmul.f32 %v1684, 10.0
      %v1701 = vmul.f32 %v1685, 10.0
      %v1702 = vmul.f32 %v1686, 10.0
      %v1703 = vmul.f32 %v1687, 10.0
      %v1704 = vmul.f32 %v1688, 10.0
      %v1705 = vmul.f32 %v1689, 10.0
      %v1706 = vmul.f32 %v1690, 10.0
      %v1707 = vmul.f32 %v1691, 10.0
      %v1708 = vmul.f32 %v1692, 10.0
      %v1709 = vmul.f32 %v1693, 10.0
      %v1710 = vmul.f32 %v1694, 10.0
      %v1711 = vmul.f32 %v1695, 10.0
      %v1712 = vmul.f32 %v1696, 10.0
      %v1713 = vmul.f32 %v1697, 10.0
      %v1714 = vmul.f32 %v1698, 10.0
      %v1715 = vmul.f32 %v1699, 10.0
      %v1716 = vand.u32 2147483647, %v1700
      %vm1717 = vcmp.le.f32.partialorder %v1716, 0.7853982
      %vm1718 = vcmp.lt.s32.totalorder %v1700, 0
      %v1719 = vand.u32 %v1700, 2139095040
      %v1720 = vshrl.u32 %v1719, 23
      %v1721 = vsub.s32 %v1720, 127
      %v1722 = vand.u32 2147483647, %v1700
      %v1723 = vand.u32 %v1722, 8388607
      %v1724 = vor.u32 %v1723, 8388608
      %v1725 = vsub.s32 0, %v1724
      %v1726 = vadd.s32 %v1721, 1
      %vm1727 = vcmp.gt.s32.totalorder %v1726, 0
      %v1728 = vsel %vm1727, %v1726, 0
      %v1729 = vshrl.u32 %v1728, 5
      %v1730 = vand.u32 %v1728, 31
      %v1731 = vsub.s32 32, %v1730
      %v1732 = vshrl.u32 683565275, %v1731
      %v1733 = vshll.u32 683565275, %v1730
      %v1734 = vshrl.u32 2475754826, %v1731
      %v1735 = vor.u32 %v1733, %v1734
      %v1736 = vshll.u32 2475754826, %v1730
      %v1737 = vshrl.u32 2131351028, %v1731
      %v1738 = vor.u32 %v1736, %v1737
      %v1739 = vshll.u32 2131351028, %v1730
      %v1740 = vshrl.u32 2102212464, %v1731
      %v1741 = vor.u32 %v1739, %v1740
      %v1742 = vshll.u32 2102212464, %v1730
      %v1743 = vshrl.u32 920167782, %v1731
      %v1744 = vor.u32 %v1742, %v1743
      %v1745 = vshll.u32 920167782, %v1730
      %v1746 = vshrl.u32 1326507024, %v1731
      %v1747 = vor.u32 %v1745, %v1746
      %vm1748 = vcmp.lt.s32.totalorder %v1729, 1
      %vm1749 = vcmp.lt.s32.totalorder %v1729, 2
      %vm1750 = vcmp.lt.s32.totalorder %v1729, 3
      %vm1751 = vcmp.lt.s32.totalorder %v1729, 4
      %v1752 = vsel %vm1748, %v1732, %v1735
      %v1753 = vsel %vm1751, %v1741, 2102212464
      %v1754 = vsel %vm1750, %v1738, %v1753
      %v1755 = vsel %vm1749, %v1752, %v1754
      %v1756 = vsel %vm1748, %v1735, %v1738
      %v1757 = vsel %vm1751, %v1744, 920167782
      %v1758 = vsel %vm1750, %v1741, %v1757
      %v1759 = vsel %vm1749, %v1756, %v1758
      %v1760 = vsel %vm1748, %v1738, %v1741
      %v1761 = vsel %vm1751, %v1747, 1326507024
      %v1762 = vsel %vm1750, %v1744, %v1761
      %v1763 = vsel %vm1749, %v1760, %v1762
      %v1764 = vshll.u32 %v1724, 8
      %v1765 = vand.u32 %v1764, 65535
      %v1766 = vshrl.u32 %v1764, 16
      %v1767 = vand.u32 %v1763, 65535
      %v1768 = vshrl.u32 %v1763, 16
      %v1769 = vmul.u32 %v1765, %v1767
      %v1770 = vmul.u32 %v1765, %v1768
      %v1771 = vmul.u32 %v1766, %v1767
      %v1772 = vmul.u32 %v1766, %v1768
      %v1773 = vshll.u32 %v1770, 16
      %v1774 = vshrl.u32 %v1770, 16
      %v1775 = vshll.u32 %v1771, 16
      %v1776 = vshrl.u32 %v1771, 16
      %vm1777 = vc.u32 %v1769, %v1773
      %v1778 = vsel %vm1777, 1, 0
      %v1779 = vadd.s32 %v1769, %v1773
      %v1780 = vadd.s32 %v1772, %v1778
      %vm1781 = vc.u32 %v1779, %v1775
      %v1782 = vsel %vm1781, 1, 0
      %v1783 = vadd.s32 %v1779, %v1775
      %v1784 = vadd.s32 %v1780, %v1782
      %v1785 = vadd.s32 %v1784, %v1774
      %v1786 = vadd.s32 %v1785, %v1776
      %v1787 = vand.u32 %v1764, 65535
      %v1788 = vshrl.u32 %v1764, 16
      %v1789 = vand.u32 %v1759, 65535
      %v1790 = vshrl.u32 %v1759, 16
      %v1791 = vmul.u32 %v1787, %v1789
      %v1792 = vmul.u32 %v1787, %v1790
      %v1793 = vmul.u32 %v1788, %v1789
      %v1794 = vmul.u32 %v1788, %v1790
      %v1795 = vshll.u32 %v1792, 16
      %v1796 = vshrl.u32 %v1792, 16
      %v1797 = vshll.u32 %v1793, 16
      %v1798 = vshrl.u32 %v1793, 16
      %vm1799 = vc.u32 %v1791, %v1795
      %v1800 = vsel %vm1799, 1, 0
      %v1801 = vadd.s32 %v1791, %v1795
      %v1802 = vadd.s32 %v1794, %v1800
      %vm1803 = vc.u32 %v1801, %v1797
      %v1804 = vsel %vm1803, 1, 0
      %v1805 = vadd.s32 %v1801, %v1797
      %v1806 = vadd.s32 %v1802, %v1804
      %v1807 = vadd.s32 %v1806, %v1796
      %v1808 = vadd.s32 %v1807, %v1798
      %v1809 = vmul.u32 %v1764, %v1755
      %v1810 = vadd.s32 %v1786, %v1805
      %vm1811 = vc.u32 %v1786, %v1805
      %v1812 = vadd.s32 %v1808, 1
      %v1813 = vsel %vm1811, %v1812, %v1808
      %v1814 = vadd.s32 %v1809, %v1813
      %v1815 = vadd.s32 %v1814, 536870912
      %v1816 = vshrl.u32 %v1815, 30
      %v1817 = vshll.u32 %v1816, 30
      %v1818 = vsub.s32 %v1814, %v1817
      %vm1819 = vcmp.lt.s32.totalorder %v1818, 0
      %v1820 = vsub.s32 0, %v1818
      %v1821 = vsel %vm1819, %v1820, %v1818
      %v1822 = vclz %v1821
      %v1823 = vsub.s32 %v1822, 2
      %vm1824 = vcmp.gt.s32.totalorder 0, %v1823
      %v1825 = vsel %vm1824, 0, %v1823
      %v1826 = vsub.s32 32, %v1825
      %v1827 = vshll.u32 %v1818, %v1825
      %v1828 = vshrl.u32 %v1810, %v1826
      %v1829 = vor.u32 %v1827, %v1828
      %v1830 = vsub.s32 4294967266, %v1825
      %v1831 = vadd.s32 %v1830, 127
      %v1832 = vshll.u32 %v1831, 23
      %v1833 = vor.u32 4788187, %v1832
      %v1834 = vand.u32 2147483647, %v1833
      %v1836 = vcvt.s32.f32 %v1829
      %v1837 = vmul.f32 %v1836, %v1834
      %v1838 = vxor.u32 %v1837, 2147483648
      %v1839 = vsel %vm1718, %v1838, %v1837
      %v1840 = vsub.s32 4, %v1816
      %v1841 = vsel %vm1718, %v1840, %v1816
      %v1842 = vsel %vm1717, %v1700, %v1839
      %v1843 = vsel %vm1717, 0, %v1841
      %v1844 = vmul.f32 %v1842, %v1842
      %v1845 = vmul.f32 %v1844, -0.001358992
      %v1846 = vadd.f32 %v1845, 0.041655596
      %v1847 = vmul.f32 %v1844, %v1846
      %v1848 = vadd.f32 %v1847, -0.4999988
      %v1849 = vmul.f32 %v1844, %v1848
      %v1850 = vadd.f32 1.0, %v1849
      %v1851 = vmul.f32 %v1842, %v1842
      %v1852 = vmul.f32 %v1851, -0.00019511016
      %v1853 = vadd.f32 %v1852, 0.008332121
      %v1854 = vmul.f32 %v1851, %v1853
      %v1855 = vadd.f32 %v1854, -0.16666654
      %v1856 = vmul.f32 %v1851, %v1855
      %v1857 = vadd.f32 %v1856, 1.0
      %v1858 = vmul.f32 %v1857, %v1842
      %vm1859 = vweird.f32 %v1700
      %v1860 = vadd.s32 %v1843, 3
      %v1861 = vand.u32 %v1860, 3
      %vm1862 = vcmp.lt.s32.totalorder %v1861, 2
      %vm1863 = vcmp.eq.s32.totalorder %v1861, 0
      %v1864 = vxor.u32 %v1858, 2147483648
      %v1865 = vsel %vm1863, %v1850, %v1864
      %vm1866 = vcmp.eq.s32.totalorder %v1861, 2
      %v1867 = vxor.u32 %v1850, 2147483648
      %v1868 = vsel %vm1866, %v1867, %v1858
      %v1869 = vsel %vm1862, %v1865, %v1868
      %v1870 = vsel %vm1859, nan, %v1869
      %v1871 = vand.u32 2147483647, %v1701
      %vm1872 = vcmp.le.f32.partialorder %v1871, 0.7853982
      %vm1873 = vcmp.lt.s32.totalorder %v1701, 0
      %v1874 = vand.u32 %v1701, 2139095040
      %v1875 = vshrl.u32 %v1874, 23
      %v1876 = vsub.s32 %v1875, 127
      %v1877 = vand.u32 2147483647, %v1701
      %v1878 = vand.u32 %v1877, 8388607
      %v1879 = vor.u32 %v1878, 8388608
      %v1880 = vsub.s32 0, %v1879
      %v1881 = vadd.s32 %v1876, 1
      %vm1882 = vcmp.gt.s32.totalorder %v1881, 0
      %v1883 = vsel %vm1882, %v1881, 0
      %v1884 = vshrl.u32 %v1883, 5
      %v1885 = vand.u32 %v1883, 31
      %v1886 = vsub.s32 32, %v1885
      %v1887 = vshrl.u32 683565275, %v1886
      %v1888 = vshll.u32 683565275, %v1885
      %v1889 = vshrl.u32 2475754826, %v1886
      %v1890 = vor.u32 %v1888, %v1889
      %v1891 = vshll.u32 2475754826, %v1885
      %v1892 = vshrl.u32 2131351028, %v1886
      %v1893 = vor.u32 %v1891, %v1892
      %v1894 = vshll.u32 2131351028, %v1885
      %v1895 = vshrl.u32 2102212464, %v1886
      %v1896 = vor.u32 %v1894, %v1895
      %v1897 = vshll.u32 2102212464, %v1885
      %v1898 = vshrl.u32 920167782, %v1886
      %v1899 = vor.u32 %v1897, %v1898
      %v1900 = vshll.u32 920167782, %v1885
      %v1901 = vshrl.u32 1326507024, %v1886
      %v1902 = vor.u32 %v1900, %v1901
      %vm1903 = vcmp.lt.s32.totalorder %v1884, 1
      %vm1904 = vcmp.lt.s32.totalorder %v1884, 2
      %vm1905 = vcmp.lt.s32.totalorder %v1884, 3
      %vm1906 = vcmp.lt.s32.totalorder %v1884, 4
      %v1907 = vsel %vm1903, %v1887, %v1890
      %v1908 = vsel %vm1906, %v1896, 2102212464
      %v1909 = vsel %vm1905, %v1893, %v1908
      %v1910 = vsel %vm1904, %v1907, %v1909
      %v1911 = vsel %vm1903, %v1890, %v1893
      %v1912 = vsel %vm1906, %v1899, 920167782
      %v1913 = vsel %vm1905, %v1896, %v1912
      %v1914 = vsel %vm1904, %v1911, %v1913
      %v1915 = vsel %vm1903, %v1893, %v1896
      %v1916 = vsel %vm1906, %v1902, 1326507024
      %v1917 = vsel %vm1905, %v1899, %v1916
      %v1918 = vsel %vm1904, %v1915, %v1917
      %v1919 = vshll.u32 %v1879, 8
      %v1920 = vand.u32 %v1919, 65535
      %v1921 = vshrl.u32 %v1919, 16
      %v1922 = vand.u32 %v1918, 65535
      %v1923 = vshrl.u32 %v1918, 16
      %v1924 = vmul.u32 %v1920, %v1922
      %v1925 = vmul.u32 %v1920, %v1923
      %v1926 = vmul.u32 %v1921, %v1922
      %v1927 = vmul.u32 %v1921, %v1923
      %v1928 = vshll.u32 %v1925, 16
      %v1929 = vshrl.u32 %v1925, 16
      %v1930 = vshll.u32 %v1926, 16
      %v1931 = vshrl.u32 %v1926, 16
      %vm1932 = vc.u32 %v1924, %v1928
      %v1933 = vsel %vm1932, 1, 0
      %v1934 = vadd.s32 %v1924, %v1928
      %v1935 = vadd.s32 %v1927, %v1933
      %vm1936 = vc.u32 %v1934, %v1930
      %v1937 = vsel %vm1936, 1, 0
      %v1938 = vadd.s32 %v1934, %v1930
      %v1939 = vadd.s32 %v1935, %v1937
      %v1940 = vadd.s32 %v1939, %v1929
      %v1941 = vadd.s32 %v1940, %v1931
      %v1942 = vand.u32 %v1919, 65535
      %v1943 = vshrl.u32 %v1919, 16
      %v1944 = vand.u32 %v1914, 65535
      %v1945 = vshrl.u32 %v1914, 16
      %v1946 = vmul.u32 %v1942, %v1944
      %v1947 = vmul.u32 %v1942, %v1945
      %v1948 = vmul.u32 %v1943, %v1944
      %v1949 = vmul.u32 %v1943, %v1945
      %v1950 = vshll.u32 %v1947, 16
      %v1951 = vshrl.u32 %v1947, 16
      %v1952 = vshll.u32 %v1948, 16
      %v1953 = vshrl.u32 %v1948, 16
      %vm1954 = vc.u32 %v1946, %v1950
      %v1955 = vsel %vm1954, 1, 0
      %v1956 = vadd.s32 %v1946, %v1950
      %v1957 = vadd.s32 %v1949, %v1955
      %vm1958 = vc.u32 %v1956, %v1952
      %v1959 = vsel %vm1958, 1, 0
      %v1960 = vadd.s32 %v1956, %v1952
      %v1961 = vadd.s32 %v1957, %v1959
      %v1962 = vadd.s32 %v1961, %v1951
      %v1963 = vadd.s32 %v1962, %v1953
      %v1964 = vmul.u32 %v1919, %v1910
      %v1965 = vadd.s32 %v1941, %v1960
      %vm1966 = vc.u32 %v1941, %v1960
      %v1967 = vadd.s32 %v1963, 1
      %v1968 = vsel %vm1966, %v1967, %v1963
      %v1969 = vadd.s32 %v1964, %v1968
      %v1970 = vadd.s32 %v1969, 536870912
      %v1971 = vshrl.u32 %v1970, 30
      %v1972 = vshll.u32 %v1971, 30
      %v1973 = vsub.s32 %v1969, %v1972
      %vm1974 = vcmp.lt.s32.totalorder %v1973, 0
      %v1975 = vsub.s32 0, %v1973
      %v1976 = vsel %vm1974, %v1975, %v1973
      %v1977 = vclz %v1976
      %v1978 = vsub.s32 %v1977, 2
      %vm1979 = vcmp.gt.s32.totalorder 0, %v1978
      %v1980 = vsel %vm1979, 0, %v1978
      %v1981 = vsub.s32 32, %v1980
      %v1982 = vshll.u32 %v1973, %v1980
      %v1983 = vshrl.u32 %v1965, %v1981
      %v1984 = vor.u32 %v1982, %v1983
      %v1985 = vsub.s32 4294967266, %v1980
      %v1986 = vadd.s32 %v1985, 127
      %v1987 = vshll.u32 %v1986, 23
      %v1988 = vor.u32 4788187, %v1987
      %v1989 = vand.u32 2147483647, %v1988
      %v1991 = vcvt.s32.f32 %v1984
      %v1992 = vmul.f32 %v1991, %v1989
      %v1993 = vxor.u32 %v1992, 2147483648
      %v1994 = vsel %vm1873, %v1993, %v1992
      %v1995 = vsub.s32 4, %v1971
      %v1996 = vsel %vm1873, %v1995, %v1971
      %v1997 = vsel %vm1872, %v1701, %v1994
      %v1998 = vsel %vm1872, 0, %v1996
      %v1999 = vmul.f32 %v1997, %v1997
      %v2000 = vmul.f32 %v1999, -0.001358992
      %v2001 = vadd.f32 %v2000, 0.041655596
      %v2002 = vmul.f32 %v1999, %v2001
      %v2003 = vadd.f32 %v2002, -0.4999988
      %v2004 = vmul.f32 %v1999, %v2003
      %v2005 = vadd.f32 1.0, %v2004
      %v2006 = vmul.f32 %v1997, %v1997
      %v2007 = vmul.f32 %v2006, -0.00019511016
      %v2008 = vadd.f32 %v2007, 0.008332121
      %v2009 = vmul.f32 %v2006, %v2008
      %v2010 = vadd.f32 %v2009, -0.16666654
      %v2011 = vmul.f32 %v2006, %v2010
      %v2012 = vadd.f32 %v2011, 1.0
      %v2013 = vmul.f32 %v2012, %v1997
      %vm2014 = vweird.f32 %v1701
      %v2015 = vadd.s32 %v1998, 3
      %v2016 = vand.u32 %v2015, 3
      %vm2017 = vcmp.lt.s32.totalorder %v2016, 2
      %vm2018 = vcmp.eq.s32.totalorder %v2016, 0
      %v2019 = vxor.u32 %v2013, 2147483648
      %v2020 = vsel %vm2018, %v2005, %v2019
      %vm2021 = vcmp.eq.s32.totalorder %v2016, 2
      %v2022 = vxor.u32 %v2005, 2147483648
      %v2023 = vsel %vm2021, %v2022, %v2013
      %v2024 = vsel %vm2017, %v2020, %v2023
      %v2025 = vsel %vm2014, nan, %v2024
      %v2026 = vand.u32 2147483647, %v1702
      %vm2027 = vcmp.le.f32.partialorder %v2026, 0.7853982
      %vm2028 = vcmp.lt.s32.totalorder %v1702, 0
      %v2029 = vand.u32 %v1702, 2139095040
      %v2030 = vshrl.u32 %v2029, 23
      %v2031 = vsub.s32 %v2030, 127
      %v2032 = vand.u32 2147483647, %v1702
      %v2033 = vand.u32 %v2032, 8388607
      %v2034 = vor.u32 %v2033, 8388608
      %v2035 = vsub.s32 0, %v2034
      %v2036 = vadd.s32 %v2031, 1
      %vm2037 = vcmp.gt.s32.totalorder %v2036, 0
      %v2038 = vsel %vm2037, %v2036, 0
      %v2039 = vshrl.u32 %v2038, 5
      %v2040 = vand.u32 %v2038, 31
      %v2041 = vsub.s32 32, %v2040
      %v2042 = vshrl.u32 683565275, %v2041
      %v2043 = vshll.u32 683565275, %v2040
      %v2044 = vshrl.u32 2475754826, %v2041
      %v2045 = vor.u32 %v2043, %v2044
      %v2046 = vshll.u32 2475754826, %v2040
      %v2047 = vshrl.u32 2131351028, %v2041
      %v2048 = vor.u32 %v2046, %v2047
      %v2049 = vshll.u32 2131351028, %v2040
      %v2050 = vshrl.u32 2102212464, %v2041
      %v2051 = vor.u32 %v2049, %v2050
      %v2052 = vshll.u32 2102212464, %v2040
      %v2053 = vshrl.u32 920167782, %v2041
      %v2054 = vor.u32 %v2052, %v2053
      %v2055 = vshll.u32 920167782, %v2040
      %v2056 = vshrl.u32 1326507024, %v2041
      %v2057 = vor.u32 %v2055, %v2056
      %vm2058 = vcmp.lt.s32.totalorder %v2039, 1
      %vm2059 = vcmp.lt.s32.totalorder %v2039, 2
      %vm2060 = vcmp.lt.s32.totalorder %v2039, 3
      %vm2061 = vcmp.lt.s32.totalorder %v2039, 4
      %v2062 = vsel %vm2058, %v2042, %v2045
      %v2063 = vsel %vm2061, %v2051, 2102212464
      %v2064 = vsel %vm2060, %v2048, %v2063
      %v2065 = vsel %vm2059, %v2062, %v2064
      %v2066 = vsel %vm2058, %v2045, %v2048
      %v2067 = vsel %vm2061, %v2054, 920167782
      %v2068 = vsel %vm2060, %v2051, %v2067
      %v2069 = vsel %vm2059, %v2066, %v2068
      %v2070 = vsel %vm2058, %v2048, %v2051
      %v2071 = vsel %vm2061, %v2057, 1326507024
      %v2072 = vsel %vm2060, %v2054, %v2071
      %v2073 = vsel %vm2059, %v2070, %v2072
      %v2074 = vshll.u32 %v2034, 8
      %v2075 = vand.u32 %v2074, 65535
      %v2076 = vshrl.u32 %v2074, 16
      %v2077 = vand.u32 %v2073, 65535
      %v2078 = vshrl.u32 %v2073, 16
      %v2079 = vmul.u32 %v2075, %v2077
      %v2080 = vmul.u32 %v2075, %v2078
      %v2081 = vmul.u32 %v2076, %v2077
      %v2082 = vmul.u32 %v2076, %v2078
      %v2083 = vshll.u32 %v2080, 16
      %v2084 = vshrl.u32 %v2080, 16
      %v2085 = vshll.u32 %v2081, 16
      %v2086 = vshrl.u32 %v2081, 16
      %vm2087 = vc.u32 %v2079, %v2083
      %v2088 = vsel %vm2087, 1, 0
      %v2089 = vadd.s32 %v2079, %v2083
      %v2090 = vadd.s32 %v2082, %v2088
      %vm2091 = vc.u32 %v2089, %v2085
      %v2092 = vsel %vm2091, 1, 0
      %v2093 = vadd.s32 %v2089, %v2085
      %v2094 = vadd.s32 %v2090, %v2092
      %v2095 = vadd.s32 %v2094, %v2084
      %v2096 = vadd.s32 %v2095, %v2086
      %v2097 = vand.u32 %v2074, 65535
      %v2098 = vshrl.u32 %v2074, 16
      %v2099 = vand.u32 %v2069, 65535
      %v2100 = vshrl.u32 %v2069, 16
      %v2101 = vmul.u32 %v2097, %v2099
      %v2102 = vmul.u32 %v2097, %v2100
      %v2103 = vmul.u32 %v2098, %v2099
      %v2104 = vmul.u32 %v2098, %v2100
      %v2105 = vshll.u32 %v2102, 16
      %v2106 = vshrl.u32 %v2102, 16
      %v2107 = vshll.u32 %v2103, 16
      %v2108 = vshrl.u32 %v2103, 16
      %vm2109 = vc.u32 %v2101, %v2105
      %v2110 = vsel %vm2109, 1, 0
      %v2111 = vadd.s32 %v2101, %v2105
      %v2112 = vadd.s32 %v2104, %v2110
      %vm2113 = vc.u32 %v2111, %v2107
      %v2114 = vsel %vm2113, 1, 0
      %v2115 = vadd.s32 %v2111, %v2107
      %v2116 = vadd.s32 %v2112, %v2114
      %v2117 = vadd.s32 %v2116, %v2106
      %v2118 = vadd.s32 %v2117, %v2108
      %v2119 = vmul.u32 %v2074, %v2065
      %v2120 = vadd.s32 %v2096, %v2115
      %vm2121 = vc.u32 %v2096, %v2115
      %v2122 = vadd.s32 %v2118, 1
      %v2123 = vsel %vm2121, %v2122, %v2118
      %v2124 = vadd.s32 %v2119, %v2123
      %v2125 = vadd.s32 %v2124, 536870912
      %v2126 = vshrl.u32 %v2125, 30
      %v2127 = vshll.u32 %v2126, 30
      %v2128 = vsub.s32 %v2124, %v2127
      %vm2129 = vcmp.lt.s32.totalorder %v2128, 0
      %v2130 = vsub.s32 0, %v2128
      %v2131 = vsel %vm2129, %v2130, %v2128
      %v2132 = vclz %v2131
      %v2133 = vsub.s32 %v2132, 2
      %vm2134 = vcmp.gt.s32.totalorder 0, %v2133
      %v2135 = vsel %vm2134, 0, %v2133
      %v2136 = vsub.s32 32, %v2135
      %v2137 = vshll.u32 %v2128, %v2135
      %v2138 = vshrl.u32 %v2120, %v2136
      %v2139 = vor.u32 %v2137, %v2138
      %v2140 = vsub.s32 4294967266, %v2135
      %v2141 = vadd.s32 %v2140, 127
      %v2142 = vshll.u32 %v2141, 23
      %v2143 = vor.u32 4788187, %v2142
      %v2144 = vand.u32 2147483647, %v2143
      %v2146 = vcvt.s32.f32 %v2139
      %v2147 = vmul.f32 %v2146, %v2144
      %v2148 = vxor.u32 %v2147, 2147483648
      %v2149 = vsel %vm2028, %v2148, %v2147
      %v2150 = vsub.s32 4, %v2126
      %v2151 = vsel %vm2028, %v2150, %v2126
      %v2152 = vsel %vm2027, %v1702, %v2149
      %v2153 = vsel %vm2027, 0, %v2151
      %v2154 = vmul.f32 %v2152, %v2152
      %v2155 = vmul.f32 %v2154, -0.001358992
      %v2156 = vadd.f32 %v2155, 0.041655596
      %v2157 = vmul.f32 %v2154, %v2156
      %v2158 = vadd.f32 %v2157, -0.4999988
      %v2159 = vmul.f32 %v2154, %v2158
      %v2160 = vadd.f32 1.0, %v2159
      %v2161 = vmul.f32 %v2152, %v2152
      %v2162 = vmul.f32 %v2161, -0.00019511016
      %v2163 = vadd.f32 %v2162, 0.008332121
      %v2164 = vmul.f32 %v2161, %v2163
      %v2165 = vadd.f32 %v2164, -0.16666654
      %v2166 = vmul.f32 %v2161, %v2165
      %v2167 = vadd.f32 %v2166, 1.0
      %v2168 = vmul.f32 %v2167, %v2152
      %vm2169 = vweird.f32 %v1702
      %v2170 = vadd.s32 %v2153, 3
      %v2171 = vand.u32 %v2170, 3
      %vm2172 = vcmp.lt.s32.totalorder %v2171, 2
      %vm2173 = vcmp.eq.s32.totalorder %v2171, 0
      %v2174 = vxor.u32 %v2168, 2147483648
      %v2175 = vsel %vm2173, %v2160, %v2174
      %vm2176 = vcmp.eq.s32.totalorder %v2171, 2
      %v2177 = vxor.u32 %v2160, 2147483648
      %v2178 = vsel %vm2176, %v2177, %v2168
      %v2179 = vsel %vm2172, %v2175, %v2178
      %v2180 = vsel %vm2169, nan, %v2179
      %v2181 = vand.u32 2147483647, %v1703
      %vm2182 = vcmp.le.f32.partialorder %v2181, 0.7853982
      %vm2183 = vcmp.lt.s32.totalorder %v1703, 0
      %v2184 = vand.u32 %v1703, 2139095040
      %v2185 = vshrl.u32 %v2184, 23
      %v2186 = vsub.s32 %v2185, 127
      %v2187 = vand.u32 2147483647, %v1703
      %v2188 = vand.u32 %v2187, 8388607
      %v2189 = vor.u32 %v2188, 8388608
      %v2190 = vsub.s32 0, %v2189
      %v2191 = vadd.s32 %v2186, 1
      %vm2192 = vcmp.gt.s32.totalorder %v2191, 0
      %v2193 = vsel %vm2192, %v2191, 0
      %v2194 = vshrl.u32 %v2193, 5
      %v2195 = vand.u32 %v2193, 31
      %v2196 = vsub.s32 32, %v2195
      %v2197 = vshrl.u32 683565275, %v2196
      %v2198 = vshll.u32 683565275, %v2195
      %v2199 = vshrl.u32 2475754826, %v2196
      %v2200 = vor.u32 %v2198, %v2199
      %v2201 = vshll.u32 2475754826, %v2195
      %v2202 = vshrl.u32 2131351028, %v2196
      %v2203 = vor.u32 %v2201, %v2202
      %v2204 = vshll.u32 2131351028, %v2195
      %v2205 = vshrl.u32 2102212464, %v2196
      %v2206 = vor.u32 %v2204, %v2205
      %v2207 = vshll.u32 2102212464, %v2195
      %v2208 = vshrl.u32 920167782, %v2196
      %v2209 = vor.u32 %v2207, %v2208
      %v2210 = vshll.u32 920167782, %v2195
      %v2211 = vshrl.u32 1326507024, %v2196
      %v2212 = vor.u32 %v2210, %v2211
      %vm2213 = vcmp.lt.s32.totalorder %v2194, 1
      %vm2214 = vcmp.lt.s32.totalorder %v2194, 2
      %vm2215 = vcmp.lt.s32.totalorder %v2194, 3
      %vm2216 = vcmp.lt.s32.totalorder %v2194, 4
      %v2217 = vsel %vm2213, %v2197, %v2200
      %v2218 = vsel %vm2216, %v2206, 2102212464
      %v2219 = vsel %vm2215, %v2203, %v2218
      %v2220 = vsel %vm2214, %v2217, %v2219
      %v2221 = vsel %vm2213, %v2200, %v2203
      %v2222 = vsel %vm2216, %v2209, 920167782
      %v2223 = vsel %vm2215, %v2206, %v2222
      %v2224 = vsel %vm2214, %v2221, %v2223
      %v2225 = vsel %vm2213, %v2203, %v2206
      %v2226 = vsel %vm2216, %v2212, 1326507024
      %v2227 = vsel %vm2215, %v2209, %v2226
      %v2228 = vsel %vm2214, %v2225, %v2227
      %v2229 = vshll.u32 %v2189, 8
      %v2230 = vand.u32 %v2229, 65535
      %v2231 = vshrl.u32 %v2229, 16
      %v2232 = vand.u32 %v2228, 65535
      %v2233 = vshrl.u32 %v2228, 16
      %v2234 = vmul.u32 %v2230, %v2232
      %v2235 = vmul.u32 %v2230, %v2233
      %v2236 = vmul.u32 %v2231, %v2232
      %v2237 = vmul.u32 %v2231, %v2233
      %v2238 = vshll.u32 %v2235, 16
      %v2239 = vshrl.u32 %v2235, 16
      %v2240 = vshll.u32 %v2236, 16
      %v2241 = vshrl.u32 %v2236, 16
      %vm2242 = vc.u32 %v2234, %v2238
      %v2243 = vsel %vm2242, 1, 0
      %v2244 = vadd.s32 %v2234, %v2238
      %v2245 = vadd.s32 %v2237, %v2243
      %vm2246 = vc.u32 %v2244, %v2240
      %v2247 = vsel %vm2246, 1, 0
      %v2248 = vadd.s32 %v2244, %v2240
      %v2249 = vadd.s32 %v2245, %v2247
      %v2250 = vadd.s32 %v2249, %v2239
      %v2251 = vadd.s32 %v2250, %v2241
      %v2252 = vand.u32 %v2229, 65535
      %v2253 = vshrl.u32 %v2229, 16
      %v2254 = vand.u32 %v2224, 65535
      %v2255 = vshrl.u32 %v2224, 16
      %v2256 = vmul.u32 %v2252, %v2254
      %v2257 = vmul.u32 %v2252, %v2255
      %v2258 = vmul.u32 %v2253, %v2254
      %v2259 = vmul.u32 %v2253, %v2255
      %v2260 = vshll.u32 %v2257, 16
      %v2261 = vshrl.u32 %v2257, 16
      %v2262 = vshll.u32 %v2258, 16
      %v2263 = vshrl.u32 %v2258, 16
      %vm2264 = vc.u32 %v2256, %v2260
      %v2265 = vsel %vm2264, 1, 0
      %v2266 = vadd.s32 %v2256, %v2260
      %v2267 = vadd.s32 %v2259, %v2265
      %vm2268 = vc.u32 %v2266, %v2262
      %v2269 = vsel %vm2268, 1, 0
      %v2270 = vadd.s32 %v2266, %v2262
      %v2271 = vadd.s32 %v2267, %v2269
      %v2272 = vadd.s32 %v2271, %v2261
      %v2273 = vadd.s32 %v2272, %v2263
      %v2274 = vmul.u32 %v2229, %v2220
      %v2275 = vadd.s32 %v2251, %v2270
      %vm2276 = vc.u32 %v2251, %v2270
      %v2277 = vadd.s32 %v2273, 1
      %v2278 = vsel %vm2276, %v2277, %v2273
      %v2279 = vadd.s32 %v2274, %v2278
      %v2280 = vadd.s32 %v2279, 536870912
      %v2281 = vshrl.u32 %v2280, 30
      %v2282 = vshll.u32 %v2281, 30
      %v2283 = vsub.s32 %v2279, %v2282
      %vm2284 = vcmp.lt.s32.totalorder %v2283, 0
      %v2285 = vsub.s32 0, %v2283
      %v2286 = vsel %vm2284, %v2285, %v2283
      %v2287 = vclz %v2286
      %v2288 = vsub.s32 %v2287, 2
      %vm2289 = vcmp.gt.s32.totalorder 0, %v2288
      %v2290 = vsel %vm2289, 0, %v2288
      %v2291 = vsub.s32 32, %v2290
      %v2292 = vshll.u32 %v2283, %v2290
      %v2293 = vshrl.u32 %v2275, %v2291
      %v2294 = vor.u32 %v2292, %v2293
      %v2295 = vsub.s32 4294967266, %v2290
      %v2296 = vadd.s32 %v2295, 127
      %v2297 = vshll.u32 %v2296, 23
      %v2298 = vor.u32 4788187, %v2297
      %v2299 = vand.u32 2147483647, %v2298
      %v2301 = vcvt.s32.f32 %v2294
      %v2302 = vmul.f32 %v2301, %v2299
      %v2303 = vxor.u32 %v2302, 2147483648
      %v2304 = vsel %vm2183, %v2303, %v2302
      %v2305 = vsub.s32 4, %v2281
      %v2306 = vsel %vm2183, %v2305, %v2281
      %v2307 = vsel %vm2182, %v1703, %v2304
      %v2308 = vsel %vm2182, 0, %v2306
      %v2309 = vmul.f32 %v2307, %v2307
      %v2310 = vmul.f32 %v2309, -0.001358992
      %v2311 = vadd.f32 %v2310, 0.041655596
      %v2312 = vmul.f32 %v2309, %v2311
      %v2313 = vadd.f32 %v2312, -0.4999988
      %v2314 = vmul.f32 %v2309, %v2313
      %v2315 = vadd.f32 1.0, %v2314
      %v2316 = vmul.f32 %v2307, %v2307
      %v2317 = vmul.f32 %v2316, -0.00019511016
      %v2318 = vadd.f32 %v2317, 0.008332121
      %v2319 = vmul.f32 %v2316, %v2318
      %v2320 = vadd.f32 %v2319, -0.16666654
      %v2321 = vmul.f32 %v2316, %v2320
      %v2322 = vadd.f32 %v2321, 1.0
      %v2323 = vmul.f32 %v2322, %v2307
      %vm2324 = vweird.f32 %v1703
      %v2325 = vadd.s32 %v2308, 3
      %v2326 = vand.u32 %v2325, 3
      %vm2327 = vcmp.lt.s32.totalorder %v2326, 2
      %vm2328 = vcmp.eq.s32.totalorder %v2326, 0
      %v2329 = vxor.u32 %v2323, 2147483648
      %v2330 = vsel %vm2328, %v2315, %v2329
      %vm2331 = vcmp.eq.s32.totalorder %v2326, 2
      %v2332 = vxor.u32 %v2315, 2147483648
      %v2333 = vsel %vm2331, %v2332, %v2323
      %v2334 = vsel %vm2327, %v2330, %v2333
      %v2335 = vsel %vm2324, nan, %v2334
      %v2336 = vand.u32 2147483647, %v1704
      %vm2337 = vcmp.le.f32.partialorder %v2336, 0.7853982
      %vm2338 = vcmp.lt.s32.totalorder %v1704, 0
      %v2339 = vand.u32 %v1704, 2139095040
      %v2340 = vshrl.u32 %v2339, 23
      %v2341 = vsub.s32 %v2340, 127
      %v2342 = vand.u32 2147483647, %v1704
      %v2343 = vand.u32 %v2342, 8388607
      %v2344 = vor.u32 %v2343, 8388608
      %v2345 = vsub.s32 0, %v2344
      %v2346 = vadd.s32 %v2341, 1
      %vm2347 = vcmp.gt.s32.totalorder %v2346, 0
      %v2348 = vsel %vm2347, %v2346, 0
      %v2349 = vshrl.u32 %v2348, 5
      %v2350 = vand.u32 %v2348, 31
      %v2351 = vsub.s32 32, %v2350
      %v2352 = vshrl.u32 683565275, %v2351
      %v2353 = vshll.u32 683565275, %v2350
      %v2354 = vshrl.u32 2475754826, %v2351
      %v2355 = vor.u32 %v2353, %v2354
      %v2356 = vshll.u32 2475754826, %v2350
      %v2357 = vshrl.u32 2131351028, %v2351
      %v2358 = vor.u32 %v2356, %v2357
      %v2359 = vshll.u32 2131351028, %v2350
      %v2360 = vshrl.u32 2102212464, %v2351
      %v2361 = vor.u32 %v2359, %v2360
      %v2362 = vshll.u32 2102212464, %v2350
      %v2363 = vshrl.u32 920167782, %v2351
      %v2364 = vor.u32 %v2362, %v2363
      %v2365 = vshll.u32 920167782, %v2350
      %v2366 = vshrl.u32 1326507024, %v2351
      %v2367 = vor.u32 %v2365, %v2366
      %vm2368 = vcmp.lt.s32.totalorder %v2349, 1
      %vm2369 = vcmp.lt.s32.totalorder %v2349, 2
      %vm2370 = vcmp.lt.s32.totalorder %v2349, 3
      %vm2371 = vcmp.lt.s32.totalorder %v2349, 4
      %v2372 = vsel %vm2368, %v2352, %v2355
      %v2373 = vsel %vm2371, %v2361, 2102212464
      %v2374 = vsel %vm2370, %v2358, %v2373
      %v2375 = vsel %vm2369, %v2372, %v2374
      %v2376 = vsel %vm2368, %v2355, %v2358
      %v2377 = vsel %vm2371, %v2364, 920167782
      %v2378 = vsel %vm2370, %v2361, %v2377
      %v2379 = vsel %vm2369, %v2376, %v2378
      %v2380 = vsel %vm2368, %v2358, %v2361
      %v2381 = vsel %vm2371, %v2367, 1326507024
      %v2382 = vsel %vm2370, %v2364, %v2381
      %v2383 = vsel %vm2369, %v2380, %v2382
      %v2384 = vshll.u32 %v2344, 8
      %v2385 = vand.u32 %v2384, 65535
      %v2386 = vshrl.u32 %v2384, 16
      %v2387 = vand.u32 %v2383, 65535
      %v2388 = vshrl.u32 %v2383, 16
      %v2389 = vmul.u32 %v2385, %v2387
      %v2390 = vmul.u32 %v2385, %v2388
      %v2391 = vmul.u32 %v2386, %v2387
      %v2392 = vmul.u32 %v2386, %v2388
      %v2393 = vshll.u32 %v2390, 16
      %v2394 = vshrl.u32 %v2390, 16
      %v2395 = vshll.u32 %v2391, 16
      %v2396 = vshrl.u32 %v2391, 16
      %vm2397 = vc.u32 %v2389, %v2393
      %v2398 = vsel %vm2397, 1, 0
      %v2399 = vadd.s32 %v2389, %v2393
      %v2400 = vadd.s32 %v2392, %v2398
      %vm2401 = vc.u32 %v2399, %v2395
      %v2402 = vsel %vm2401, 1, 0
      %v2403 = vadd.s32 %v2399, %v2395
      %v2404 = vadd.s32 %v2400, %v2402
      %v2405 = vadd.s32 %v2404, %v2394
      %v2406 = vadd.s32 %v2405, %v2396
      %v2407 = vand.u32 %v2384, 65535
      %v2408 = vshrl.u32 %v2384, 16
      %v2409 = vand.u32 %v2379, 65535
      %v2410 = vshrl.u32 %v2379, 16
      %v2411 = vmul.u32 %v2407, %v2409
      %v2412 = vmul.u32 %v2407, %v2410
      %v2413 = vmul.u32 %v2408, %v2409
      %v2414 = vmul.u32 %v2408, %v2410
      %v2415 = vshll.u32 %v2412, 16
      %v2416 = vshrl.u32 %v2412, 16
      %v2417 = vshll.u32 %v2413, 16
      %v2418 = vshrl.u32 %v2413, 16
      %vm2419 = vc.u32 %v2411, %v2415
      %v2420 = vsel %vm2419, 1, 0
      %v2421 = vadd.s32 %v2411, %v2415
      %v2422 = vadd.s32 %v2414, %v2420
      %vm2423 = vc.u32 %v2421, %v2417
      %v2424 = vsel %vm2423, 1, 0
      %v2425 = vadd.s32 %v2421, %v2417
      %v2426 = vadd.s32 %v2422, %v2424
      %v2427 = vadd.s32 %v2426, %v2416
      %v2428 = vadd.s32 %v2427, %v2418
      %v2429 = vmul.u32 %v2384, %v2375
      %v2430 = vadd.s32 %v2406, %v2425
      %vm2431 = vc.u32 %v2406, %v2425
      %v2432 = vadd.s32 %v2428, 1
      %v2433 = vsel %vm2431, %v2432, %v2428
      %v2434 = vadd.s32 %v2429, %v2433
      %v2435 = vadd.s32 %v2434, 536870912
      %v2436 = vshrl.u32 %v2435, 30
      %v2437 = vshll.u32 %v2436, 30
      %v2438 = vsub.s32 %v2434, %v2437
      %vm2439 = vcmp.lt.s32.totalorder %v2438, 0
      %v2440 = vsub.s32 0, %v2438
      %v2441 = vsel %vm2439, %v2440, %v2438
      %v2442 = vclz %v2441
      %v2443 = vsub.s32 %v2442, 2
      %vm2444 = vcmp.gt.s32.totalorder 0, %v2443
      %v2445 = vsel %vm2444, 0, %v2443
      %v2446 = vsub.s32 32, %v2445
      %v2447 = vshll.u32 %v2438, %v2445
      %v2448 = vshrl.u32 %v2430, %v2446
      %v2449 = vor.u32 %v2447, %v2448
      %v2450 = vsub.s32 4294967266, %v2445
      %v2451 = vadd.s32 %v2450, 127
      %v2452 = vshll.u32 %v2451, 23
      %v2453 = vor.u32 4788187, %v2452
      %v2454 = vand.u32 2147483647, %v2453
      %v2456 = vcvt.s32.f32 %v2449
      %v2457 = vmul.f32 %v2456, %v2454
      %v2458 = vxor.u32 %v2457, 2147483648
      %v2459 = vsel %vm2338, %v2458, %v2457
      %v2460 = vsub.s32 4, %v2436
      %v2461 = vsel %vm2338, %v2460, %v2436
      %v2462 = vsel %vm2337, %v1704, %v2459
      %v2463 = vsel %vm2337, 0, %v2461
      %v2464 = vmul.f32 %v2462, %v2462
      %v2465 = vmul.f32 %v2464, -0.001358992
      %v2466 = vadd.f32 %v2465, 0.041655596
      %v2467 = vmul.f32 %v2464, %v2466
      %v2468 = vadd.f32 %v2467, -0.4999988
      %v2469 = vmul.f32 %v2464, %v2468
      %v2470 = vadd.f32 1.0, %v2469
      %v2471 = vmul.f32 %v2462, %v2462
      %v2472 = vmul.f32 %v2471, -0.00019511016
      %v2473 = vadd.f32 %v2472, 0.008332121
      %v2474 = vmul.f32 %v2471, %v2473
      %v2475 = vadd.f32 %v2474, -0.16666654
      %v2476 = vmul.f32 %v2471, %v2475
      %v2477 = vadd.f32 %v2476, 1.0
      %v2478 = vmul.f32 %v2477, %v2462
      %vm2479 = vweird.f32 %v1704
      %v2480 = vadd.s32 %v2463, 3
      %v2481 = vand.u32 %v2480, 3
      %vm2482 = vcmp.lt.s32.totalorder %v2481, 2
      %vm2483 = vcmp.eq.s32.totalorder %v2481, 0
      %v2484 = vxor.u32 %v2478, 2147483648
      %v2485 = vsel %vm2483, %v2470, %v2484
      %vm2486 = vcmp.eq.s32.totalorder %v2481, 2
      %v2487 = vxor.u32 %v2470, 2147483648
      %v2488 = vsel %vm2486, %v2487, %v2478
      %v2489 = vsel %vm2482, %v2485, %v2488
      %v2490 = vsel %vm2479, nan, %v2489
      %v2491 = vand.u32 2147483647, %v1705
      %vm2492 = vcmp.le.f32.partialorder %v2491, 0.7853982
      %vm2493 = vcmp.lt.s32.totalorder %v1705, 0
      %v2494 = vand.u32 %v1705, 2139095040
      %v2495 = vshrl.u32 %v2494, 23
      %v2496 = vsub.s32 %v2495, 127
      %v2497 = vand.u32 2147483647, %v1705
      %v2498 = vand.u32 %v2497, 8388607
      %v2499 = vor.u32 %v2498, 8388608
      %v2500 = vsub.s32 0, %v2499
      %v2501 = vadd.s32 %v2496, 1
      %vm2502 = vcmp.gt.s32.totalorder %v2501, 0
      %v2503 = vsel %vm2502, %v2501, 0
      %v2504 = vshrl.u32 %v2503, 5
      %v2505 = vand.u32 %v2503, 31
      %v2506 = vsub.s32 32, %v2505
      %v2507 = vshrl.u32 683565275, %v2506
      %v2508 = vshll.u32 683565275, %v2505
      %v2509 = vshrl.u32 2475754826, %v2506
      %v2510 = vor.u32 %v2508, %v2509
      %v2511 = vshll.u32 2475754826, %v2505
      %v2512 = vshrl.u32 2131351028, %v2506
      %v2513 = vor.u32 %v2511, %v2512
      %v2514 = vshll.u32 2131351028, %v2505
      %v2515 = vshrl.u32 2102212464, %v2506
      %v2516 = vor.u32 %v2514, %v2515
      %v2517 = vshll.u32 2102212464, %v2505
      %v2518 = vshrl.u32 920167782, %v2506
      %v2519 = vor.u32 %v2517, %v2518
      %v2520 = vshll.u32 920167782, %v2505
      %v2521 = vshrl.u32 1326507024, %v2506
      %v2522 = vor.u32 %v2520, %v2521
      %vm2523 = vcmp.lt.s32.totalorder %v2504, 1
      %vm2524 = vcmp.lt.s32.totalorder %v2504, 2
      %vm2525 = vcmp.lt.s32.totalorder %v2504, 3
      %vm2526 = vcmp.lt.s32.totalorder %v2504, 4
      %v2527 = vsel %vm2523, %v2507, %v2510
      %v2528 = vsel %vm2526, %v2516, 2102212464
      %v2529 = vsel %vm2525, %v2513, %v2528
      %v2530 = vsel %vm2524, %v2527, %v2529
      %v2531 = vsel %vm2523, %v2510, %v2513
      %v2532 = vsel %vm2526, %v2519, 920167782
      %v2533 = vsel %vm2525, %v2516, %v2532
      %v2534 = vsel %vm2524, %v2531, %v2533
      %v2535 = vsel %vm2523, %v2513, %v2516
      %v2536 = vsel %vm2526, %v2522, 1326507024
      %v2537 = vsel %vm2525, %v2519, %v2536
      %v2538 = vsel %vm2524, %v2535, %v2537
      %v2539 = vshll.u32 %v2499, 8
      %v2540 = vand.u32 %v2539, 65535
      %v2541 = vshrl.u32 %v2539, 16
      %v2542 = vand.u32 %v2538, 65535
      %v2543 = vshrl.u32 %v2538, 16
      %v2544 = vmul.u32 %v2540, %v2542
      %v2545 = vmul.u32 %v2540, %v2543
      %v2546 = vmul.u32 %v2541, %v2542
      %v2547 = vmul.u32 %v2541, %v2543
      %v2548 = vshll.u32 %v2545, 16
      %v2549 = vshrl.u32 %v2545, 16
      %v2550 = vshll.u32 %v2546, 16
      %v2551 = vshrl.u32 %v2546, 16
      %vm2552 = vc.u32 %v2544, %v2548
      %v2553 = vsel %vm2552, 1, 0
      %v2554 = vadd.s32 %v2544, %v2548
      %v2555 = vadd.s32 %v2547, %v2553
      %vm2556 = vc.u32 %v2554, %v2550
      %v2557 = vsel %vm2556, 1, 0
      %v2558 = vadd.s32 %v2554, %v2550
      %v2559 = vadd.s32 %v2555, %v2557
      %v2560 = vadd.s32 %v2559, %v2549
      %v2561 = vadd.s32 %v2560, %v2551
      %v2562 = vand.u32 %v2539, 65535
      %v2563 = vshrl.u32 %v2539, 16
      %v2564 = vand.u32 %v2534, 65535
      %v2565 = vshrl.u32 %v2534, 16
      %v2566 = vmul.u32 %v2562, %v2564
      %v2567 = vmul.u32 %v2562, %v2565
      %v2568 = vmul.u32 %v2563, %v2564
      %v2569 = vmul.u32 %v2563, %v2565
      %v2570 = vshll.u32 %v2567, 16
      %v2571 = vshrl.u32 %v2567, 16
      %v2572 = vshll.u32 %v2568, 16
      %v2573 = vshrl.u32 %v2568, 16
      %vm2574 = vc.u32 %v2566, %v2570
      %v2575 = vsel %vm2574, 1, 0
      %v2576 = vadd.s32 %v2566, %v2570
      %v2577 = vadd.s32 %v2569, %v2575
      %vm2578 = vc.u32 %v2576, %v2572
      %v2579 = vsel %vm2578, 1, 0
      %v2580 = vadd.s32 %v2576, %v2572
      %v2581 = vadd.s32 %v2577, %v2579
      %v2582 = vadd.s32 %v2581, %v2571
      %v2583 = vadd.s32 %v2582, %v2573
      %v2584 = vmul.u32 %v2539, %v2530
      %v2585 = vadd.s32 %v2561, %v2580
      %vm2586 = vc.u32 %v2561, %v2580
      %v2587 = vadd.s32 %v2583, 1
      %v2588 = vsel %vm2586, %v2587, %v2583
      %v2589 = vadd.s32 %v2584, %v2588
      %v2590 = vadd.s32 %v2589, 536870912
      %v2591 = vshrl.u32 %v2590, 30
      %v2592 = vshll.u32 %v2591, 30
      %v2593 = vsub.s32 %v2589, %v2592
      %vm2594 = vcmp.lt.s32.totalorder %v2593, 0
      %v2595 = vsub.s32 0, %v2593
      %v2596 = vsel %vm2594, %v2595, %v2593
      %v2597 = vclz %v2596
      %v2598 = vsub.s32 %v2597, 2
      %vm2599 = vcmp.gt.s32.totalorder 0, %v2598
      %v2600 = vsel %vm2599, 0, %v2598
      %v2601 = vsub.s32 32, %v2600
      %v2602 = vshll.u32 %v2593, %v2600
      %v2603 = vshrl.u32 %v2585, %v2601
      %v2604 = vor.u32 %v2602, %v2603
      %v2605 = vsub.s32 4294967266, %v2600
      %v2606 = vadd.s32 %v2605, 127
      %v2607 = vshll.u32 %v2606, 23
      %v2608 = vor.u32 4788187, %v2607
      %v2609 = vand.u32 2147483647, %v2608
      %v2611 = vcvt.s32.f32 %v2604
      %v2612 = vmul.f32 %v2611, %v2609
      %v2613 = vxor.u32 %v2612, 2147483648
      %v2614 = vsel %vm2493, %v2613, %v2612
      %v2615 = vsub.s32 4, %v2591
      %v2616 = vsel %vm2493, %v2615, %v2591
      %v2617 = vsel %vm2492, %v1705, %v2614
      %v2618 = vsel %vm2492, 0, %v2616
      %v2619 = vmul.f32 %v2617, %v2617
      %v2620 = vmul.f32 %v2619, -0.001358992
      %v2621 = vadd.f32 %v2620, 0.041655596
      %v2622 = vmul.f32 %v2619, %v2621
      %v2623 = vadd.f32 %v2622, -0.4999988
      %v2624 = vmul.f32 %v2619, %v2623
      %v2625 = vadd.f32 1.0, %v2624
      %v2626 = vmul.f32 %v2617, %v2617
      %v2627 = vmul.f32 %v2626, -0.00019511016
      %v2628 = vadd.f32 %v2627, 0.008332121
      %v2629 = vmul.f32 %v2626, %v2628
      %v2630 = vadd.f32 %v2629, -0.16666654
      %v2631 = vmul.f32 %v2626, %v2630
      %v2632 = vadd.f32 %v2631, 1.0
      %v2633 = vmul.f32 %v2632, %v2617
      %vm2634 = vweird.f32 %v1705
      %v2635 = vadd.s32 %v2618, 3
      %v2636 = vand.u32 %v2635, 3
      %vm2637 = vcmp.lt.s32.totalorder %v2636, 2
      %vm2638 = vcmp.eq.s32.totalorder %v2636, 0
      %v2639 = vxor.u32 %v2633, 2147483648
      %v2640 = vsel %vm2638, %v2625, %v2639
      %vm2641 = vcmp.eq.s32.totalorder %v2636, 2
      %v2642 = vxor.u32 %v2625, 2147483648
      %v2643 = vsel %vm2641, %v2642, %v2633
      %v2644 = vsel %vm2637, %v2640, %v2643
      %v2645 = vsel %vm2634, nan, %v2644
      %v2646 = vand.u32 2147483647, %v1706
      %vm2647 = vcmp.le.f32.partialorder %v2646, 0.7853982
      %vm2648 = vcmp.lt.s32.totalorder %v1706, 0
      %v2649 = vand.u32 %v1706, 2139095040
      %v2650 = vshrl.u32 %v2649, 23
      %v2651 = vsub.s32 %v2650, 127
      %v2652 = vand.u32 2147483647, %v1706
      %v2653 = vand.u32 %v2652, 8388607
      %v2654 = vor.u32 %v2653, 8388608
      %v2655 = vsub.s32 0, %v2654
      %v2656 = vadd.s32 %v2651, 1
      %vm2657 = vcmp.gt.s32.totalorder %v2656, 0
      %v2658 = vsel %vm2657, %v2656, 0
      %v2659 = vshrl.u32 %v2658, 5
      %v2660 = vand.u32 %v2658, 31
      %v2661 = vsub.s32 32, %v2660
      %v2662 = vshrl.u32 683565275, %v2661
      %v2663 = vshll.u32 683565275, %v2660
      %v2664 = vshrl.u32 2475754826, %v2661
      %v2665 = vor.u32 %v2663, %v2664
      %v2666 = vshll.u32 2475754826, %v2660
      %v2667 = vshrl.u32 2131351028, %v2661
      %v2668 = vor.u32 %v2666, %v2667
      %v2669 = vshll.u32 2131351028, %v2660
      %v2670 = vshrl.u32 2102212464, %v2661
      %v2671 = vor.u32 %v2669, %v2670
      %v2672 = vshll.u32 2102212464, %v2660
      %v2673 = vshrl.u32 920167782, %v2661
      %v2674 = vor.u32 %v2672, %v2673
      %v2675 = vshll.u32 920167782, %v2660
      %v2676 = vshrl.u32 1326507024, %v2661
      %v2677 = vor.u32 %v2675, %v2676
      %vm2678 = vcmp.lt.s32.totalorder %v2659, 1
      %vm2679 = vcmp.lt.s32.totalorder %v2659, 2
      %vm2680 = vcmp.lt.s32.totalorder %v2659, 3
      %vm2681 = vcmp.lt.s32.totalorder %v2659, 4
      %v2682 = vsel %vm2678, %v2662, %v2665
      %v2683 = vsel %vm2681, %v2671, 2102212464
      %v2684 = vsel %vm2680, %v2668, %v2683
      %v2685 = vsel %vm2679, %v2682, %v2684
      %v2686 = vsel %vm2678, %v2665, %v2668
      %v2687 = vsel %vm2681, %v2674, 920167782
      %v2688 = vsel %vm2680, %v2671, %v2687
      %v2689 = vsel %vm2679, %v2686, %v2688
      %v2690 = vsel %vm2678, %v2668, %v2671
      %v2691 = vsel %vm2681, %v2677, 1326507024
      %v2692 = vsel %vm2680, %v2674, %v2691
      %v2693 = vsel %vm2679, %v2690, %v2692
      %v2694 = vshll.u32 %v2654, 8
      %v2695 = vand.u32 %v2694, 65535
      %v2696 = vshrl.u32 %v2694, 16
      %v2697 = vand.u32 %v2693, 65535
      %v2698 = vshrl.u32 %v2693, 16
      %v2699 = vmul.u32 %v2695, %v2697
      %v2700 = vmul.u32 %v2695, %v2698
      %v2701 = vmul.u32 %v2696, %v2697
      %v2702 = vmul.u32 %v2696, %v2698
      %v2703 = vshll.u32 %v2700, 16
      %v2704 = vshrl.u32 %v2700, 16
      %v2705 = vshll.u32 %v2701, 16
      %v2706 = vshrl.u32 %v2701, 16
      %vm2707 = vc.u32 %v2699, %v2703
      %v2708 = vsel %vm2707, 1, 0
      %v2709 = vadd.s32 %v2699, %v2703
      %v2710 = vadd.s32 %v2702, %v2708
      %vm2711 = vc.u32 %v2709, %v2705
      %v2712 = vsel %vm2711, 1, 0
      %v2713 = vadd.s32 %v2709, %v2705
      %v2714 = vadd.s32 %v2710, %v2712
      %v2715 = vadd.s32 %v2714, %v2704
      %v2716 = vadd.s32 %v2715, %v2706
      %v2717 = vand.u32 %v2694, 65535
      %v2718 = vshrl.u32 %v2694, 16
      %v2719 = vand.u32 %v2689, 65535
      %v2720 = vshrl.u32 %v2689, 16
      %v2721 = vmul.u32 %v2717, %v2719
      %v2722 = vmul.u32 %v2717, %v2720
      %v2723 = vmul.u32 %v2718, %v2719
      %v2724 = vmul.u32 %v2718, %v2720
      %v2725 = vshll.u32 %v2722, 16
      %v2726 = vshrl.u32 %v2722, 16
      %v2727 = vshll.u32 %v2723, 16
      %v2728 = vshrl.u32 %v2723, 16
      %vm2729 = vc.u32 %v2721, %v2725
      %v2730 = vsel %vm2729, 1, 0
      %v2731 = vadd.s32 %v2721, %v2725
      %v2732 = vadd.s32 %v2724, %v2730
      %vm2733 = vc.u32 %v2731, %v2727
      %v2734 = vsel %vm2733, 1, 0
      %v2735 = vadd.s32 %v2731, %v2727
      %v2736 = vadd.s32 %v2732, %v2734
      %v2737 = vadd.s32 %v2736, %v2726
      %v2738 = vadd.s32 %v2737, %v2728
      %v2739 = vmul.u32 %v2694, %v2685
      %v2740 = vadd.s32 %v2716, %v2735
      %vm2741 = vc.u32 %v2716, %v2735
      %v2742 = vadd.s32 %v2738, 1
      %v2743 = vsel %vm2741, %v2742, %v2738
      %v2744 = vadd.s32 %v2739, %v2743
      %v2745 = vadd.s32 %v2744, 536870912
      %v2746 = vshrl.u32 %v2745, 30
      %v2747 = vshll.u32 %v2746, 30
      %v2748 = vsub.s32 %v2744, %v2747
      %vm2749 = vcmp.lt.s32.totalorder %v2748, 0
      %v2750 = vsub.s32 0, %v2748
      %v2751 = vsel %vm2749, %v2750, %v2748
      %v2752 = vclz %v2751
      %v2753 = vsub.s32 %v2752, 2
      %vm2754 = vcmp.gt.s32.totalorder 0, %v2753
      %v2755 = vsel %vm2754, 0, %v2753
      %v2756 = vsub.s32 32, %v2755
      %v2757 = vshll.u32 %v2748, %v2755
      %v2758 = vshrl.u32 %v2740, %v2756
      %v2759 = vor.u32 %v2757, %v2758
      %v2760 = vsub.s32 4294967266, %v2755
      %v2761 = vadd.s32 %v2760, 127
      %v2762 = vshll.u32 %v2761, 23
      %v2763 = vor.u32 4788187, %v2762
      %v2764 = vand.u32 2147483647, %v2763
      %v2766 = vcvt.s32.f32 %v2759
      %v2767 = vmul.f32 %v2766, %v2764
      %v2768 = vxor.u32 %v2767, 2147483648
      %v2769 = vsel %vm2648, %v2768, %v2767
      %v2770 = vsub.s32 4, %v2746
      %v2771 = vsel %vm2648, %v2770, %v2746
      %v2772 = vsel %vm2647, %v1706, %v2769
      %v2773 = vsel %vm2647, 0, %v2771
      %v2774 = vmul.f32 %v2772, %v2772
      %v2775 = vmul.f32 %v2774, -0.001358992
      %v2776 = vadd.f32 %v2775, 0.041655596
      %v2777 = vmul.f32 %v2774, %v2776
      %v2778 = vadd.f32 %v2777, -0.4999988
      %v2779 = vmul.f32 %v2774, %v2778
      %v2780 = vadd.f32 1.0, %v2779
      %v2781 = vmul.f32 %v2772, %v2772
      %v2782 = vmul.f32 %v2781, -0.00019511016
      %v2783 = vadd.f32 %v2782, 0.008332121
      %v2784 = vmul.f32 %v2781, %v2783
      %v2785 = vadd.f32 %v2784, -0.16666654
      %v2786 = vmul.f32 %v2781, %v2785
      %v2787 = vadd.f32 %v2786, 1.0
      %v2788 = vmul.f32 %v2787, %v2772
      %vm2789 = vweird.f32 %v1706
      %v2790 = vadd.s32 %v2773, 3
      %v2791 = vand.u32 %v2790, 3
      %vm2792 = vcmp.lt.s32.totalorder %v2791, 2
      %vm2793 = vcmp.eq.s32.totalorder %v2791, 0
      %v2794 = vxor.u32 %v2788, 2147483648
      %v2795 = vsel %vm2793, %v2780, %v2794
      %vm2796 = vcmp.eq.s32.totalorder %v2791, 2
      %v2797 = vxor.u32 %v2780, 2147483648
      %v2798 = vsel %vm2796, %v2797, %v2788
      %v2799 = vsel %vm2792, %v2795, %v2798
      %v2800 = vsel %vm2789, nan, %v2799
      %v2801 = vand.u32 2147483647, %v1707
      %vm2802 = vcmp.le.f32.partialorder %v2801, 0.7853982
      %vm2803 = vcmp.lt.s32.totalorder %v1707, 0
      %v2804 = vand.u32 %v1707, 2139095040
      %v2805 = vshrl.u32 %v2804, 23
      %v2806 = vsub.s32 %v2805, 127
      %v2807 = vand.u32 2147483647, %v1707
      %v2808 = vand.u32 %v2807, 8388607
      %v2809 = vor.u32 %v2808, 8388608
      %v2810 = vsub.s32 0, %v2809
      %v2811 = vadd.s32 %v2806, 1
      %vm2812 = vcmp.gt.s32.totalorder %v2811, 0
      %v2813 = vsel %vm2812, %v2811, 0
      %v2814 = vshrl.u32 %v2813, 5
      %v2815 = vand.u32 %v2813, 31
      %v2816 = vsub.s32 32, %v2815
      %v2817 = vshrl.u32 683565275, %v2816
      %v2818 = vshll.u32 683565275, %v2815
      %v2819 = vshrl.u32 2475754826, %v2816
      %v2820 = vor.u32 %v2818, %v2819
      %v2821 = vshll.u32 2475754826, %v2815
      %v2822 = vshrl.u32 2131351028, %v2816
      %v2823 = vor.u32 %v2821, %v2822
      %v2824 = vshll.u32 2131351028, %v2815
      %v2825 = vshrl.u32 2102212464, %v2816
      %v2826 = vor.u32 %v2824, %v2825
      %v2827 = vshll.u32 2102212464, %v2815
      %v2828 = vshrl.u32 920167782, %v2816
      %v2829 = vor.u32 %v2827, %v2828
      %v2830 = vshll.u32 920167782, %v2815
      %v2831 = vshrl.u32 1326507024, %v2816
      %v2832 = vor.u32 %v2830, %v2831
      %vm2833 = vcmp.lt.s32.totalorder %v2814, 1
      %vm2834 = vcmp.lt.s32.totalorder %v2814, 2
      %vm2835 = vcmp.lt.s32.totalorder %v2814, 3
      %vm2836 = vcmp.lt.s32.totalorder %v2814, 4
      %v2837 = vsel %vm2833, %v2817, %v2820
      %v2838 = vsel %vm2836, %v2826, 2102212464
      %v2839 = vsel %vm2835, %v2823, %v2838
      %v2840 = vsel %vm2834, %v2837, %v2839
      %v2841 = vsel %vm2833, %v2820, %v2823
      %v2842 = vsel %vm2836, %v2829, 920167782
      %v2843 = vsel %vm2835, %v2826, %v2842
      %v2844 = vsel %vm2834, %v2841, %v2843
      %v2845 = vsel %vm2833, %v2823, %v2826
      %v2846 = vsel %vm2836, %v2832, 1326507024
      %v2847 = vsel %vm2835, %v2829, %v2846
      %v2848 = vsel %vm2834, %v2845, %v2847
      %v2849 = vshll.u32 %v2809, 8
      %v2850 = vand.u32 %v2849, 65535
      %v2851 = vshrl.u32 %v2849, 16
      %v2852 = vand.u32 %v2848, 65535
      %v2853 = vshrl.u32 %v2848, 16
      %v2854 = vmul.u32 %v2850, %v2852
      %v2855 = vmul.u32 %v2850, %v2853
      %v2856 = vmul.u32 %v2851, %v2852
      %v2857 = vmul.u32 %v2851, %v2853
      %v2858 = vshll.u32 %v2855, 16
      %v2859 = vshrl.u32 %v2855, 16
      %v2860 = vshll.u32 %v2856, 16
      %v2861 = vshrl.u32 %v2856, 16
      %vm2862 = vc.u32 %v2854, %v2858
      %v2863 = vsel %vm2862, 1, 0
      %v2864 = vadd.s32 %v2854, %v2858
      %v2865 = vadd.s32 %v2857, %v2863
      %vm2866 = vc.u32 %v2864, %v2860
      %v2867 = vsel %vm2866, 1, 0
      %v2868 = vadd.s32 %v2864, %v2860
      %v2869 = vadd.s32 %v2865, %v2867
      %v2870 = vadd.s32 %v2869, %v2859
      %v2871 = vadd.s32 %v2870, %v2861
      %v2872 = vand.u32 %v2849, 65535
      %v2873 = vshrl.u32 %v2849, 16
      %v2874 = vand.u32 %v2844, 65535
      %v2875 = vshrl.u32 %v2844, 16
      %v2876 = vmul.u32 %v2872, %v2874
      %v2877 = vmul.u32 %v2872, %v2875
      %v2878 = vmul.u32 %v2873, %v2874
      %v2879 = vmul.u32 %v2873, %v2875
      %v2880 = vshll.u32 %v2877, 16
      %v2881 = vshrl.u32 %v2877, 16
      %v2882 = vshll.u32 %v2878, 16
      %v2883 = vshrl.u32 %v2878, 16
      %vm2884 = vc.u32 %v2876, %v2880
      %v2885 = vsel %vm2884, 1, 0
      %v2886 = vadd.s32 %v2876, %v2880
      %v2887 = vadd.s32 %v2879, %v2885
      %vm2888 = vc.u32 %v2886, %v2882
      %v2889 = vsel %vm2888, 1, 0
      %v2890 = vadd.s32 %v2886, %v2882
      %v2891 = vadd.s32 %v2887, %v2889
      %v2892 = vadd.s32 %v2891, %v2881
      %v2893 = vadd.s32 %v2892, %v2883
      %v2894 = vmul.u32 %v2849, %v2840
      %v2895 = vadd.s32 %v2871, %v2890
      %vm2896 = vc.u32 %v2871, %v2890
      %v2897 = vadd.s32 %v2893, 1
      %v2898 = vsel %vm2896, %v2897, %v2893
      %v2899 = vadd.s32 %v2894, %v2898
      %v2900 = vadd.s32 %v2899, 536870912
      %v2901 = vshrl.u32 %v2900, 30
      %v2902 = vshll.u32 %v2901, 30
      %v2903 = vsub.s32 %v2899, %v2902
      %vm2904 = vcmp.lt.s32.totalorder %v2903, 0
      %v2905 = vsub.s32 0, %v2903
      %v2906 = vsel %vm2904, %v2905, %v2903
      %v2907 = vclz %v2906
      %v2908 = vsub.s32 %v2907, 2
      %vm2909 = vcmp.gt.s32.totalorder 0, %v2908
      %v2910 = vsel %vm2909, 0, %v2908
      %v2911 = vsub.s32 32, %v2910
      %v2912 = vshll.u32 %v2903, %v2910
      %v2913 = vshrl.u32 %v2895, %v2911
      %v2914 = vor.u32 %v2912, %v2913
      %v2915 = vsub.s32 4294967266, %v2910
      %v2916 = vadd.s32 %v2915, 127
      %v2917 = vshll.u32 %v2916, 23
      %v2918 = vor.u32 4788187, %v2917
      %v2919 = vand.u32 2147483647, %v2918
      %v2921 = vcvt.s32.f32 %v2914
      %v2922 = vmul.f32 %v2921, %v2919
      %v2923 = vxor.u32 %v2922, 2147483648
      %v2924 = vsel %vm2803, %v2923, %v2922
      %v2925 = vsub.s32 4, %v2901
      %v2926 = vsel %vm2803, %v2925, %v2901
      %v2927 = vsel %vm2802, %v1707, %v2924
      %v2928 = vsel %vm2802, 0, %v2926
      %v2929 = vmul.f32 %v2927, %v2927
      %v2930 = vmul.f32 %v2929, -0.001358992
      %v2931 = vadd.f32 %v2930, 0.041655596
      %v2932 = vmul.f32 %v2929, %v2931
      %v2933 = vadd.f32 %v2932, -0.4999988
      %v2934 = vmul.f32 %v2929, %v2933
      %v2935 = vadd.f32 1.0, %v2934
      %v2936 = vmul.f32 %v2927, %v2927
      %v2937 = vmul.f32 %v2936, -0.00019511016
      %v2938 = vadd.f32 %v2937, 0.008332121
      %v2939 = vmul.f32 %v2936, %v2938
      %v2940 = vadd.f32 %v2939, -0.16666654
      %v2941 = vmul.f32 %v2936, %v2940
      %v2942 = vadd.f32 %v2941, 1.0
      %v2943 = vmul.f32 %v2942, %v2927
      %vm2944 = vweird.f32 %v1707
      %v2945 = vadd.s32 %v2928, 3
      %v2946 = vand.u32 %v2945, 3
      %vm2947 = vcmp.lt.s32.totalorder %v2946, 2
      %vm2948 = vcmp.eq.s32.totalorder %v2946, 0
      %v2949 = vxor.u32 %v2943, 2147483648
      %v2950 = vsel %vm2948, %v2935, %v2949
      %vm2951 = vcmp.eq.s32.totalorder %v2946, 2
      %v2952 = vxor.u32 %v2935, 2147483648
      %v2953 = vsel %vm2951, %v2952, %v2943
      %v2954 = vsel %vm2947, %v2950, %v2953
      %v2955 = vsel %vm2944, nan, %v2954
      %v2956 = vand.u32 2147483647, %v1708
      %vm2957 = vcmp.le.f32.partialorder %v2956, 0.7853982
      %vm2958 = vcmp.lt.s32.totalorder %v1708, 0
      %v2959 = vand.u32 %v1708, 2139095040
      %v2960 = vshrl.u32 %v2959, 23
      %v2961 = vsub.s32 %v2960, 127
      %v2962 = vand.u32 2147483647, %v1708
      %v2963 = vand.u32 %v2962, 8388607
      %v2964 = vor.u32 %v2963, 8388608
      %v2965 = vsub.s32 0, %v2964
      %v2966 = vadd.s32 %v2961, 1
      %vm2967 = vcmp.gt.s32.totalorder %v2966, 0
      %v2968 = vsel %vm2967, %v2966, 0
      %v2969 = vshrl.u32 %v2968, 5
      %v2970 = vand.u32 %v2968, 31
      %v2971 = vsub.s32 32, %v2970
      %v2972 = vshrl.u32 683565275, %v2971
      %v2973 = vshll.u32 683565275, %v2970
      %v2974 = vshrl.u32 2475754826, %v2971
      %v2975 = vor.u32 %v2973, %v2974
      %v2976 = vshll.u32 2475754826, %v2970
      %v2977 = vshrl.u32 2131351028, %v2971
      %v2978 = vor.u32 %v2976, %v2977
      %v2979 = vshll.u32 2131351028, %v2970
      %v2980 = vshrl.u32 2102212464, %v2971
      %v2981 = vor.u32 %v2979, %v2980
      %v2982 = vshll.u32 2102212464, %v2970
      %v2983 = vshrl.u32 920167782, %v2971
      %v2984 = vor.u32 %v2982, %v2983
      %v2985 = vshll.u32 920167782, %v2970
      %v2986 = vshrl.u32 1326507024, %v2971
      %v2987 = vor.u32 %v2985, %v2986
      %vm2988 = vcmp.lt.s32.totalorder %v2969, 1
      %vm2989 = vcmp.lt.s32.totalorder %v2969, 2
      %vm2990 = vcmp.lt.s32.totalorder %v2969, 3
      %vm2991 = vcmp.lt.s32.totalorder %v2969, 4
      %v2992 = vsel %vm2988, %v2972, %v2975
      %v2993 = vsel %vm2991, %v2981, 2102212464
      %v2994 = vsel %vm2990, %v2978, %v2993
      %v2995 = vsel %vm2989, %v2992, %v2994
      %v2996 = vsel %vm2988, %v2975, %v2978
      %v2997 = vsel %vm2991, %v2984, 920167782
      %v2998 = vsel %vm2990, %v2981, %v2997
      %v2999 = vsel %vm2989, %v2996, %v2998
      %v3000 = vsel %vm2988, %v2978, %v2981
      %v3001 = vsel %vm2991, %v2987, 1326507024
      %v3002 = vsel %vm2990, %v2984, %v3001
      %v3003 = vsel %vm2989, %v3000, %v3002
      %v3004 = vshll.u32 %v2964, 8
      %v3005 = vand.u32 %v3004, 65535
      %v3006 = vshrl.u32 %v3004, 16
      %v3007 = vand.u32 %v3003, 65535
      %v3008 = vshrl.u32 %v3003, 16
      %v3009 = vmul.u32 %v3005, %v3007
      %v3010 = vmul.u32 %v3005, %v3008
      %v3011 = vmul.u32 %v3006, %v3007
      %v3012 = vmul.u32 %v3006, %v3008
      %v3013 = vshll.u32 %v3010, 16
      %v3014 = vshrl.u32 %v3010, 16
      %v3015 = vshll.u32 %v3011, 16
      %v3016 = vshrl.u32 %v3011, 16
      %vm3017 = vc.u32 %v3009, %v3013
      %v3018 = vsel %vm3017, 1, 0
      %v3019 = vadd.s32 %v3009, %v3013
      %v3020 = vadd.s32 %v3012, %v3018
      %vm3021 = vc.u32 %v3019, %v3015
      %v3022 = vsel %vm3021, 1, 0
      %v3023 = vadd.s32 %v3019, %v3015
      %v3024 = vadd.s32 %v3020, %v3022
      %v3025 = vadd.s32 %v3024, %v3014
      %v3026 = vadd.s32 %v3025, %v3016
      %v3027 = vand.u32 %v3004, 65535
      %v3028 = vshrl.u32 %v3004, 16
      %v3029 = vand.u32 %v2999, 65535
      %v3030 = vshrl.u32 %v2999, 16
      %v3031 = vmul.u32 %v3027, %v3029
      %v3032 = vmul.u32 %v3027, %v3030
      %v3033 = vmul.u32 %v3028, %v3029
      %v3034 = vmul.u32 %v3028, %v3030
      %v3035 = vshll.u32 %v3032, 16
      %v3036 = vshrl.u32 %v3032, 16
      %v3037 = vshll.u32 %v3033, 16
      %v3038 = vshrl.u32 %v3033, 16
      %vm3039 = vc.u32 %v3031, %v3035
      %v3040 = vsel %vm3039, 1, 0
      %v3041 = vadd.s32 %v3031, %v3035
      %v3042 = vadd.s32 %v3034, %v3040
      %vm3043 = vc.u32 %v3041, %v3037
      %v3044 = vsel %vm3043, 1, 0
      %v3045 = vadd.s32 %v3041, %v3037
      %v3046 = vadd.s32 %v3042, %v3044
      %v3047 = vadd.s32 %v3046, %v3036
      %v3048 = vadd.s32 %v3047, %v3038
      %v3049 = vmul.u32 %v3004, %v2995
      %v3050 = vadd.s32 %v3026, %v3045
      %vm3051 = vc.u32 %v3026, %v3045
      %v3052 = vadd.s32 %v3048, 1
      %v3053 = vsel %vm3051, %v3052, %v3048
      %v3054 = vadd.s32 %v3049, %v3053
      %v3055 = vadd.s32 %v3054, 536870912
      %v3056 = vshrl.u32 %v3055, 30
      %v3057 = vshll.u32 %v3056, 30
      %v3058 = vsub.s32 %v3054, %v3057
      %vm3059 = vcmp.lt.s32.totalorder %v3058, 0
      %v3060 = vsub.s32 0, %v3058
      %v3061 = vsel %vm3059, %v3060, %v3058
      %v3062 = vclz %v3061
      %v3063 = vsub.s32 %v3062, 2
      %vm3064 = vcmp.gt.s32.totalorder 0, %v3063
      %v3065 = vsel %vm3064, 0, %v3063
      %v3066 = vsub.s32 32, %v3065
      %v3067 = vshll.u32 %v3058, %v3065
      %v3068 = vshrl.u32 %v3050, %v3066
      %v3069 = vor.u32 %v3067, %v3068
      %v3070 = vsub.s32 4294967266, %v3065
      %v3071 = vadd.s32 %v3070, 127
      %v3072 = vshll.u32 %v3071, 23
      %v3073 = vor.u32 4788187, %v3072
      %v3074 = vand.u32 2147483647, %v3073
      %v3076 = vcvt.s32.f32 %v3069
      %v3077 = vmul.f32 %v3076, %v3074
      %v3078 = vxor.u32 %v3077, 2147483648
      %v3079 = vsel %vm2958, %v3078, %v3077
      %v3080 = vsub.s32 4, %v3056
      %v3081 = vsel %vm2958, %v3080, %v3056
      %v3082 = vsel %vm2957, %v1708, %v3079
      %v3083 = vsel %vm2957, 0, %v3081
      %v3084 = vmul.f32 %v3082, %v3082
      %v3085 = vmul.f32 %v3084, -0.001358992
      %v3086 = vadd.f32 %v3085, 0.041655596
      %v3087 = vmul.f32 %v3084, %v3086
      %v3088 = vadd.f32 %v3087, -0.4999988
      %v3089 = vmul.f32 %v3084, %v3088
      %v3090 = vadd.f32 1.0, %v3089
      %v3091 = vmul.f32 %v3082, %v3082
      %v3092 = vmul.f32 %v3091, -0.00019511016
      %v3093 = vadd.f32 %v3092, 0.008332121
      %v3094 = vmul.f32 %v3091, %v3093
      %v3095 = vadd.f32 %v3094, -0.16666654
      %v3096 = vmul.f32 %v3091, %v3095
      %v3097 = vadd.f32 %v3096, 1.0
      %v3098 = vmul.f32 %v3097, %v3082
      %vm3099 = vweird.f32 %v1708
      %v3100 = vadd.s32 %v3083, 3
      %v3101 = vand.u32 %v3100, 3
      %vm3102 = vcmp.lt.s32.totalorder %v3101, 2
      %vm3103 = vcmp.eq.s32.totalorder %v3101, 0
      %v3104 = vxor.u32 %v3098, 2147483648
      %v3105 = vsel %vm3103, %v3090, %v3104
      %vm3106 = vcmp.eq.s32.totalorder %v3101, 2
      %v3107 = vxor.u32 %v3090, 2147483648
      %v3108 = vsel %vm3106, %v3107, %v3098
      %v3109 = vsel %vm3102, %v3105, %v3108
      %v3110 = vsel %vm3099, nan, %v3109
      %v3111 = vand.u32 2147483647, %v1709
      %vm3112 = vcmp.le.f32.partialorder %v3111, 0.7853982
      %vm3113 = vcmp.lt.s32.totalorder %v1709, 0
      %v3114 = vand.u32 %v1709, 2139095040
      %v3115 = vshrl.u32 %v3114, 23
      %v3116 = vsub.s32 %v3115, 127
      %v3117 = vand.u32 2147483647, %v1709
      %v3118 = vand.u32 %v3117, 8388607
      %v3119 = vor.u32 %v3118, 8388608
      %v3120 = vsub.s32 0, %v3119
      %v3121 = vadd.s32 %v3116, 1
      %vm3122 = vcmp.gt.s32.totalorder %v3121, 0
      %v3123 = vsel %vm3122, %v3121, 0
      %v3124 = vshrl.u32 %v3123, 5
      %v3125 = vand.u32 %v3123, 31
      %v3126 = vsub.s32 32, %v3125
      %v3127 = vshrl.u32 683565275, %v3126
      %v3128 = vshll.u32 683565275, %v3125
      %v3129 = vshrl.u32 2475754826, %v3126
      %v3130 = vor.u32 %v3128, %v3129
      %v3131 = vshll.u32 2475754826, %v3125
      %v3132 = vshrl.u32 2131351028, %v3126
      %v3133 = vor.u32 %v3131, %v3132
      %v3134 = vshll.u32 2131351028, %v3125
      %v3135 = vshrl.u32 2102212464, %v3126
      %v3136 = vor.u32 %v3134, %v3135
      %v3137 = vshll.u32 2102212464, %v3125
      %v3138 = vshrl.u32 920167782, %v3126
      %v3139 = vor.u32 %v3137, %v3138
      %v3140 = vshll.u32 920167782, %v3125
      %v3141 = vshrl.u32 1326507024, %v3126
      %v3142 = vor.u32 %v3140, %v3141
      %vm3143 = vcmp.lt.s32.totalorder %v3124, 1
      %vm3144 = vcmp.lt.s32.totalorder %v3124, 2
      %vm3145 = vcmp.lt.s32.totalorder %v3124, 3
      %vm3146 = vcmp.lt.s32.totalorder %v3124, 4
      %v3147 = vsel %vm3143, %v3127, %v3130
      %v3148 = vsel %vm3146, %v3136, 2102212464
      %v3149 = vsel %vm3145, %v3133, %v3148
      %v3150 = vsel %vm3144, %v3147, %v3149
      %v3151 = vsel %vm3143, %v3130, %v3133
      %v3152 = vsel %vm3146, %v3139, 920167782
      %v3153 = vsel %vm3145, %v3136, %v3152
      %v3154 = vsel %vm3144, %v3151, %v3153
      %v3155 = vsel %vm3143, %v3133, %v3136
      %v3156 = vsel %vm3146, %v3142, 1326507024
      %v3157 = vsel %vm3145, %v3139, %v3156
      %v3158 = vsel %vm3144, %v3155, %v3157
      %v3159 = vshll.u32 %v3119, 8
      %v3160 = vand.u32 %v3159, 65535
      %v3161 = vshrl.u32 %v3159, 16
      %v3162 = vand.u32 %v3158, 65535
      %v3163 = vshrl.u32 %v3158, 16
      %v3164 = vmul.u32 %v3160, %v3162
      %v3165 = vmul.u32 %v3160, %v3163
      %v3166 = vmul.u32 %v3161, %v3162
      %v3167 = vmul.u32 %v3161, %v3163
      %v3168 = vshll.u32 %v3165, 16
      %v3169 = vshrl.u32 %v3165, 16
      %v3170 = vshll.u32 %v3166, 16
      %v3171 = vshrl.u32 %v3166, 16
      %vm3172 = vc.u32 %v3164, %v3168
      %v3173 = vsel %vm3172, 1, 0
      %v3174 = vadd.s32 %v3164, %v3168
      %v3175 = vadd.s32 %v3167, %v3173
      %vm3176 = vc.u32 %v3174, %v3170
      %v3177 = vsel %vm3176, 1, 0
      %v3178 = vadd.s32 %v3174, %v3170
      %v3179 = vadd.s32 %v3175, %v3177
      %v3180 = vadd.s32 %v3179, %v3169
      %v3181 = vadd.s32 %v3180, %v3171
      %v3182 = vand.u32 %v3159, 65535
      %v3183 = vshrl.u32 %v3159, 16
      %v3184 = vand.u32 %v3154, 65535
      %v3185 = vshrl.u32 %v3154, 16
      %v3186 = vmul.u32 %v3182, %v3184
      %v3187 = vmul.u32 %v3182, %v3185
      %v3188 = vmul.u32 %v3183, %v3184
      %v3189 = vmul.u32 %v3183, %v3185
      %v3190 = vshll.u32 %v3187, 16
      %v3191 = vshrl.u32 %v3187, 16
      %v3192 = vshll.u32 %v3188, 16
      %v3193 = vshrl.u32 %v3188, 16
      %vm3194 = vc.u32 %v3186, %v3190
      %v3195 = vsel %vm3194, 1, 0
      %v3196 = vadd.s32 %v3186, %v3190
      %v3197 = vadd.s32 %v3189, %v3195
      %vm3198 = vc.u32 %v3196, %v3192
      %v3199 = vsel %vm3198, 1, 0
      %v3200 = vadd.s32 %v3196, %v3192
      %v3201 = vadd.s32 %v3197, %v3199
      %v3202 = vadd.s32 %v3201, %v3191
      %v3203 = vadd.s32 %v3202, %v3193
      %v3204 = vmul.u32 %v3159, %v3150
      %v3205 = vadd.s32 %v3181, %v3200
      %vm3206 = vc.u32 %v3181, %v3200
      %v3207 = vadd.s32 %v3203, 1
      %v3208 = vsel %vm3206, %v3207, %v3203
      %v3209 = vadd.s32 %v3204, %v3208
      %v3210 = vadd.s32 %v3209, 536870912
      %v3211 = vshrl.u32 %v3210, 30
      %v3212 = vshll.u32 %v3211, 30
      %v3213 = vsub.s32 %v3209, %v3212
      %vm3214 = vcmp.lt.s32.totalorder %v3213, 0
      %v3215 = vsub.s32 0, %v3213
      %v3216 = vsel %vm3214, %v3215, %v3213
      %v3217 = vclz %v3216
      %v3218 = vsub.s32 %v3217, 2
      %vm3219 = vcmp.gt.s32.totalorder 0, %v3218
      %v3220 = vsel %vm3219, 0, %v3218
      %v3221 = vsub.s32 32, %v3220
      %v3222 = vshll.u32 %v3213, %v3220
      %v3223 = vshrl.u32 %v3205, %v3221
      %v3224 = vor.u32 %v3222, %v3223
      %v3225 = vsub.s32 4294967266, %v3220
      %v3226 = vadd.s32 %v3225, 127
      %v3227 = vshll.u32 %v3226, 23
      %v3228 = vor.u32 4788187, %v3227
      %v3229 = vand.u32 2147483647, %v3228
      %v3231 = vcvt.s32.f32 %v3224
      %v3232 = vmul.f32 %v3231, %v3229
      %v3233 = vxor.u32 %v3232, 2147483648
      %v3234 = vsel %vm3113, %v3233, %v3232
      %v3235 = vsub.s32 4, %v3211
      %v3236 = vsel %vm3113, %v3235, %v3211
      %v3237 = vsel %vm3112, %v1709, %v3234
      %v3238 = vsel %vm3112, 0, %v3236
      %v3239 = vmul.f32 %v3237, %v3237
      %v3240 = vmul.f32 %v3239, -0.001358992
      %v3241 = vadd.f32 %v3240, 0.041655596
      %v3242 = vmul.f32 %v3239, %v3241
      %v3243 = vadd.f32 %v3242, -0.4999988
      %v3244 = vmul.f32 %v3239, %v3243
      %v3245 = vadd.f32 1.0, %v3244
      %v3246 = vmul.f32 %v3237, %v3237
      %v3247 = vmul.f32 %v3246, -0.00019511016
      %v3248 = vadd.f32 %v3247, 0.008332121
      %v3249 = vmul.f32 %v3246, %v3248
      %v3250 = vadd.f32 %v3249, -0.16666654
      %v3251 = vmul.f32 %v3246, %v3250
      %v3252 = vadd.f32 %v3251, 1.0
      %v3253 = vmul.f32 %v3252, %v3237
      %vm3254 = vweird.f32 %v1709
      %v3255 = vadd.s32 %v3238, 3
      %v3256 = vand.u32 %v3255, 3
      %vm3257 = vcmp.lt.s32.totalorder %v3256, 2
      %vm3258 = vcmp.eq.s32.totalorder %v3256, 0
      %v3259 = vxor.u32 %v3253, 2147483648
      %v3260 = vsel %vm3258, %v3245, %v3259
      %vm3261 = vcmp.eq.s32.totalorder %v3256, 2
      %v3262 = vxor.u32 %v3245, 2147483648
      %v3263 = vsel %vm3261, %v3262, %v3253
      %v3264 = vsel %vm3257, %v3260, %v3263
      %v3265 = vsel %vm3254, nan, %v3264
      %v3266 = vand.u32 2147483647, %v1710
      %vm3267 = vcmp.le.f32.partialorder %v3266, 0.7853982
      %vm3268 = vcmp.lt.s32.totalorder %v1710, 0
      %v3269 = vand.u32 %v1710, 2139095040
      %v3270 = vshrl.u32 %v3269, 23
      %v3271 = vsub.s32 %v3270, 127
      %v3272 = vand.u32 2147483647, %v1710
      %v3273 = vand.u32 %v3272, 8388607
      %v3274 = vor.u32 %v3273, 8388608
      %v3275 = vsub.s32 0, %v3274
      %v3276 = vadd.s32 %v3271, 1
      %vm3277 = vcmp.gt.s32.totalorder %v3276, 0
      %v3278 = vsel %vm3277, %v3276, 0
      %v3279 = vshrl.u32 %v3278, 5
      %v3280 = vand.u32 %v3278, 31
      %v3281 = vsub.s32 32, %v3280
      %v3282 = vshrl.u32 683565275, %v3281
      %v3283 = vshll.u32 683565275, %v3280
      %v3284 = vshrl.u32 2475754826, %v3281
      %v3285 = vor.u32 %v3283, %v3284
      %v3286 = vshll.u32 2475754826, %v3280
      %v3287 = vshrl.u32 2131351028, %v3281
      %v3288 = vor.u32 %v3286, %v3287
      %v3289 = vshll.u32 2131351028, %v3280
      %v3290 = vshrl.u32 2102212464, %v3281
      %v3291 = vor.u32 %v3289, %v3290
      %v3292 = vshll.u32 2102212464, %v3280
      %v3293 = vshrl.u32 920167782, %v3281
      %v3294 = vor.u32 %v3292, %v3293
      %v3295 = vshll.u32 920167782, %v3280
      %v3296 = vshrl.u32 1326507024, %v3281
      %v3297 = vor.u32 %v3295, %v3296
      %vm3298 = vcmp.lt.s32.totalorder %v3279, 1
      %vm3299 = vcmp.lt.s32.totalorder %v3279, 2
      %vm3300 = vcmp.lt.s32.totalorder %v3279, 3
      %vm3301 = vcmp.lt.s32.totalorder %v3279, 4
      %v3302 = vsel %vm3298, %v3282, %v3285
      %v3303 = vsel %vm3301, %v3291, 2102212464
      %v3304 = vsel %vm3300, %v3288, %v3303
      %v3305 = vsel %vm3299, %v3302, %v3304
      %v3306 = vsel %vm3298, %v3285, %v3288
      %v3307 = vsel %vm3301, %v3294, 920167782
      %v3308 = vsel %vm3300, %v3291, %v3307
      %v3309 = vsel %vm3299, %v3306, %v3308
      %v3310 = vsel %vm3298, %v3288, %v3291
      %v3311 = vsel %vm3301, %v3297, 1326507024
      %v3312 = vsel %vm3300, %v3294, %v3311
      %v3313 = vsel %vm3299, %v3310, %v3312
      %v3314 = vshll.u32 %v3274, 8
      %v3315 = vand.u32 %v3314, 65535
      %v3316 = vshrl.u32 %v3314, 16
      %v3317 = vand.u32 %v3313, 65535
      %v3318 = vshrl.u32 %v3313, 16
      %v3319 = vmul.u32 %v3315, %v3317
      %v3320 = vmul.u32 %v3315, %v3318
      %v3321 = vmul.u32 %v3316, %v3317
      %v3322 = vmul.u32 %v3316, %v3318
      %v3323 = vshll.u32 %v3320, 16
      %v3324 = vshrl.u32 %v3320, 16
      %v3325 = vshll.u32 %v3321, 16
      %v3326 = vshrl.u32 %v3321, 16
      %vm3327 = vc.u32 %v3319, %v3323
      %v3328 = vsel %vm3327, 1, 0
      %v3329 = vadd.s32 %v3319, %v3323
      %v3330 = vadd.s32 %v3322, %v3328
      %vm3331 = vc.u32 %v3329, %v3325
      %v3332 = vsel %vm3331, 1, 0
      %v3333 = vadd.s32 %v3329, %v3325
      %v3334 = vadd.s32 %v3330, %v3332
      %v3335 = vadd.s32 %v3334, %v3324
      %v3336 = vadd.s32 %v3335, %v3326
      %v3337 = vand.u32 %v3314, 65535
      %v3338 = vshrl.u32 %v3314, 16
      %v3339 = vand.u32 %v3309, 65535
      %v3340 = vshrl.u32 %v3309, 16
      %v3341 = vmul.u32 %v3337, %v3339
      %v3342 = vmul.u32 %v3337, %v3340
      %v3343 = vmul.u32 %v3338, %v3339
      %v3344 = vmul.u32 %v3338, %v3340
      %v3345 = vshll.u32 %v3342, 16
      %v3346 = vshrl.u32 %v3342, 16
      %v3347 = vshll.u32 %v3343, 16
      %v3348 = vshrl.u32 %v3343, 16
      %vm3349 = vc.u32 %v3341, %v3345
      %v3350 = vsel %vm3349, 1, 0
      %v3351 = vadd.s32 %v3341, %v3345
      %v3352 = vadd.s32 %v3344, %v3350
      %vm3353 = vc.u32 %v3351, %v3347
      %v3354 = vsel %vm3353, 1, 0
      %v3355 = vadd.s32 %v3351, %v3347
      %v3356 = vadd.s32 %v3352, %v3354
      %v3357 = vadd.s32 %v3356, %v3346
      %v3358 = vadd.s32 %v3357, %v3348
      %v3359 = vmul.u32 %v3314, %v3305
      %v3360 = vadd.s32 %v3336, %v3355
      %vm3361 = vc.u32 %v3336, %v3355
      %v3362 = vadd.s32 %v3358, 1
      %v3363 = vsel %vm3361, %v3362, %v3358
      %v3364 = vadd.s32 %v3359, %v3363
      %v3365 = vadd.s32 %v3364, 536870912
      %v3366 = vshrl.u32 %v3365, 30
      %v3367 = vshll.u32 %v3366, 30
      %v3368 = vsub.s32 %v3364, %v3367
      %vm3369 = vcmp.lt.s32.totalorder %v3368, 0
      %v3370 = vsub.s32 0, %v3368
      %v3371 = vsel %vm3369, %v3370, %v3368
      %v3372 = vclz %v3371
      %v3373 = vsub.s32 %v3372, 2
      %vm3374 = vcmp.gt.s32.totalorder 0, %v3373
      %v3375 = vsel %vm3374, 0, %v3373
      %v3376 = vsub.s32 32, %v3375
      %v3377 = vshll.u32 %v3368, %v3375
      %v3378 = vshrl.u32 %v3360, %v3376
      %v3379 = vor.u32 %v3377, %v3378
      %v3380 = vsub.s32 4294967266, %v3375
      %v3381 = vadd.s32 %v3380, 127
      %v3382 = vshll.u32 %v3381, 23
      %v3383 = vor.u32 4788187, %v3382
      %v3384 = vand.u32 2147483647, %v3383
      %v3386 = vcvt.s32.f32 %v3379
      %v3387 = vmul.f32 %v3386, %v3384
      %v3388 = vxor.u32 %v3387, 2147483648
      %v3389 = vsel %vm3268, %v3388, %v3387
      %v3390 = vsub.s32 4, %v3366
      %v3391 = vsel %vm3268, %v3390, %v3366
      %v3392 = vsel %vm3267, %v1710, %v3389
      %v3393 = vsel %vm3267, 0, %v3391
      %v3394 = vmul.f32 %v3392, %v3392
      %v3395 = vmul.f32 %v3394, -0.001358992
      %v3396 = vadd.f32 %v3395, 0.041655596
      %v3397 = vmul.f32 %v3394, %v3396
      %v3398 = vadd.f32 %v3397, -0.4999988
      %v3399 = vmul.f32 %v3394, %v3398
      %v3400 = vadd.f32 1.0, %v3399
      %v3401 = vmul.f32 %v3392, %v3392
      %v3402 = vmul.f32 %v3401, -0.00019511016
      %v3403 = vadd.f32 %v3402, 0.008332121
      %v3404 = vmul.f32 %v3401, %v3403
      %v3405 = vadd.f32 %v3404, -0.16666654
      %v3406 = vmul.f32 %v3401, %v3405
      %v3407 = vadd.f32 %v3406, 1.0
      %v3408 = vmul.f32 %v3407, %v3392
      %vm3409 = vweird.f32 %v1710
      %v3410 = vadd.s32 %v3393, 3
      %v3411 = vand.u32 %v3410, 3
      %vm3412 = vcmp.lt.s32.totalorder %v3411, 2
      %vm3413 = vcmp.eq.s32.totalorder %v3411, 0
      %v3414 = vxor.u32 %v3408, 2147483648
      %v3415 = vsel %vm3413, %v3400, %v3414
      %vm3416 = vcmp.eq.s32.totalorder %v3411, 2
      %v3417 = vxor.u32 %v3400, 2147483648
      %v3418 = vsel %vm3416, %v3417, %v3408
      %v3419 = vsel %vm3412, %v3415, %v3418
      %v3420 = vsel %vm3409, nan, %v3419
      %v3421 = vand.u32 2147483647, %v1711
      %vm3422 = vcmp.le.f32.partialorder %v3421, 0.7853982
      %vm3423 = vcmp.lt.s32.totalorder %v1711, 0
      %v3424 = vand.u32 %v1711, 2139095040
      %v3425 = vshrl.u32 %v3424, 23
      %v3426 = vsub.s32 %v3425, 127
      %v3427 = vand.u32 2147483647, %v1711
      %v3428 = vand.u32 %v3427, 8388607
      %v3429 = vor.u32 %v3428, 8388608
      %v3430 = vsub.s32 0, %v3429
      %v3431 = vadd.s32 %v3426, 1
      %vm3432 = vcmp.gt.s32.totalorder %v3431, 0
      %v3433 = vsel %vm3432, %v3431, 0
      %v3434 = vshrl.u32 %v3433, 5
      %v3435 = vand.u32 %v3433, 31
      %v3436 = vsub.s32 32, %v3435
      %v3437 = vshrl.u32 683565275, %v3436
      %v3438 = vshll.u32 683565275, %v3435
      %v3439 = vshrl.u32 2475754826, %v3436
      %v3440 = vor.u32 %v3438, %v3439
      %v3441 = vshll.u32 2475754826, %v3435
      %v3442 = vshrl.u32 2131351028, %v3436
      %v3443 = vor.u32 %v3441, %v3442
      %v3444 = vshll.u32 2131351028, %v3435
      %v3445 = vshrl.u32 2102212464, %v3436
      %v3446 = vor.u32 %v3444, %v3445
      %v3447 = vshll.u32 2102212464, %v3435
      %v3448 = vshrl.u32 920167782, %v3436
      %v3449 = vor.u32 %v3447, %v3448
      %v3450 = vshll.u32 920167782, %v3435
      %v3451 = vshrl.u32 1326507024, %v3436
      %v3452 = vor.u32 %v3450, %v3451
      %vm3453 = vcmp.lt.s32.totalorder %v3434, 1
      %vm3454 = vcmp.lt.s32.totalorder %v3434, 2
      %vm3455 = vcmp.lt.s32.totalorder %v3434, 3
      %vm3456 = vcmp.lt.s32.totalorder %v3434, 4
      %v3457 = vsel %vm3453, %v3437, %v3440
      %v3458 = vsel %vm3456, %v3446, 2102212464
      %v3459 = vsel %vm3455, %v3443, %v3458
      %v3460 = vsel %vm3454, %v3457, %v3459
      %v3461 = vsel %vm3453, %v3440, %v3443
      %v3462 = vsel %vm3456, %v3449, 920167782
      %v3463 = vsel %vm3455, %v3446, %v3462
      %v3464 = vsel %vm3454, %v3461, %v3463
      %v3465 = vsel %vm3453, %v3443, %v3446
      %v3466 = vsel %vm3456, %v3452, 1326507024
      %v3467 = vsel %vm3455, %v3449, %v3466
      %v3468 = vsel %vm3454, %v3465, %v3467
      %v3469 = vshll.u32 %v3429, 8
      %v3470 = vand.u32 %v3469, 65535
      %v3471 = vshrl.u32 %v3469, 16
      %v3472 = vand.u32 %v3468, 65535
      %v3473 = vshrl.u32 %v3468, 16
      %v3474 = vmul.u32 %v3470, %v3472
      %v3475 = vmul.u32 %v3470, %v3473
      %v3476 = vmul.u32 %v3471, %v3472
      %v3477 = vmul.u32 %v3471, %v3473
      %v3478 = vshll.u32 %v3475, 16
      %v3479 = vshrl.u32 %v3475, 16
      %v3480 = vshll.u32 %v3476, 16
      %v3481 = vshrl.u32 %v3476, 16
      %vm3482 = vc.u32 %v3474, %v3478
      %v3483 = vsel %vm3482, 1, 0
      %v3484 = vadd.s32 %v3474, %v3478
      %v3485 = vadd.s32 %v3477, %v3483
      %vm3486 = vc.u32 %v3484, %v3480
      %v3487 = vsel %vm3486, 1, 0
      %v3488 = vadd.s32 %v3484, %v3480
      %v3489 = vadd.s32 %v3485, %v3487
      %v3490 = vadd.s32 %v3489, %v3479
      %v3491 = vadd.s32 %v3490, %v3481
      %v3492 = vand.u32 %v3469, 65535
      %v3493 = vshrl.u32 %v3469, 16
      %v3494 = vand.u32 %v3464, 65535
      %v3495 = vshrl.u32 %v3464, 16
      %v3496 = vmul.u32 %v3492, %v3494
      %v3497 = vmul.u32 %v3492, %v3495
      %v3498 = vmul.u32 %v3493, %v3494
      %v3499 = vmul.u32 %v3493, %v3495
      %v3500 = vshll.u32 %v3497, 16
      %v3501 = vshrl.u32 %v3497, 16
      %v3502 = vshll.u32 %v3498, 16
      %v3503 = vshrl.u32 %v3498, 16
      %vm3504 = vc.u32 %v3496, %v3500
      %v3505 = vsel %vm3504, 1, 0
      %v3506 = vadd.s32 %v3496, %v3500
      %v3507 = vadd.s32 %v3499, %v3505
      %vm3508 = vc.u32 %v3506, %v3502
      %v3509 = vsel %vm3508, 1, 0
      %v3510 = vadd.s32 %v3506, %v3502
      %v3511 = vadd.s32 %v3507, %v3509
      %v3512 = vadd.s32 %v3511, %v3501
      %v3513 = vadd.s32 %v3512, %v3503
      %v3514 = vmul.u32 %v3469, %v3460
      %v3515 = vadd.s32 %v3491, %v3510
      %vm3516 = vc.u32 %v3491, %v3510
      %v3517 = vadd.s32 %v3513, 1
      %v3518 = vsel %vm3516, %v3517, %v3513
      %v3519 = vadd.s32 %v3514, %v3518
      %v3520 = vadd.s32 %v3519, 536870912
      %v3521 = vshrl.u32 %v3520, 30
      %v3522 = vshll.u32 %v3521, 30
      %v3523 = vsub.s32 %v3519, %v3522
      %vm3524 = vcmp.lt.s32.totalorder %v3523, 0
      %v3525 = vsub.s32 0, %v3523
      %v3526 = vsel %vm3524, %v3525, %v3523
      %v3527 = vclz %v3526
      %v3528 = vsub.s32 %v3527, 2
      %vm3529 = vcmp.gt.s32.totalorder 0, %v3528
      %v3530 = vsel %vm3529, 0, %v3528
      %v3531 = vsub.s32 32, %v3530
      %v3532 = vshll.u32 %v3523, %v3530
      %v3533 = vshrl.u32 %v3515, %v3531
      %v3534 = vor.u32 %v3532, %v3533
      %v3535 = vsub.s32 4294967266, %v3530
      %v3536 = vadd.s32 %v3535, 127
      %v3537 = vshll.u32 %v3536, 23
      %v3538 = vor.u32 4788187, %v3537
      %v3539 = vand.u32 2147483647, %v3538
      %v3541 = vcvt.s32.f32 %v3534
      %v3542 = vmul.f32 %v3541, %v3539
      %v3543 = vxor.u32 %v3542, 2147483648
      %v3544 = vsel %vm3423, %v3543, %v3542
      %v3545 = vsub.s32 4, %v3521
      %v3546 = vsel %vm3423, %v3545, %v3521
      %v3547 = vsel %vm3422, %v1711, %v3544
      %v3548 = vsel %vm3422, 0, %v3546
      %v3549 = vmul.f32 %v3547, %v3547
      %v3550 = vmul.f32 %v3549, -0.001358992
      %v3551 = vadd.f32 %v3550, 0.041655596
      %v3552 = vmul.f32 %v3549, %v3551
      %v3553 = vadd.f32 %v3552, -0.4999988
      %v3554 = vmul.f32 %v3549, %v3553
      %v3555 = vadd.f32 1.0, %v3554
      %v3556 = vmul.f32 %v3547, %v3547
      %v3557 = vmul.f32 %v3556, -0.00019511016
      %v3558 = vadd.f32 %v3557, 0.008332121
      %v3559 = vmul.f32 %v3556, %v3558
      %v3560 = vadd.f32 %v3559, -0.16666654
      %v3561 = vmul.f32 %v3556, %v3560
      %v3562 = vadd.f32 %v3561, 1.0
      %v3563 = vmul.f32 %v3562, %v3547
      %vm3564 = vweird.f32 %v1711
      %v3565 = vadd.s32 %v3548, 3
      %v3566 = vand.u32 %v3565, 3
      %vm3567 = vcmp.lt.s32.totalorder %v3566, 2
      %vm3568 = vcmp.eq.s32.totalorder %v3566, 0
      %v3569 = vxor.u32 %v3563, 2147483648
      %v3570 = vsel %vm3568, %v3555, %v3569
      %vm3571 = vcmp.eq.s32.totalorder %v3566, 2
      %v3572 = vxor.u32 %v3555, 2147483648
      %v3573 = vsel %vm3571, %v3572, %v3563
      %v3574 = vsel %vm3567, %v3570, %v3573
      %v3575 = vsel %vm3564, nan, %v3574
      %v3576 = vand.u32 2147483647, %v1712
      %vm3577 = vcmp.le.f32.partialorder %v3576, 0.7853982
      %vm3578 = vcmp.lt.s32.totalorder %v1712, 0
      %v3579 = vand.u32 %v1712, 2139095040
      %v3580 = vshrl.u32 %v3579, 23
      %v3581 = vsub.s32 %v3580, 127
      %v3582 = vand.u32 2147483647, %v1712
      %v3583 = vand.u32 %v3582, 8388607
      %v3584 = vor.u32 %v3583, 8388608
      %v3585 = vsub.s32 0, %v3584
      %v3586 = vadd.s32 %v3581, 1
      %vm3587 = vcmp.gt.s32.totalorder %v3586, 0
      %v3588 = vsel %vm3587, %v3586, 0
      %v3589 = vshrl.u32 %v3588, 5
      %v3590 = vand.u32 %v3588, 31
      %v3591 = vsub.s32 32, %v3590
      %v3592 = vshrl.u32 683565275, %v3591
      %v3593 = vshll.u32 683565275, %v3590
      %v3594 = vshrl.u32 2475754826, %v3591
      %v3595 = vor.u32 %v3593, %v3594
      %v3596 = vshll.u32 2475754826, %v3590
      %v3597 = vshrl.u32 2131351028, %v3591
      %v3598 = vor.u32 %v3596, %v3597
      %v3599 = vshll.u32 2131351028, %v3590
      %v3600 = vshrl.u32 2102212464, %v3591
      %v3601 = vor.u32 %v3599, %v3600
      %v3602 = vshll.u32 2102212464, %v3590
      %v3603 = vshrl.u32 920167782, %v3591
      %v3604 = vor.u32 %v3602, %v3603
      %v3605 = vshll.u32 920167782, %v3590
      %v3606 = vshrl.u32 1326507024, %v3591
      %v3607 = vor.u32 %v3605, %v3606
      %vm3608 = vcmp.lt.s32.totalorder %v3589, 1
      %vm3609 = vcmp.lt.s32.totalorder %v3589, 2
      %vm3610 = vcmp.lt.s32.totalorder %v3589, 3
      %vm3611 = vcmp.lt.s32.totalorder %v3589, 4
      %v3612 = vsel %vm3608, %v3592, %v3595
      %v3613 = vsel %vm3611, %v3601, 2102212464
      %v3614 = vsel %vm3610, %v3598, %v3613
      %v3615 = vsel %vm3609, %v3612, %v3614
      %v3616 = vsel %vm3608, %v3595, %v3598
      %v3617 = vsel %vm3611, %v3604, 920167782
      %v3618 = vsel %vm3610, %v3601, %v3617
      %v3619 = vsel %vm3609, %v3616, %v3618
      %v3620 = vsel %vm3608, %v3598, %v3601
      %v3621 = vsel %vm3611, %v3607, 1326507024
      %v3622 = vsel %vm3610, %v3604, %v3621
      %v3623 = vsel %vm3609, %v3620, %v3622
      %v3624 = vshll.u32 %v3584, 8
      %v3625 = vand.u32 %v3624, 65535
      %v3626 = vshrl.u32 %v3624, 16
      %v3627 = vand.u32 %v3623, 65535
      %v3628 = vshrl.u32 %v3623, 16
      %v3629 = vmul.u32 %v3625, %v3627
      %v3630 = vmul.u32 %v3625, %v3628
      %v3631 = vmul.u32 %v3626, %v3627
      %v3632 = vmul.u32 %v3626, %v3628
      %v3633 = vshll.u32 %v3630, 16
      %v3634 = vshrl.u32 %v3630, 16
      %v3635 = vshll.u32 %v3631, 16
      %v3636 = vshrl.u32 %v3631, 16
      %vm3637 = vc.u32 %v3629, %v3633
      %v3638 = vsel %vm3637, 1, 0
      %v3639 = vadd.s32 %v3629, %v3633
      %v3640 = vadd.s32 %v3632, %v3638
      %vm3641 = vc.u32 %v3639, %v3635
      %v3642 = vsel %vm3641, 1, 0
      %v3643 = vadd.s32 %v3639, %v3635
      %v3644 = vadd.s32 %v3640, %v3642
      %v3645 = vadd.s32 %v3644, %v3634
      %v3646 = vadd.s32 %v3645, %v3636
      %v3647 = vand.u32 %v3624, 65535
      %v3648 = vshrl.u32 %v3624, 16
      %v3649 = vand.u32 %v3619, 65535
      %v3650 = vshrl.u32 %v3619, 16
      %v3651 = vmul.u32 %v3647, %v3649
      %v3652 = vmul.u32 %v3647, %v3650
      %v3653 = vmul.u32 %v3648, %v3649
      %v3654 = vmul.u32 %v3648, %v3650
      %v3655 = vshll.u32 %v3652, 16
      %v3656 = vshrl.u32 %v3652, 16
      %v3657 = vshll.u32 %v3653, 16
      %v3658 = vshrl.u32 %v3653, 16
      %vm3659 = vc.u32 %v3651, %v3655
      %v3660 = vsel %vm3659, 1, 0
      %v3661 = vadd.s32 %v3651, %v3655
      %v3662 = vadd.s32 %v3654, %v3660
      %vm3663 = vc.u32 %v3661, %v3657
      %v3664 = vsel %vm3663, 1, 0
      %v3665 = vadd.s32 %v3661, %v3657
      %v3666 = vadd.s32 %v3662, %v3664
      %v3667 = vadd.s32 %v3666, %v3656
      %v3668 = vadd.s32 %v3667, %v3658
      %v3669 = vmul.u32 %v3624, %v3615
      %v3670 = vadd.s32 %v3646, %v3665
      %vm3671 = vc.u32 %v3646, %v3665
      %v3672 = vadd.s32 %v3668, 1
      %v3673 = vsel %vm3671, %v3672, %v3668
      %v3674 = vadd.s32 %v3669, %v3673
      %v3675 = vadd.s32 %v3674, 536870912
      %v3676 = vshrl.u32 %v3675, 30
      %v3677 = vshll.u32 %v3676, 30
      %v3678 = vsub.s32 %v3674, %v3677
      %vm3679 = vcmp.lt.s32.totalorder %v3678, 0
      %v3680 = vsub.s32 0, %v3678
      %v3681 = vsel %vm3679, %v3680, %v3678
      %v3682 = vclz %v3681
      %v3683 = vsub.s32 %v3682, 2
      %vm3684 = vcmp.gt.s32.totalorder 0, %v3683
      %v3685 = vsel %vm3684, 0, %v3683
      %v3686 = vsub.s32 32, %v3685
      %v3687 = vshll.u32 %v3678, %v3685
      %v3688 = vshrl.u32 %v3670, %v3686
      %v3689 = vor.u32 %v3687, %v3688
      %v3690 = vsub.s32 4294967266, %v3685
      %v3691 = vadd.s32 %v3690, 127
      %v3692 = vshll.u32 %v3691, 23
      %v3693 = vor.u32 4788187, %v3692
      %v3694 = vand.u32 2147483647, %v3693
      %v3696 = vcvt.s32.f32 %v3689
      %v3697 = vmul.f32 %v3696, %v3694
      %v3698 = vxor.u32 %v3697, 2147483648
      %v3699 = vsel %vm3578, %v3698, %v3697
      %v3700 = vsub.s32 4, %v3676
      %v3701 = vsel %vm3578, %v3700, %v3676
      %v3702 = vsel %vm3577, %v1712, %v3699
      %v3703 = vsel %vm3577, 0, %v3701
      %v3704 = vmul.f32 %v3702, %v3702
      %v3705 = vmul.f32 %v3704, -0.001358992
      %v3706 = vadd.f32 %v3705, 0.041655596
      %v3707 = vmul.f32 %v3704, %v3706
      %v3708 = vadd.f32 %v3707, -0.4999988
      %v3709 = vmul.f32 %v3704, %v3708
      %v3710 = vadd.f32 1.0, %v3709
      %v3711 = vmul.f32 %v3702, %v3702
      %v3712 = vmul.f32 %v3711, -0.00019511016
      %v3713 = vadd.f32 %v3712, 0.008332121
      %v3714 = vmul.f32 %v3711, %v3713
      %v3715 = vadd.f32 %v3714, -0.16666654
      %v3716 = vmul.f32 %v3711, %v3715
      %v3717 = vadd.f32 %v3716, 1.0
      %v3718 = vmul.f32 %v3717, %v3702
      %vm3719 = vweird.f32 %v1712
      %v3720 = vadd.s32 %v3703, 3
      %v3721 = vand.u32 %v3720, 3
      %vm3722 = vcmp.lt.s32.totalorder %v3721, 2
      %vm3723 = vcmp.eq.s32.totalorder %v3721, 0
      %v3724 = vxor.u32 %v3718, 2147483648
      %v3725 = vsel %vm3723, %v3710, %v3724
      %vm3726 = vcmp.eq.s32.totalorder %v3721, 2
      %v3727 = vxor.u32 %v3710, 2147483648
      %v3728 = vsel %vm3726, %v3727, %v3718
      %v3729 = vsel %vm3722, %v3725, %v3728
      %v3730 = vsel %vm3719, nan, %v3729
      %v3731 = vand.u32 2147483647, %v1713
      %vm3732 = vcmp.le.f32.partialorder %v3731, 0.7853982
      %vm3733 = vcmp.lt.s32.totalorder %v1713, 0
      %v3734 = vand.u32 %v1713, 2139095040
      %v3735 = vshrl.u32 %v3734, 23
      %v3736 = vsub.s32 %v3735, 127
      %v3737 = vand.u32 2147483647, %v1713
      %v3738 = vand.u32 %v3737, 8388607
      %v3739 = vor.u32 %v3738, 8388608
      %v3740 = vsub.s32 0, %v3739
      %v3741 = vadd.s32 %v3736, 1
      %vm3742 = vcmp.gt.s32.totalorder %v3741, 0
      %v3743 = vsel %vm3742, %v3741, 0
      %v3744 = vshrl.u32 %v3743, 5
      %v3745 = vand.u32 %v3743, 31
      %v3746 = vsub.s32 32, %v3745
      %v3747 = vshrl.u32 683565275, %v3746
      %v3748 = vshll.u32 683565275, %v3745
      %v3749 = vshrl.u32 2475754826, %v3746
      %v3750 = vor.u32 %v3748, %v3749
      %v3751 = vshll.u32 2475754826, %v3745
      %v3752 = vshrl.u32 2131351028, %v3746
      %v3753 = vor.u32 %v3751, %v3752
      %v3754 = vshll.u32 2131351028, %v3745
      %v3755 = vshrl.u32 2102212464, %v3746
      %v3756 = vor.u32 %v3754, %v3755
      %v3757 = vshll.u32 2102212464, %v3745
      %v3758 = vshrl.u32 920167782, %v3746
      %v3759 = vor.u32 %v3757, %v3758
      %v3760 = vshll.u32 920167782, %v3745
      %v3761 = vshrl.u32 1326507024, %v3746
      %v3762 = vor.u32 %v3760, %v3761
      %vm3763 = vcmp.lt.s32.totalorder %v3744, 1
      %vm3764 = vcmp.lt.s32.totalorder %v3744, 2
      %vm3765 = vcmp.lt.s32.totalorder %v3744, 3
      %vm3766 = vcmp.lt.s32.totalorder %v3744, 4
      %v3767 = vsel %vm3763, %v3747, %v3750
      %v3768 = vsel %vm3766, %v3756, 2102212464
      %v3769 = vsel %vm3765, %v3753, %v3768
      %v3770 = vsel %vm3764, %v3767, %v3769
      %v3771 = vsel %vm3763, %v3750, %v3753
      %v3772 = vsel %vm3766, %v3759, 920167782
      %v3773 = vsel %vm3765, %v3756, %v3772
      %v3774 = vsel %vm3764, %v3771, %v3773
      %v3775 = vsel %vm3763, %v3753, %v3756
      %v3776 = vsel %vm3766, %v3762, 1326507024
      %v3777 = vsel %vm3765, %v3759, %v3776
      %v3778 = vsel %vm3764, %v3775, %v3777
      %v3779 = vshll.u32 %v3739, 8
      %v3780 = vand.u32 %v3779, 65535
      %v3781 = vshrl.u32 %v3779, 16
      %v3782 = vand.u32 %v3778, 65535
      %v3783 = vshrl.u32 %v3778, 16
      %v3784 = vmul.u32 %v3780, %v3782
      %v3785 = vmul.u32 %v3780, %v3783
      %v3786 = vmul.u32 %v3781, %v3782
      %v3787 = vmul.u32 %v3781, %v3783
      %v3788 = vshll.u32 %v3785, 16
      %v3789 = vshrl.u32 %v3785, 16
      %v3790 = vshll.u32 %v3786, 16
      %v3791 = vshrl.u32 %v3786, 16
      %vm3792 = vc.u32 %v3784, %v3788
      %v3793 = vsel %vm3792, 1, 0
      %v3794 = vadd.s32 %v3784, %v3788
      %v3795 = vadd.s32 %v3787, %v3793
      %vm3796 = vc.u32 %v3794, %v3790
      %v3797 = vsel %vm3796, 1, 0
      %v3798 = vadd.s32 %v3794, %v3790
      %v3799 = vadd.s32 %v3795, %v3797
      %v3800 = vadd.s32 %v3799, %v3789
      %v3801 = vadd.s32 %v3800, %v3791
      %v3802 = vand.u32 %v3779, 65535
      %v3803 = vshrl.u32 %v3779, 16
      %v3804 = vand.u32 %v3774, 65535
      %v3805 = vshrl.u32 %v3774, 16
      %v3806 = vmul.u32 %v3802, %v3804
      %v3807 = vmul.u32 %v3802, %v3805
      %v3808 = vmul.u32 %v3803, %v3804
      %v3809 = vmul.u32 %v3803, %v3805
      %v3810 = vshll.u32 %v3807, 16
      %v3811 = vshrl.u32 %v3807, 16
      %v3812 = vshll.u32 %v3808, 16
      %v3813 = vshrl.u32 %v3808, 16
      %vm3814 = vc.u32 %v3806, %v3810
      %v3815 = vsel %vm3814, 1, 0
      %v3816 = vadd.s32 %v3806, %v3810
      %v3817 = vadd.s32 %v3809, %v3815
      %vm3818 = vc.u32 %v3816, %v3812
      %v3819 = vsel %vm3818, 1, 0
      %v3820 = vadd.s32 %v3816, %v3812
      %v3821 = vadd.s32 %v3817, %v3819
      %v3822 = vadd.s32 %v3821, %v3811
      %v3823 = vadd.s32 %v3822, %v3813
      %v3824 = vmul.u32 %v3779, %v3770
      %v3825 = vadd.s32 %v3801, %v3820
      %vm3826 = vc.u32 %v3801, %v3820
      %v3827 = vadd.s32 %v3823, 1
      %v3828 = vsel %vm3826, %v3827, %v3823
      %v3829 = vadd.s32 %v3824, %v3828
      %v3830 = vadd.s32 %v3829, 536870912
      %v3831 = vshrl.u32 %v3830, 30
      %v3832 = vshll.u32 %v3831, 30
      %v3833 = vsub.s32 %v3829, %v3832
      %vm3834 = vcmp.lt.s32.totalorder %v3833, 0
      %v3835 = vsub.s32 0, %v3833
      %v3836 = vsel %vm3834, %v3835, %v3833
      %v3837 = vclz %v3836
      %v3838 = vsub.s32 %v3837, 2
      %vm3839 = vcmp.gt.s32.totalorder 0, %v3838
      %v3840 = vsel %vm3839, 0, %v3838
      %v3841 = vsub.s32 32, %v3840
      %v3842 = vshll.u32 %v3833, %v3840
      %v3843 = vshrl.u32 %v3825, %v3841
      %v3844 = vor.u32 %v3842, %v3843
      %v3845 = vsub.s32 4294967266, %v3840
      %v3846 = vadd.s32 %v3845, 127
      %v3847 = vshll.u32 %v3846, 23
      %v3848 = vor.u32 4788187, %v3847
      %v3849 = vand.u32 2147483647, %v3848
      %v3851 = vcvt.s32.f32 %v3844
      %v3852 = vmul.f32 %v3851, %v3849
      %v3853 = vxor.u32 %v3852, 2147483648
      %v3854 = vsel %vm3733, %v3853, %v3852
      %v3855 = vsub.s32 4, %v3831
      %v3856 = vsel %vm3733, %v3855, %v3831
      %v3857 = vsel %vm3732, %v1713, %v3854
      %v3858 = vsel %vm3732, 0, %v3856
      %v3859 = vmul.f32 %v3857, %v3857
      %v3860 = vmul.f32 %v3859, -0.001358992
      %v3861 = vadd.f32 %v3860, 0.041655596
      %v3862 = vmul.f32 %v3859, %v3861
      %v3863 = vadd.f32 %v3862, -0.4999988
      %v3864 = vmul.f32 %v3859, %v3863
      %v3865 = vadd.f32 1.0, %v3864
      %v3866 = vmul.f32 %v3857, %v3857
      %v3867 = vmul.f32 %v3866, -0.00019511016
      %v3868 = vadd.f32 %v3867, 0.008332121
      %v3869 = vmul.f32 %v3866, %v3868
      %v3870 = vadd.f32 %v3869, -0.16666654
      %v3871 = vmul.f32 %v3866, %v3870
      %v3872 = vadd.f32 %v3871, 1.0
      %v3873 = vmul.f32 %v3872, %v3857
      %vm3874 = vweird.f32 %v1713
      %v3875 = vadd.s32 %v3858, 3
      %v3876 = vand.u32 %v3875, 3
      %vm3877 = vcmp.lt.s32.totalorder %v3876, 2
      %vm3878 = vcmp.eq.s32.totalorder %v3876, 0
      %v3879 = vxor.u32 %v3873, 2147483648
      %v3880 = vsel %vm3878, %v3865, %v3879
      %vm3881 = vcmp.eq.s32.totalorder %v3876, 2
      %v3882 = vxor.u32 %v3865, 2147483648
      %v3883 = vsel %vm3881, %v3882, %v3873
      %v3884 = vsel %vm3877, %v3880, %v3883
      %v3885 = vsel %vm3874, nan, %v3884
      %v3886 = vand.u32 2147483647, %v1714
      %vm3887 = vcmp.le.f32.partialorder %v3886, 0.7853982
      %vm3888 = vcmp.lt.s32.totalorder %v1714, 0
      %v3889 = vand.u32 %v1714, 2139095040
      %v3890 = vshrl.u32 %v3889, 23
      %v3891 = vsub.s32 %v3890, 127
      %v3892 = vand.u32 2147483647, %v1714
      %v3893 = vand.u32 %v3892, 8388607
      %v3894 = vor.u32 %v3893, 8388608
      %v3895 = vsub.s32 0, %v3894
      %v3896 = vadd.s32 %v3891, 1
      %vm3897 = vcmp.gt.s32.totalorder %v3896, 0
      %v3898 = vsel %vm3897, %v3896, 0
      %v3899 = vshrl.u32 %v3898, 5
      %v3900 = vand.u32 %v3898, 31
      %v3901 = vsub.s32 32, %v3900
      %v3902 = vshrl.u32 683565275, %v3901
      %v3903 = vshll.u32 683565275, %v3900
      %v3904 = vshrl.u32 2475754826, %v3901
      %v3905 = vor.u32 %v3903, %v3904
      %v3906 = vshll.u32 2475754826, %v3900
      %v3907 = vshrl.u32 2131351028, %v3901
      %v3908 = vor.u32 %v3906, %v3907
      %v3909 = vshll.u32 2131351028, %v3900
      %v3910 = vshrl.u32 2102212464, %v3901
      %v3911 = vor.u32 %v3909, %v3910
      %v3912 = vshll.u32 2102212464, %v3900
      %v3913 = vshrl.u32 920167782, %v3901
      %v3914 = vor.u32 %v3912, %v3913
      %v3915 = vshll.u32 920167782, %v3900
      %v3916 = vshrl.u32 1326507024, %v3901
      %v3917 = vor.u32 %v3915, %v3916
      %vm3918 = vcmp.lt.s32.totalorder %v3899, 1
      %vm3919 = vcmp.lt.s32.totalorder %v3899, 2
      %vm3920 = vcmp.lt.s32.totalorder %v3899, 3
      %vm3921 = vcmp.lt.s32.totalorder %v3899, 4
      %v3922 = vsel %vm3918, %v3902, %v3905
      %v3923 = vsel %vm3921, %v3911, 2102212464
      %v3924 = vsel %vm3920, %v3908, %v3923
      %v3925 = vsel %vm3919, %v3922, %v3924
      %v3926 = vsel %vm3918, %v3905, %v3908
      %v3927 = vsel %vm3921, %v3914, 920167782
      %v3928 = vsel %vm3920, %v3911, %v3927
      %v3929 = vsel %vm3919, %v3926, %v3928
      %v3930 = vsel %vm3918, %v3908, %v3911
      %v3931 = vsel %vm3921, %v3917, 1326507024
      %v3932 = vsel %vm3920, %v3914, %v3931
      %v3933 = vsel %vm3919, %v3930, %v3932
      %v3934 = vshll.u32 %v3894, 8
      %v3935 = vand.u32 %v3934, 65535
      %v3936 = vshrl.u32 %v3934, 16
      %v3937 = vand.u32 %v3933, 65535
      %v3938 = vshrl.u32 %v3933, 16
      %v3939 = vmul.u32 %v3935, %v3937
      %v3940 = vmul.u32 %v3935, %v3938
      %v3941 = vmul.u32 %v3936, %v3937
      %v3942 = vmul.u32 %v3936, %v3938
      %v3943 = vshll.u32 %v3940, 16
      %v3944 = vshrl.u32 %v3940, 16
      %v3945 = vshll.u32 %v3941, 16
      %v3946 = vshrl.u32 %v3941, 16
      %vm3947 = vc.u32 %v3939, %v3943
      %v3948 = vsel %vm3947, 1, 0
      %v3949 = vadd.s32 %v3939, %v3943
      %v3950 = vadd.s32 %v3942, %v3948
      %vm3951 = vc.u32 %v3949, %v3945
      %v3952 = vsel %vm3951, 1, 0
      %v3953 = vadd.s32 %v3949, %v3945
      %v3954 = vadd.s32 %v3950, %v3952
      %v3955 = vadd.s32 %v3954, %v3944
      %v3956 = vadd.s32 %v3955, %v3946
      %v3957 = vand.u32 %v3934, 65535
      %v3958 = vshrl.u32 %v3934, 16
      %v3959 = vand.u32 %v3929, 65535
      %v3960 = vshrl.u32 %v3929, 16
      %v3961 = vmul.u32 %v3957, %v3959
      %v3962 = vmul.u32 %v3957, %v3960
      %v3963 = vmul.u32 %v3958, %v3959
      %v3964 = vmul.u32 %v3958, %v3960
      %v3965 = vshll.u32 %v3962, 16
      %v3966 = vshrl.u32 %v3962, 16
      %v3967 = vshll.u32 %v3963, 16
      %v3968 = vshrl.u32 %v3963, 16
      %vm3969 = vc.u32 %v3961, %v3965
      %v3970 = vsel %vm3969, 1, 0
      %v3971 = vadd.s32 %v3961, %v3965
      %v3972 = vadd.s32 %v3964, %v3970
      %vm3973 = vc.u32 %v3971, %v3967
      %v3974 = vsel %vm3973, 1, 0
      %v3975 = vadd.s32 %v3971, %v3967
      %v3976 = vadd.s32 %v3972, %v3974
      %v3977 = vadd.s32 %v3976, %v3966
      %v3978 = vadd.s32 %v3977, %v3968
      %v3979 = vmul.u32 %v3934, %v3925
      %v3980 = vadd.s32 %v3956, %v3975
      %vm3981 = vc.u32 %v3956, %v3975
      %v3982 = vadd.s32 %v3978, 1
      %v3983 = vsel %vm3981, %v3982, %v3978
      %v3984 = vadd.s32 %v3979, %v3983
      %v3985 = vadd.s32 %v3984, 536870912
      %v3986 = vshrl.u32 %v3985, 30
      %v3987 = vshll.u32 %v3986, 30
      %v3988 = vsub.s32 %v3984, %v3987
      %vm3989 = vcmp.lt.s32.totalorder %v3988, 0
      %v3990 = vsub.s32 0, %v3988
      %v3991 = vsel %vm3989, %v3990, %v3988
      %v3992 = vclz %v3991
      %v3993 = vsub.s32 %v3992, 2
      %vm3994 = vcmp.gt.s32.totalorder 0, %v3993
      %v3995 = vsel %vm3994, 0, %v3993
      %v3996 = vsub.s32 32, %v3995
      %v3997 = vshll.u32 %v3988, %v3995
      %v3998 = vshrl.u32 %v3980, %v3996
      %v3999 = vor.u32 %v3997, %v3998
      %v4000 = vsub.s32 4294967266, %v3995
      %v4001 = vadd.s32 %v4000, 127
      %v4002 = vshll.u32 %v4001, 23
      %v4003 = vor.u32 4788187, %v4002
      %v4004 = vand.u32 2147483647, %v4003
      %v4006 = vcvt.s32.f32 %v3999
      %v4007 = vmul.f32 %v4006, %v4004
      %v4008 = vxor.u32 %v4007, 2147483648
      %v4009 = vsel %vm3888, %v4008, %v4007
      %v4010 = vsub.s32 4, %v3986
      %v4011 = vsel %vm3888, %v4010, %v3986
      %v4012 = vsel %vm3887, %v1714, %v4009
      %v4013 = vsel %vm3887, 0, %v4011
      %v4014 = vmul.f32 %v4012, %v4012
      %v4015 = vmul.f32 %v4014, -0.001358992
      %v4016 = vadd.f32 %v4015, 0.041655596
      %v4017 = vmul.f32 %v4014, %v4016
      %v4018 = vadd.f32 %v4017, -0.4999988
      %v4019 = vmul.f32 %v4014, %v4018
      %v4020 = vadd.f32 1.0, %v4019
      %v4021 = vmul.f32 %v4012, %v4012
      %v4022 = vmul.f32 %v4021, -0.00019511016
      %v4023 = vadd.f32 %v4022, 0.008332121
      %v4024 = vmul.f32 %v4021, %v4023
      %v4025 = vadd.f32 %v4024, -0.16666654
      %v4026 = vmul.f32 %v4021, %v4025
      %v4027 = vadd.f32 %v4026, 1.0
      %v4028 = vmul.f32 %v4027, %v4012
      %vm4029 = vweird.f32 %v1714
      %v4030 = vadd.s32 %v4013, 3
      %v4031 = vand.u32 %v4030, 3
      %vm4032 = vcmp.lt.s32.totalorder %v4031, 2
      %vm4033 = vcmp.eq.s32.totalorder %v4031, 0
      %v4034 = vxor.u32 %v4028, 2147483648
      %v4035 = vsel %vm4033, %v4020, %v4034
      %vm4036 = vcmp.eq.s32.totalorder %v4031, 2
      %v4037 = vxor.u32 %v4020, 2147483648
      %v4038 = vsel %vm4036, %v4037, %v4028
      %v4039 = vsel %vm4032, %v4035, %v4038
      %v4040 = vsel %vm4029, nan, %v4039
      %v4041 = vand.u32 2147483647, %v1715
      %vm4042 = vcmp.le.f32.partialorder %v4041, 0.7853982
      %vm4043 = vcmp.lt.s32.totalorder %v1715, 0
      %v4044 = vand.u32 %v1715, 2139095040
      %v4045 = vshrl.u32 %v4044, 23
      %v4046 = vsub.s32 %v4045, 127
      %v4047 = vand.u32 2147483647, %v1715
      %v4048 = vand.u32 %v4047, 8388607
      %v4049 = vor.u32 %v4048, 8388608
      %v4050 = vsub.s32 0, %v4049
      %v4051 = vadd.s32 %v4046, 1
      %vm4052 = vcmp.gt.s32.totalorder %v4051, 0
      %v4053 = vsel %vm4052, %v4051, 0
      %v4054 = vshrl.u32 %v4053, 5
      %v4055 = vand.u32 %v4053, 31
      %v4056 = vsub.s32 32, %v4055
      %v4057 = vshrl.u32 683565275, %v4056
      %v4058 = vshll.u32 683565275, %v4055
      %v4059 = vshrl.u32 2475754826, %v4056
      %v4060 = vor.u32 %v4058, %v4059
      %v4061 = vshll.u32 2475754826, %v4055
      %v4062 = vshrl.u32 2131351028, %v4056
      %v4063 = vor.u32 %v4061, %v4062
      %v4064 = vshll.u32 2131351028, %v4055
      %v4065 = vshrl.u32 2102212464, %v4056
      %v4066 = vor.u32 %v4064, %v4065
      %v4067 = vshll.u32 2102212464, %v4055
      %v4068 = vshrl.u32 920167782, %v4056
      %v4069 = vor.u32 %v4067, %v4068
      %v4070 = vshll.u32 920167782, %v4055
      %v4071 = vshrl.u32 1326507024, %v4056
      %v4072 = vor.u32 %v4070, %v4071
      %vm4073 = vcmp.lt.s32.totalorder %v4054, 1
      %vm4074 = vcmp.lt.s32.totalorder %v4054, 2
      %vm4075 = vcmp.lt.s32.totalorder %v4054, 3
      %vm4076 = vcmp.lt.s32.totalorder %v4054, 4
      %v4077 = vsel %vm4073, %v4057, %v4060
      %v4078 = vsel %vm4076, %v4066, 2102212464
      %v4079 = vsel %vm4075, %v4063, %v4078
      %v4080 = vsel %vm4074, %v4077, %v4079
      %v4081 = vsel %vm4073, %v4060, %v4063
      %v4082 = vsel %vm4076, %v4069, 920167782
      %v4083 = vsel %vm4075, %v4066, %v4082
      %v4084 = vsel %vm4074, %v4081, %v4083
      %v4085 = vsel %vm4073, %v4063, %v4066
      %v4086 = vsel %vm4076, %v4072, 1326507024
      %v4087 = vsel %vm4075, %v4069, %v4086
      %v4088 = vsel %vm4074, %v4085, %v4087
      %v4089 = vshll.u32 %v4049, 8
      %v4090 = vand.u32 %v4089, 65535
      %v4091 = vshrl.u32 %v4089, 16
      %v4092 = vand.u32 %v4088, 65535
      %v4093 = vshrl.u32 %v4088, 16
      %v4094 = vmul.u32 %v4090, %v4092
      %v4095 = vmul.u32 %v4090, %v4093
      %v4096 = vmul.u32 %v4091, %v4092
      %v4097 = vmul.u32 %v4091, %v4093
      %v4098 = vshll.u32 %v4095, 16
      %v4099 = vshrl.u32 %v4095, 16
      %v4100 = vshll.u32 %v4096, 16
      %v4101 = vshrl.u32 %v4096, 16
      %vm4102 = vc.u32 %v4094, %v4098
      %v4103 = vsel %vm4102, 1, 0
      %v4104 = vadd.s32 %v4094, %v4098
      %v4105 = vadd.s32 %v4097, %v4103
      %vm4106 = vc.u32 %v4104, %v4100
      %v4107 = vsel %vm4106, 1, 0
      %v4108 = vadd.s32 %v4104, %v4100
      %v4109 = vadd.s32 %v4105, %v4107
      %v4110 = vadd.s32 %v4109, %v4099
      %v4111 = vadd.s32 %v4110, %v4101
      %v4112 = vand.u32 %v4089, 65535
      %v4113 = vshrl.u32 %v4089, 16
      %v4114 = vand.u32 %v4084, 65535
      %v4115 = vshrl.u32 %v4084, 16
      %v4116 = vmul.u32 %v4112, %v4114
      %v4117 = vmul.u32 %v4112, %v4115
      %v4118 = vmul.u32 %v4113, %v4114
      %v4119 = vmul.u32 %v4113, %v4115
      %v4120 = vshll.u32 %v4117, 16
      %v4121 = vshrl.u32 %v4117, 16
      %v4122 = vshll.u32 %v4118, 16
      %v4123 = vshrl.u32 %v4118, 16
      %vm4124 = vc.u32 %v4116, %v4120
      %v4125 = vsel %vm4124, 1, 0
      %v4126 = vadd.s32 %v4116, %v4120
      %v4127 = vadd.s32 %v4119, %v4125
      %vm4128 = vc.u32 %v4126, %v4122
      %v4129 = vsel %vm4128, 1, 0
      %v4130 = vadd.s32 %v4126, %v4122
      %v4131 = vadd.s32 %v4127, %v4129
      %v4132 = vadd.s32 %v4131, %v4121
      %v4133 = vadd.s32 %v4132, %v4123
      %v4134 = vmul.u32 %v4089, %v4080
      %v4135 = vadd.s32 %v4111, %v4130
      %vm4136 = vc.u32 %v4111, %v4130
      %v4137 = vadd.s32 %v4133, 1
      %v4138 = vsel %vm4136, %v4137, %v4133
      %v4139 = vadd.s32 %v4134, %v4138
      %v4140 = vadd.s32 %v4139, 536870912
      %v4141 = vshrl.u32 %v4140, 30
      %v4142 = vshll.u32 %v4141, 30
      %v4143 = vsub.s32 %v4139, %v4142
      %vm4144 = vcmp.lt.s32.totalorder %v4143, 0
      %v4145 = vsub.s32 0, %v4143
      %v4146 = vsel %vm4144, %v4145, %v4143
      %v4147 = vclz %v4146
      %v4148 = vsub.s32 %v4147, 2
      %vm4149 = vcmp.gt.s32.totalorder 0, %v4148
      %v4150 = vsel %vm4149, 0, %v4148
      %v4151 = vsub.s32 32, %v4150
      %v4152 = vshll.u32 %v4143, %v4150
      %v4153 = vshrl.u32 %v4135, %v4151
      %v4154 = vor.u32 %v4152, %v4153
      %v4155 = vsub.s32 4294967266, %v4150
      %v4156 = vadd.s32 %v4155, 127
      %v4157 = vshll.u32 %v4156, 23
      %v4158 = vor.u32 4788187, %v4157
      %v4159 = vand.u32 2147483647, %v4158
      %v4161 = vcvt.s32.f32 %v4154
      %v4162 = vmul.f32 %v4161, %v4159
      %v4163 = vxor.u32 %v4162, 2147483648
      %v4164 = vsel %vm4043, %v4163, %v4162
      %v4165 = vsub.s32 4, %v4141
      %v4166 = vsel %vm4043, %v4165, %v4141
      %v4167 = vsel %vm4042, %v1715, %v4164
      %v4168 = vsel %vm4042, 0, %v4166
      %v4169 = vmul.f32 %v4167, %v4167
      %v4170 = vmul.f32 %v4169, -0.001358992
      %v4171 = vadd.f32 %v4170, 0.041655596
      %v4172 = vmul.f32 %v4169, %v4171
      %v4173 = vadd.f32 %v4172, -0.4999988
      %v4174 = vmul.f32 %v4169, %v4173
      %v4175 = vadd.f32 1.0, %v4174
      %v4176 = vmul.f32 %v4167, %v4167
      %v4177 = vmul.f32 %v4176, -0.00019511016
      %v4178 = vadd.f32 %v4177, 0.008332121
      %v4179 = vmul.f32 %v4176, %v4178
      %v4180 = vadd.f32 %v4179, -0.16666654
      %v4181 = vmul.f32 %v4176, %v4180
      %v4182 = vadd.f32 %v4181, 1.0
      %v4183 = vmul.f32 %v4182, %v4167
      %vm4184 = vweird.f32 %v1715
      %v4185 = vadd.s32 %v4168, 3
      %v4186 = vand.u32 %v4185, 3
      %vm4187 = vcmp.lt.s32.totalorder %v4186, 2
      %vm4188 = vcmp.eq.s32.totalorder %v4186, 0
      %v4189 = vxor.u32 %v4183, 2147483648
      %v4190 = vsel %vm4188, %v4175, %v4189
      %vm4191 = vcmp.eq.s32.totalorder %v4186, 2
      %v4192 = vxor.u32 %v4175, 2147483648
      %v4193 = vsel %vm4191, %v4192, %v4183
      %v4194 = vsel %vm4187, %v4190, %v4193
      %v4195 = vsel %vm4184, nan, %v4194
      %v4196 = vmul.f32 %v1528, %v1870
      %v4197 = vmul.f32 %v1529, %v2025
      %v4198 = vmul.f32 %v1530, %v2180
      %v4199 = vmul.f32 %v1531, %v2335
      %v4200 = vmul.f32 %v1532, %v2490
      %v4201 = vmul.f32 %v1533, %v2645
      %v4202 = vmul.f32 %v1534, %v2800
      %v4203 = vmul.f32 %v1535, %v2955
      %v4204 = vmul.f32 %v1584, %v3110
      %v4205 = vmul.f32 %v1585, %v3265
      %v4206 = vmul.f32 %v1586, %v3420
      %v4207 = vmul.f32 %v1587, %v3575
      %v4208 = vmul.f32 %v1588, %v3730
      %v4209 = vmul.f32 %v1589, %v3885
      %v4210 = vmul.f32 %v1590, %v4040
      %v4211 = vmul.f32 %v1591, %v4195
      %v4212 = vld [vmem:[%s1 + $0x10] sm:$0xff]
      %v4213 = vld [vmem:[%s1 + $0x18] sm:$0xff]
      %v4214 = vld [vmem:[%s1 + $0x20] sm:$0xff]
      %v4215 = vld [vmem:[%s1 + $0x28] sm:$0xff]
      %4217 = vset.pattern.permute.xlu0 37
      %4218 = vperm.xlu0 %4217, %v4212
      %v4219 = vpop.permute.xlu0 %4218
      %4222 = vset.pattern.permute.xlu0 37
      %4223 = vperm.xlu0 %4222, %v4213
      %v4224 = vpop.permute.xlu0 %4223
      %4227 = vset.pattern.permute.xlu0 37
      %4228 = vperm.xlu0 %4227, %v4214
      %v4229 = vpop.permute.xlu0 %4228
      %4232 = vset.pattern.permute.xlu0 37
      %4233 = vperm.xlu0 %4232, %v4215
      %v4234 = vpop.permute.xlu0 %4233
      %vm4236 = vcmask 130048
      %v4237 = vsel %vm4236, %v4212, 0
      %v4239 = vsel %vm4236, %v4213, 0
      %v4241 = vsel %vm4236, %v4214, 0
      %v4243 = vsel %vm4236, %v4215, 0
      %4245 = vmatpush.msra.mxu0 0.0
      %4246 = vmatpush.msra.mxu0 0.0
      %4247 = vmatpush.msra.mxu0 0.0
      %4248 = vmatpush.msra.mxu0 0.0
      %4249 = vmatpush.msra.mxu0 0.0
      %4250 = vmatpush.msra.mxu0 0.0
      %4251 = vmatpush.msra.mxu0 0.0
      %4252 = vmatpush.msra.mxu0 0.0
      %4253 = vmatpush.msra.mxu0 0.0
      %4254 = vmatpush.msra.mxu0 0.0
      %4255 = vmatpush.msra.mxu0 0.0
      %4256 = vmatpush.msra.mxu0 0.0
      %4257 = vmatpush.msra.mxu0 0.0
      %4258 = vmatpush.msra.mxu0 0.0
      %4259 = vmatpush.msra.mxu0 %v4204
      %4260 = vmatpush.msra.mxu0 %v4196
      %4261 = vmatmul.f32.gmra.mxu0 %v4237
      %v4262 = vpop.f32.mrf.mxu0
      %v4263 = vadd.f32 %v4219, %v4262
      %4264 = vmatmul.f32.gmra.mxu0 %v4239
      %v4265 = vpop.f32.mrf.mxu0
      %v4266 = vadd.f32 %v4224, %v4265
      %4267 = vmatmul.f32.gmra.mxu0 %v4241
      %v4268 = vpop.f32.mrf.mxu0
      %v4269 = vadd.f32 %v4229, %v4268
      %4270 = vmatmul.f32.gmra.mxu0 %v4243
      %v4271 = vpop.f32.mrf.mxu0
      %v4272 = vadd.f32 %v4234, %v4271
      %4273 = vdwg.mxu0
      %4274 = vmatpush.msra.mxu0 0.0
      %4275 = vmatpush.msra.mxu0 0.0
      %4276 = vmatpush.msra.mxu0 0.0
      %4277 = vmatpush.msra.mxu0 0.0
      %4278 = vmatpush.msra.mxu0 0.0
      %4279 = vmatpush.msra.mxu0 0.0
      %4280 = vmatpush.msra.mxu0 0.0
      %4281 = vmatpush.msra.mxu0 0.0
      %4282 = vmatpush.msra.mxu0 0.0
      %4283 = vmatpush.msra.mxu0 0.0
      %4284 = vmatpush.msra.mxu0 0.0
      %4285 = vmatpush.msra.mxu0 0.0
      %4286 = vmatpush.msra.mxu0 0.0
      %4287 = vmatpush.msra.mxu0 0.0
      %4288 = vmatpush.msra.mxu0 %v4205
      %4289 = vmatpush.msra.mxu0 %v4197
      %4290 = vmatmul.f32.gmra.mxu0 %v4237
      %v4291 = vpop.f32.mrf.mxu0
      %v4292 = vadd.f32 %v4219, %v4291
      %4293 = vmatmul.f32.gmra.mxu0 %v4239
      %v4294 = vpop.f32.mrf.mxu0
      %v4295 = vadd.f32 %v4224, %v4294
      %4296 = vmatmul.f32.gmra.mxu0 %v4241
      %v4297 = vpop.f32.mrf.mxu0
      %v4298 = vadd.f32 %v4229, %v4297
      %4299 = vmatmul.f32.gmra.mxu0 %v4243
      %v4300 = vpop.f32.mrf.mxu0
      %v4301 = vadd.f32 %v4234, %v4300
      %4302 = vdwg.mxu0
      %4303 = vmatpush.msra.mxu0 0.0
      %4304 = vmatpush.msra.mxu0 0.0
      %4305 = vmatpush.msra.mxu0 0.0
      %4306 = vmatpush.msra.mxu0 0.0
      %4307 = vmatpush.msra.mxu0 0.0
      %4308 = vmatpush.msra.mxu0 0.0
      %4309 = vmatpush.msra.mxu0 0.0
      %4310 = vmatpush.msra.mxu0 0.0
      %4311 = vmatpush.msra.mxu0 0.0
      %4312 = vmatpush.msra.mxu0 0.0
      %4313 = vmatpush.msra.mxu0 0.0
      %4314 = vmatpush.msra.mxu0 0.0
      %4315 = vmatpush.msra.mxu0 0.0
      %4316 = vmatpush.msra.mxu0 0.0
      %4317 = vmatpush.msra.mxu0 %v4206
      %4318 = vmatpush.msra.mxu0 %v4198
      %4319 = vmatmul.f32.gmra.mxu0 %v4237
      %v4320 = vpop.f32.mrf.mxu0
      %v4321 = vadd.f32 %v4219, %v4320
      %4322 = vmatmul.f32.gmra.mxu0 %v4239
      %v4323 = vpop.f32.mrf.mxu0
      %v4324 = vadd.f32 %v4224, %v4323
      %4325 = vmatmul.f32.gmra.mxu0 %v4241
      %v4326 = vpop.f32.mrf.mxu0
      %v4327 = vadd.f32 %v4229, %v4326
      %4328 = vmatmul.f32.gmra.mxu0 %v4243
      %v4329 = vpop.f32.mrf.mxu0
      %v4330 = vadd.f32 %v4234, %v4329
      %4331 = vdwg.mxu0
      %4332 = vmatpush.msra.mxu0 0.0
      %4333 = vmatpush.msra.mxu0 0.0
      %4334 = vmatpush.msra.mxu0 0.0
      %4335 = vmatpush.msra.mxu0 0.0
      %4336 = vmatpush.msra.mxu0 0.0
      %4337 = vmatpush.msra.mxu0 0.0
      %4338 = vmatpush.msra.mxu0 0.0
      %4339 = vmatpush.msra.mxu0 0.0
      %4340 = vmatpush.msra.mxu0 0.0
      %4341 = vmatpush.msra.mxu0 0.0
      %4342 = vmatpush.msra.mxu0 0.0
      %4343 = vmatpush.msra.mxu0 0.0
      %4344 = vmatpush.msra.mxu0 0.0
      %4345 = vmatpush.msra.mxu0 0.0
      %4346 = vmatpush.msra.mxu0 %v4207
      %4347 = vmatpush.msra.mxu0 %v4199
      %4348 = vmatmul.f32.gmra.mxu0 %v4237
      %v4349 = vpop.f32.mrf.mxu0
      %v4350 = vadd.f32 %v4219, %v4349
      %4351 = vmatmul.f32.gmra.mxu0 %v4239
      %v4352 = vpop.f32.mrf.mxu0
      %v4353 = vadd.f32 %v4224, %v4352
      %4354 = vmatmul.f32.gmra.mxu0 %v4241
      %v4355 = vpop.f32.mrf.mxu0
      %v4356 = vadd.f32 %v4229, %v4355
      %4357 = vmatmul.f32.gmra.mxu0 %v4243
      %v4358 = vpop.f32.mrf.mxu0
      %v4359 = vadd.f32 %v4234, %v4358
      %4360 = vdwg.mxu0
      %4361 = vmatpush.msra.mxu0 0.0
      %4362 = vmatpush.msra.mxu0 0.0
      %4363 = vmatpush.msra.mxu0 0.0
      %4364 = vmatpush.msra.mxu0 0.0
      %4365 = vmatpush.msra.mxu0 0.0
      %4366 = vmatpush.msra.mxu0 0.0
      %4367 = vmatpush.msra.mxu0 0.0
      %4368 = vmatpush.msra.mxu0 0.0
      %4369 = vmatpush.msra.mxu0 0.0
      %4370 = vmatpush.msra.mxu0 0.0
      %4371 = vmatpush.msra.mxu0 0.0
      %4372 = vmatpush.msra.mxu0 0.0
      %4373 = vmatpush.msra.mxu0 0.0
      %4374 = vmatpush.msra.mxu0 0.0
      %4375 = vmatpush.msra.mxu0 %v4208
      %4376 = vmatpush.msra.mxu0 %v4200
      %4377 = vmatmul.f32.gmra.mxu0 %v4237
      %v4378 = vpop.f32.mrf.mxu0
      %v4379 = vadd.f32 %v4219, %v4378
      %4380 = vmatmul.f32.gmra.mxu0 %v4239
      %v4381 = vpop.f32.mrf.mxu0
      %v4382 = vadd.f32 %v4224, %v4381
      %4383 = vmatmul.f32.gmra.mxu0 %v4241
      %v4384 = vpop.f32.mrf.mxu0
      %v4385 = vadd.f32 %v4229, %v4384
      %4386 = vmatmul.f32.gmra.mxu0 %v4243
      %v4387 = vpop.f32.mrf.mxu0
      %v4388 = vadd.f32 %v4234, %v4387
      %4389 = vdwg.mxu0
      %4390 = vmatpush.msra.mxu0 0.0
      %4391 = vmatpush.msra.mxu0 0.0
      %4392 = vmatpush.msra.mxu0 0.0
      %4393 = vmatpush.msra.mxu0 0.0
      %4394 = vmatpush.msra.mxu0 0.0
      %4395 = vmatpush.msra.mxu0 0.0
      %4396 = vmatpush.msra.mxu0 0.0
      %4397 = vmatpush.msra.mxu0 0.0
      %4398 = vmatpush.msra.mxu0 0.0
      %4399 = vmatpush.msra.mxu0 0.0
      %4400 = vmatpush.msra.mxu0 0.0
      %4401 = vmatpush.msra.mxu0 0.0
      %4402 = vmatpush.msra.mxu0 0.0
      %4403 = vmatpush.msra.mxu0 0.0
      %4404 = vmatpush.msra.mxu0 %v4209
      %4405 = vmatpush.msra.mxu0 %v4201
      %4406 = vmatmul.f32.gmra.mxu0 %v4237
      %v4407 = vpop.f32.mrf.mxu0
      %v4408 = vadd.f32 %v4219, %v4407
      %4409 = vmatmul.f32.gmra.mxu0 %v4239
      %v4410 = vpop.f32.mrf.mxu0
      %v4411 = vadd.f32 %v4224, %v4410
      %4412 = vmatmul.f32.gmra.mxu0 %v4241
      %v4413 = vpop.f32.mrf.mxu0
      %v4414 = vadd.f32 %v4229, %v4413
      %4415 = vmatmul.f32.gmra.mxu0 %v4243
      %v4416 = vpop.f32.mrf.mxu0
      %v4417 = vadd.f32 %v4234, %v4416
      %4418 = vdwg.mxu0
      %4419 = vmatpush.msra.mxu0 0.0
      %4420 = vmatpush.msra.mxu0 0.0
      %4421 = vmatpush.msra.mxu0 0.0
      %4422 = vmatpush.msra.mxu0 0.0
      %4423 = vmatpush.msra.mxu0 0.0
      %4424 = vmatpush.msra.mxu0 0.0
      %4425 = vmatpush.msra.mxu0 0.0
      %4426 = vmatpush.msra.mxu0 0.0
      %4427 = vmatpush.msra.mxu0 0.0
      %4428 = vmatpush.msra.mxu0 0.0
      %4429 = vmatpush.msra.mxu0 0.0
      %4430 = vmatpush.msra.mxu0 0.0
      %4431 = vmatpush.msra.mxu0 0.0
      %4432 = vmatpush.msra.mxu0 0.0
      %4433 = vmatpush.msra.mxu0 %v4210
      %4434 = vmatpush.msra.mxu0 %v4202
      %4435 = vmatmul.f32.gmra.mxu0 %v4237
      %v4436 = vpop.f32.mrf.mxu0
      %v4437 = vadd.f32 %v4219, %v4436
      %4438 = vmatmul.f32.gmra.mxu0 %v4239
      %v4439 = vpop.f32.mrf.mxu0
      %v4440 = vadd.f32 %v4224, %v4439
      %4441 = vmatmul.f32.gmra.mxu0 %v4241
      %v4442 = vpop.f32.mrf.mxu0
      %v4443 = vadd.f32 %v4229, %v4442
      %4444 = vmatmul.f32.gmra.mxu0 %v4243
      %v4445 = vpop.f32.mrf.mxu0
      %v4446 = vadd.f32 %v4234, %v4445
      %4447 = vdwg.mxu0
      %4448 = vmatpush.msra.mxu0 0.0
      %4449 = vmatpush.msra.mxu0 0.0
      %4450 = vmatpush.msra.mxu0 0.0
      %4451 = vmatpush.msra.mxu0 0.0
      %4452 = vmatpush.msra.mxu0 0.0
      %4453 = vmatpush.msra.mxu0 0.0
      %4454 = vmatpush.msra.mxu0 0.0
      %4455 = vmatpush.msra.mxu0 0.0
      %4456 = vmatpush.msra.mxu0 0.0
      %4457 = vmatpush.msra.mxu0 0.0
      %4458 = vmatpush.msra.mxu0 0.0
      %4459 = vmatpush.msra.mxu0 0.0
      %4460 = vmatpush.msra.mxu0 0.0
      %4461 = vmatpush.msra.mxu0 0.0
      %4462 = vmatpush.msra.mxu0 %v4211
      %4463 = vmatpush.msra.mxu0 %v4203
      %4464 = vmatmul.f32.gmra.mxu0 %v4237
      %v4465 = vpop.f32.mrf.mxu0
      %v4466 = vadd.f32 %v4219, %v4465
      %4467 = vmatmul.f32.gmra.mxu0 %v4239
      %v4468 = vpop.f32.mrf.mxu0
      %v4469 = vadd.f32 %v4224, %v4468
      %4470 = vmatmul.f32.gmra.mxu0 %v4241
      %v4471 = vpop.f32.mrf.mxu0
      %v4472 = vadd.f32 %v4229, %v4471
      %4473 = vmatmul.f32.gmra.mxu0 %v4243
      %v4474 = vpop.f32.mrf.mxu0
      %v4475 = vadd.f32 %v4234, %v4474
      %4476 = vdwg.mxu0
      %v4477 = vmax.f32 %v4263, 0.0
      %v4478 = vmax.f32 %v4292, 0.0
      %v4479 = vmax.f32 %v4321, 0.0
      %v4480 = vmax.f32 %v4350, 0.0
      %v4481 = vmax.f32 %v4379, 0.0
      %v4482 = vmax.f32 %v4408, 0.0
      %v4483 = vmax.f32 %v4437, 0.0
      %v4484 = vmax.f32 %v4466, 0.0
      %v4485 = vmax.f32 %v4266, 0.0
      %v4486 = vmax.f32 %v4295, 0.0
      %v4487 = vmax.f32 %v4324, 0.0
      %v4488 = vmax.f32 %v4353, 0.0
      %v4489 = vmax.f32 %v4382, 0.0
      %v4490 = vmax.f32 %v4411, 0.0
      %v4491 = vmax.f32 %v4440, 0.0
      %v4492 = vmax.f32 %v4469, 0.0
      %v4493 = vmax.f32 %v4269, 0.0
      %v4494 = vmax.f32 %v4298, 0.0
      %v4495 = vmax.f32 %v4327, 0.0
      %v4496 = vmax.f32 %v4356, 0.0
      %v4497 = vmax.f32 %v4385, 0.0
      %v4498 = vmax.f32 %v4414, 0.0
      %v4499 = vmax.f32 %v4443, 0.0
      %v4500 = vmax.f32 %v4472, 0.0
      %v4501 = vmax.f32 %v4272, 0.0
      %v4502 = vmax.f32 %v4301, 0.0
      %v4503 = vmax.f32 %v4330, 0.0
      %v4504 = vmax.f32 %v4359, 0.0
      %v4505 = vmax.f32 %v4388, 0.0
      %v4506 = vmax.f32 %v4417, 0.0
      %v4507 = vmax.f32 %v4446, 0.0
      %v4508 = vmax.f32 %v4475, 0.0
      %v4509 = vld [vmem:[%s1 + $0x30] sm:$0xff]
      %v4510 = vld [vmem:[%s1 + $0x38] sm:$0xff]
      %v4511 = vld [vmem:[%s1 + $0x40] sm:$0xff]
      %v4512 = vld [vmem:[%s1 + $0x48] sm:$0xff]
      %4514 = vset.pattern.permute.xlu0 37
      %4515 = vperm.xlu0 %4514, %v4509
      %v4516 = vpop.permute.xlu0 %4515
      %4519 = vset.pattern.permute.xlu0 37
      %4520 = vperm.xlu0 %4519, %v4510
      %v4521 = vpop.permute.xlu0 %4520
      %4524 = vset.pattern.permute.xlu0 37
      %4525 = vperm.xlu0 %4524, %v4511
      %v4526 = vpop.permute.xlu0 %4525
      %4529 = vset.pattern.permute.xlu0 37
      %4530 = vperm.xlu0 %4529, %v4512
      %v4531 = vpop.permute.xlu0 %4530
      %vm4533 = vcmask 261120
      %v4534 = vsel %vm4533, %v4509, 0
      %v4536 = vsel %vm4533, %v4510, 0
      %v4538 = vsel %vm4533, %v4511, 0
      %v4540 = vsel %vm4533, %v4512, 0
      %4542 = vmatpush.msra.mxu0 0.0
      %4543 = vmatpush.msra.mxu0 0.0
      %4544 = vmatpush.msra.mxu0 0.0
      %4545 = vmatpush.msra.mxu0 0.0
      %4546 = vmatpush.msra.mxu0 0.0
      %4547 = vmatpush.msra.mxu0 0.0
      %4548 = vmatpush.msra.mxu0 0.0
      %4549 = vmatpush.msra.mxu0 0.0
      %4550 = vmatpush.msra.mxu0 0.0
      %4551 = vmatpush.msra.mxu0 0.0
      %4552 = vmatpush.msra.mxu0 0.0
      %4553 = vmatpush.msra.mxu0 0.0
      %4554 = vmatpush.msra.mxu0 %v4501
      %4555 = vmatpush.msra.mxu0 %v4493
      %4556 = vmatpush.msra.mxu0 %v4485
      %4557 = vmatpush.msra.mxu0 %v4477
      %4558 = vmatmul.f32.gmra.mxu0 %v4534
      %v4559 = vpop.f32.mrf.mxu0
      %v4560 = vadd.f32 %v4516, %v4559
      %4561 = vmatmul.f32.gmra.mxu0 %v4536
      %v4562 = vpop.f32.mrf.mxu0
      %v4563 = vadd.f32 %v4521, %v4562
      %4564 = vmatmul.f32.gmra.mxu0 %v4538
      %v4565 = vpop.f32.mrf.mxu0
      %v4566 = vadd.f32 %v4526, %v4565
      %4567 = vmatmul.f32.gmra.mxu0 %v4540
      %v4568 = vpop.f32.mrf.mxu0
      %v4569 = vadd.f32 %v4531, %v4568
      %4570 = vdwg.mxu0
      %4571 = vmatpush.msra.mxu0 0.0
      %4572 = vmatpush.msra.mxu0 0.0
      %4573 = vmatpush.msra.mxu0 0.0
      %4574 = vmatpush.msra.mxu0 0.0
      %4575 = vmatpush.msra.mxu0 0.0
      %4576 = vmatpush.msra.mxu0 0.0
      %4577 = vmatpush.msra.mxu0 0.0
      %4578 = vmatpush.msra.mxu0 0.0
      %4579 = vmatpush.msra.mxu0 0.0
      %4580 = vmatpush.msra.mxu0 0.0
      %4581 = vmatpush.msra.mxu0 0.0
      %4582 = vmatpush.msra.mxu0 0.0
      %4583 = vmatpush.msra.mxu0 %v4502
      %4584 = vmatpush.msra.mxu0 %v4494
      %4585 = vmatpush.msra.mxu0 %v4486
      %4586 = vmatpush.msra.mxu0 %v4478
      %4587 = vmatmul.f32.gmra.mxu0 %v4534
      %v4588 = vpop.f32.mrf.mxu0
      %v4589 = vadd.f32 %v4516, %v4588
      %4590 = vmatmul.f32.gmra.mxu0 %v4536
      %v4591 = vpop.f32.mrf.mxu0
      %v4592 = vadd.f32 %v4521, %v4591
      %4593 = vmatmul.f32.gmra.mxu0 %v4538
      %v4594 = vpop.f32.mrf.mxu0
      %v4595 = vadd.f32 %v4526, %v4594
      %4596 = vmatmul.f32.gmra.mxu0 %v4540
      %v4597 = vpop.f32.mrf.mxu0
      %v4598 = vadd.f32 %v4531, %v4597
      %4599 = vdwg.mxu0
      %4600 = vmatpush.msra.mxu0 0.0
      %4601 = vmatpush.msra.mxu0 0.0
      %4602 = vmatpush.msra.mxu0 0.0
      %4603 = vmatpush.msra.mxu0 0.0
      %4604 = vmatpush.msra.mxu0 0.0
      %4605 = vmatpush.msra.mxu0 0.0
      %4606 = vmatpush.msra.mxu0 0.0
      %4607 = vmatpush.msra.mxu0 0.0
      %4608 = vmatpush.msra.mxu0 0.0
      %4609 = vmatpush.msra.mxu0 0.0
      %4610 = vmatpush.msra.mxu0 0.0
      %4611 = vmatpush.msra.mxu0 0.0
      %4612 = vmatpush.msra.mxu0 %v4503
      %4613 = vmatpush.msra.mxu0 %v4495
      %4614 = vmatpush.msra.mxu0 %v4487
      %4615 = vmatpush.msra.mxu0 %v4479
      %4616 = vmatmul.f32.gmra.mxu0 %v4534
      %v4617 = vpop.f32.mrf.mxu0
      %v4618 = vadd.f32 %v4516, %v4617
      %4619 = vmatmul.f32.gmra.mxu0 %v4536
      %v4620 = vpop.f32.mrf.mxu0
      %v4621 = vadd.f32 %v4521, %v4620
      %4622 = vmatmul.f32.gmra.mxu0 %v4538
      %v4623 = vpop.f32.mrf.mxu0
      %v4624 = vadd.f32 %v4526, %v4623
      %4625 = vmatmul.f32.gmra.mxu0 %v4540
      %v4626 = vpop.f32.mrf.mxu0
      %v4627 = vadd.f32 %v4531, %v4626
      %4628 = vdwg.mxu0
      %4629 = vmatpush.msra.mxu0 0.0
      %4630 = vmatpush.msra.mxu0 0.0
      %4631 = vmatpush.msra.mxu0 0.0
      %4632 = vmatpush.msra.mxu0 0.0
      %4633 = vmatpush.msra.mxu0 0.0
      %4634 = vmatpush.msra.mxu0 0.0
      %4635 = vmatpush.msra.mxu0 0.0
      %4636 = vmatpush.msra.mxu0 0.0
      %4637 = vmatpush.msra.mxu0 0.0
      %4638 = vmatpush.msra.mxu0 0.0
      %4639 = vmatpush.msra.mxu0 0.0
      %4640 = vmatpush.msra.mxu0 0.0
      %4641 = vmatpush.msra.mxu0 %v4504
      %4642 = vmatpush.msra.mxu0 %v4496
      %4643 = vmatpush.msra.mxu0 %v4488
      %4644 = vmatpush.msra.mxu0 %v4480
      %4645 = vmatmul.f32.gmra.mxu0 %v4534
      %v4646 = vpop.f32.mrf.mxu0
      %v4647 = vadd.f32 %v4516, %v4646
      %4648 = vmatmul.f32.gmra.mxu0 %v4536
      %v4649 = vpop.f32.mrf.mxu0
      %v4650 = vadd.f32 %v4521, %v4649
      %4651 = vmatmul.f32.gmra.mxu0 %v4538
      %v4652 = vpop.f32.mrf.mxu0
      %v4653 = vadd.f32 %v4526, %v4652
      %4654 = vmatmul.f32.gmra.mxu0 %v4540
      %v4655 = vpop.f32.mrf.mxu0
      %v4656 = vadd.f32 %v4531, %v4655
      %4657 = vdwg.mxu0
      %4658 = vmatpush.msra.mxu0 0.0
      %4659 = vmatpush.msra.mxu0 0.0
      %4660 = vmatpush.msra.mxu0 0.0
      %4661 = vmatpush.msra.mxu0 0.0
      %4662 = vmatpush.msra.mxu0 0.0
      %4663 = vmatpush.msra.mxu0 0.0
      %4664 = vmatpush.msra.mxu0 0.0
      %4665 = vmatpush.msra.mxu0 0.0
      %4666 = vmatpush.msra.mxu0 0.0
      %4667 = vmatpush.msra.mxu0 0.0
      %4668 = vmatpush.msra.mxu0 0.0
      %4669 = vmatpush.msra.mxu0 0.0
      %4670 = vmatpush.msra.mxu0 %v4505
      %4671 = vmatpush.msra.mxu0 %v4497
      %4672 = vmatpush.msra.mxu0 %v4489
      %4673 = vmatpush.msra.mxu0 %v4481
      %4674 = vmatmul.f32.gmra.mxu0 %v4534
      %v4675 = vpop.f32.mrf.mxu0
      %v4676 = vadd.f32 %v4516, %v4675
      %4677 = vmatmul.f32.gmra.mxu0 %v4536
      %v4678 = vpop.f32.mrf.mxu0
      %v4679 = vadd.f32 %v4521, %v4678
      %4680 = vmatmul.f32.gmra.mxu0 %v4538
      %v4681 = vpop.f32.mrf.mxu0
      %v4682 = vadd.f32 %v4526, %v4681
      %4683 = vmatmul.f32.gmra.mxu0 %v4540
      %v4684 = vpop.f32.mrf.mxu0
      %v4685 = vadd.f32 %v4531, %v4684
      %4686 = vdwg.mxu0
      %4687 = vmatpush.msra.mxu0 0.0
      %4688 = vmatpush.msra.mxu0 0.0
      %4689 = vmatpush.msra.mxu0 0.0
      %4690 = vmatpush.msra.mxu0 0.0
      %4691 = vmatpush.msra.mxu0 0.0
      %4692 = vmatpush.msra.mxu0 0.0
      %4693 = vmatpush.msra.mxu0 0.0
      %4694 = vmatpush.msra.mxu0 0.0
      %4695 = vmatpush.msra.mxu0 0.0
      %4696 = vmatpush.msra.mxu0 0.0
      %4697 = vmatpush.msra.mxu0 0.0
      %4698 = vmatpush.msra.mxu0 0.0
      %4699 = vmatpush.msra.mxu0 %v4506
      %4700 = vmatpush.msra.mxu0 %v4498
      %4701 = vmatpush.msra.mxu0 %v4490
      %4702 = vmatpush.msra.mxu0 %v4482
      %4703 = vmatmul.f32.gmra.mxu0 %v4534
      %v4704 = vpop.f32.mrf.mxu0
      %v4705 = vadd.f32 %v4516, %v4704
      %4706 = vmatmul.f32.gmra.mxu0 %v4536
      %v4707 = vpop.f32.mrf.mxu0
      %v4708 = vadd.f32 %v4521, %v4707
      %4709 = vmatmul.f32.gmra.mxu0 %v4538
      %v4710 = vpop.f32.mrf.mxu0
      %v4711 = vadd.f32 %v4526, %v4710
      %4712 = vmatmul.f32.gmra.mxu0 %v4540
      %v4713 = vpop.f32.mrf.mxu0
      %v4714 = vadd.f32 %v4531, %v4713
      %4715 = vdwg.mxu0
      %4716 = vmatpush.msra.mxu0 0.0
      %4717 = vmatpush.msra.mxu0 0.0
      %4718 = vmatpush.msra.mxu0 0.0
      %4719 = vmatpush.msra.mxu0 0.0
      %4720 = vmatpush.msra.mxu0 0.0
      %4721 = vmatpush.msra.mxu0 0.0
      %4722 = vmatpush.msra.mxu0 0.0
      %4723 = vmatpush.msra.mxu0 0.0
      %4724 = vmatpush.msra.mxu0 0.0
      %4725 = vmatpush.msra.mxu0 0.0
      %4726 = vmatpush.msra.mxu0 0.0
      %4727 = vmatpush.msra.mxu0 0.0
      %4728 = vmatpush.msra.mxu0 %v4507
      %4729 = vmatpush.msra.mxu0 %v4499
      %4730 = vmatpush.msra.mxu0 %v4491
      %4731 = vmatpush.msra.mxu0 %v4483
      %4732 = vmatmul.f32.gmra.mxu0 %v4534
      %v4733 = vpop.f32.mrf.mxu0
      %v4734 = vadd.f32 %v4516, %v4733
      %4735 = vmatmul.f32.gmra.mxu0 %v4536
      %v4736 = vpop.f32.mrf.mxu0
      %v4737 = vadd.f32 %v4521, %v4736
      %4738 = vmatmul.f32.gmra.mxu0 %v4538
      %v4739 = vpop.f32.mrf.mxu0
      %v4740 = vadd.f32 %v4526, %v4739
      %4741 = vmatmul.f32.gmra.mxu0 %v4540
      %v4742 = vpop.f32.mrf.mxu0
      %v4743 = vadd.f32 %v4531, %v4742
      %4744 = vdwg.mxu0
      %4745 = vmatpush.msra.mxu0 0.0
      %4746 = vmatpush.msra.mxu0 0.0
      %4747 = vmatpush.msra.mxu0 0.0
      %4748 = vmatpush.msra.mxu0 0.0
      %4749 = vmatpush.msra.mxu0 0.0
      %4750 = vmatpush.msra.mxu0 0.0
      %4751 = vmatpush.msra.mxu0 0.0
      %4752 = vmatpush.msra.mxu0 0.0
      %4753 = vmatpush.msra.mxu0 0.0
      %4754 = vmatpush.msra.mxu0 0.0
      %4755 = vmatpush.msra.mxu0 0.0
      %4756 = vmatpush.msra.mxu0 0.0
      %4757 = vmatpush.msra.mxu0 %v4508
      %4758 = vmatpush.msra.mxu0 %v4500
      %4759 = vmatpush.msra.mxu0 %v4492
      %4760 = vmatpush.msra.mxu0 %v4484
      %4761 = vmatmul.f32.gmra.mxu0 %v4534
      %v4762 = vpop.f32.mrf.mxu0
      %v4763 = vadd.f32 %v4516, %v4762
      %4764 = vmatmul.f32.gmra.mxu0 %v4536
      %v4765 = vpop.f32.mrf.mxu0
      %v4766 = vadd.f32 %v4521, %v4765
      %4767 = vmatmul.f32.gmra.mxu0 %v4538
      %v4768 = vpop.f32.mrf.mxu0
      %v4769 = vadd.f32 %v4526, %v4768
      %4770 = vmatmul.f32.gmra.mxu0 %v4540
      %v4771 = vpop.f32.mrf.mxu0
      %v4772 = vadd.f32 %v4531, %v4771
      %4773 = vdwg.mxu0
      %v4774 = vmax.f32 %v4560, 0.0
      %v4775 = vmax.f32 %v4589, 0.0
      %v4776 = vmax.f32 %v4618, 0.0
      %v4777 = vmax.f32 %v4647, 0.0
      %v4778 = vmax.f32 %v4676, 0.0
      %v4779 = vmax.f32 %v4705, 0.0
      %v4780 = vmax.f32 %v4734, 0.0
      %v4781 = vmax.f32 %v4763, 0.0
      %v4782 = vmax.f32 %v4563, 0.0
      %v4783 = vmax.f32 %v4592, 0.0
      %v4784 = vmax.f32 %v4621, 0.0
      %v4785 = vmax.f32 %v4650, 0.0
      %v4786 = vmax.f32 %v4679, 0.0
      %v4787 = vmax.f32 %v4708, 0.0
      %v4788 = vmax.f32 %v4737, 0.0
      %v4789 = vmax.f32 %v4766, 0.0
      %v4790 = vmax.f32 %v4566, 0.0
      %v4791 = vmax.f32 %v4595, 0.0
      %v4792 = vmax.f32 %v4624, 0.0
      %v4793 = vmax.f32 %v4653, 0.0
      %v4794 = vmax.f32 %v4682, 0.0
      %v4795 = vmax.f32 %v4711, 0.0
      %v4796 = vmax.f32 %v4740, 0.0
      %v4797 = vmax.f32 %v4769, 0.0
      %v4798 = vmax.f32 %v4569, 0.0
      %v4799 = vmax.f32 %v4598, 0.0
      %v4800 = vmax.f32 %v4627, 0.0
      %v4801 = vmax.f32 %v4656, 0.0
      %v4802 = vmax.f32 %v4685, 0.0
      %v4803 = vmax.f32 %v4714, 0.0
      %v4804 = vmax.f32 %v4743, 0.0
      %v4805 = vmax.f32 %v4772, 0.0
      %v4806 = vld [vmem:[%s1 + $0x50] sm:$0xff]
      %v4807 = vld [vmem:[%s1 + $0x58] sm:$0xff]
      %v4808 = vld [vmem:[%s1 + $0x60] sm:$0xff]
      %v4809 = vld [vmem:[%s1 + $0x68] sm:$0xff]
      %4811 = vset.pattern.permute.xlu0 37
      %4812 = vperm.xlu0 %4811, %v4806
      %v4813 = vpop.permute.xlu0 %4812
      %4816 = vset.pattern.permute.xlu0 37
      %4817 = vperm.xlu0 %4816, %v4807
      %v4818 = vpop.permute.xlu0 %4817
      %4821 = vset.pattern.permute.xlu0 37
      %4822 = vperm.xlu0 %4821, %v4808
      %v4823 = vpop.permute.xlu0 %4822
      %4826 = vset.pattern.permute.xlu0 37
      %4827 = vperm.xlu0 %4826, %v4809
      %v4828 = vpop.permute.xlu0 %4827
      %v4830 = vsel %vm4533, %v4806, 0
      %v4832 = vsel %vm4533, %v4807, 0
      %v4834 = vsel %vm4533, %v4808, 0
      %v4836 = vsel %vm4533, %v4809, 0
      %4838 = vmatpush.msra.mxu0 0.0
      %4839 = vmatpush.msra.mxu0 0.0
      %4840 = vmatpush.msra.mxu0 0.0
      %4841 = vmatpush.msra.mxu0 0.0
      %4842 = vmatpush.msra.mxu0 0.0
      %4843 = vmatpush.msra.mxu0 0.0
      %4844 = vmatpush.msra.mxu0 0.0
      %4845 = vmatpush.msra.mxu0 0.0
      %4846 = vmatpush.msra.mxu0 0.0
      %4847 = vmatpush.msra.mxu0 0.0
      %4848 = vmatpush.msra.mxu0 0.0
      %4849 = vmatpush.msra.mxu0 0.0
      %4850 = vmatpush.msra.mxu0 %v4798
      %4851 = vmatpush.msra.mxu0 %v4790
      %4852 = vmatpush.msra.mxu0 %v4782
      %4853 = vmatpush.msra.mxu0 %v4774
      %4854 = vmatmul.f32.gmra.mxu0 %v4830
      %v4855 = vpop.f32.mrf.mxu0
      %v4856 = vadd.f32 %v4813, %v4855
      %4857 = vmatmul.f32.gmra.mxu0 %v4832
      %v4858 = vpop.f32.mrf.mxu0
      %v4859 = vadd.f32 %v4818, %v4858
      %4860 = vmatmul.f32.gmra.mxu0 %v4834
      %v4861 = vpop.f32.mrf.mxu0
      %v4862 = vadd.f32 %v4823, %v4861
      %4863 = vmatmul.f32.gmra.mxu0 %v4836
      %v4864 = vpop.f32.mrf.mxu0
      %v4865 = vadd.f32 %v4828, %v4864
      %4866 = vdwg.mxu0
      %4867 = vmatpush.msra.mxu0 0.0
      %4868 = vmatpush.msra.mxu0 0.0
      %4869 = vmatpush.msra.mxu0 0.0
      %4870 = vmatpush.msra.mxu0 0.0
      %4871 = vmatpush.msra.mxu0 0.0
      %4872 = vmatpush.msra.mxu0 0.0
      %4873 = vmatpush.msra.mxu0 0.0
      %4874 = vmatpush.msra.mxu0 0.0
      %4875 = vmatpush.msra.mxu0 0.0
      %4876 = vmatpush.msra.mxu0 0.0
      %4877 = vmatpush.msra.mxu0 0.0
      %4878 = vmatpush.msra.mxu0 0.0
      %4879 = vmatpush.msra.mxu0 %v4799
      %4880 = vmatpush.msra.mxu0 %v4791
      %4881 = vmatpush.msra.mxu0 %v4783
      %4882 = vmatpush.msra.mxu0 %v4775
      %4883 = vmatmul.f32.gmra.mxu0 %v4830
      %v4884 = vpop.f32.mrf.mxu0
      %v4885 = vadd.f32 %v4813, %v4884
      %4886 = vmatmul.f32.gmra.mxu0 %v4832
      %v4887 = vpop.f32.mrf.mxu0
      %v4888 = vadd.f32 %v4818, %v4887
      %4889 = vmatmul.f32.gmra.mxu0 %v4834
      %v4890 = vpop.f32.mrf.mxu0
      %v4891 = vadd.f32 %v4823, %v4890
      %4892 = vmatmul.f32.gmra.mxu0 %v4836
      %v4893 = vpop.f32.mrf.mxu0
      %v4894 = vadd.f32 %v4828, %v4893
      %4895 = vdwg.mxu0
      %4896 = vmatpush.msra.mxu0 0.0
      %4897 = vmatpush.msra.mxu0 0.0
      %4898 = vmatpush.msra.mxu0 0.0
      %4899 = vmatpush.msra.mxu0 0.0
      %4900 = vmatpush.msra.mxu0 0.0
      %4901 = vmatpush.msra.mxu0 0.0
      %4902 = vmatpush.msra.mxu0 0.0
      %4903 = vmatpush.msra.mxu0 0.0
      %4904 = vmatpush.msra.mxu0 0.0
      %4905 = vmatpush.msra.mxu0 0.0
      %4906 = vmatpush.msra.mxu0 0.0
      %4907 = vmatpush.msra.mxu0 0.0
      %4908 = vmatpush.msra.mxu0 %v4800
      %4909 = vmatpush.msra.mxu0 %v4792
      %4910 = vmatpush.msra.mxu0 %v4784
      %4911 = vmatpush.msra.mxu0 %v4776
      %4912 = vmatmul.f32.gmra.mxu0 %v4830
      %v4913 = vpop.f32.mrf.mxu0
      %v4914 = vadd.f32 %v4813, %v4913
      %4915 = vmatmul.f32.gmra.mxu0 %v4832
      %v4916 = vpop.f32.mrf.mxu0
      %v4917 = vadd.f32 %v4818, %v4916
      %4918 = vmatmul.f32.gmra.mxu0 %v4834
      %v4919 = vpop.f32.mrf.mxu0
      %v4920 = vadd.f32 %v4823, %v4919
      %4921 = vmatmul.f32.gmra.mxu0 %v4836
      %v4922 = vpop.f32.mrf.mxu0
      %v4923 = vadd.f32 %v4828, %v4922
      %4924 = vdwg.mxu0
      %4925 = vmatpush.msra.mxu0 0.0
      %4926 = vmatpush.msra.mxu0 0.0
      %4927 = vmatpush.msra.mxu0 0.0
      %4928 = vmatpush.msra.mxu0 0.0
      %4929 = vmatpush.msra.mxu0 0.0
      %4930 = vmatpush.msra.mxu0 0.0
      %4931 = vmatpush.msra.mxu0 0.0
      %4932 = vmatpush.msra.mxu0 0.0
      %4933 = vmatpush.msra.mxu0 0.0
      %4934 = vmatpush.msra.mxu0 0.0
      %4935 = vmatpush.msra.mxu0 0.0
      %4936 = vmatpush.msra.mxu0 0.0
      %4937 = vmatpush.msra.mxu0 %v4801
      %4938 = vmatpush.msra.mxu0 %v4793
      %4939 = vmatpush.msra.mxu0 %v4785
      %4940 = vmatpush.msra.mxu0 %v4777
      %4941 = vmatmul.f32.gmra.mxu0 %v4830
      %v4942 = vpop.f32.mrf.mxu0
      %v4943 = vadd.f32 %v4813, %v4942
      %4944 = vmatmul.f32.gmra.mxu0 %v4832
      %v4945 = vpop.f32.mrf.mxu0
      %v4946 = vadd.f32 %v4818, %v4945
      %4947 = vmatmul.f32.gmra.mxu0 %v4834
      %v4948 = vpop.f32.mrf.mxu0
      %v4949 = vadd.f32 %v4823, %v4948
      %4950 = vmatmul.f32.gmra.mxu0 %v4836
      %v4951 = vpop.f32.mrf.mxu0
      %v4952 = vadd.f32 %v4828, %v4951
      %4953 = vdwg.mxu0
      %4954 = vmatpush.msra.mxu0 0.0
      %4955 = vmatpush.msra.mxu0 0.0
      %4956 = vmatpush.msra.mxu0 0.0
      %4957 = vmatpush.msra.mxu0 0.0
      %4958 = vmatpush.msra.mxu0 0.0
      %4959 = vmatpush.msra.mxu0 0.0
      %4960 = vmatpush.msra.mxu0 0.0
      %4961 = vmatpush.msra.mxu0 0.0
      %4962 = vmatpush.msra.mxu0 0.0
      %4963 = vmatpush.msra.mxu0 0.0
      %4964 = vmatpush.msra.mxu0 0.0
      %4965 = vmatpush.msra.mxu0 0.0
      %4966 = vmatpush.msra.mxu0 %v4802
      %4967 = vmatpush.msra.mxu0 %v4794
      %4968 = vmatpush.msra.mxu0 %v4786
      %4969 = vmatpush.msra.mxu0 %v4778
      %4970 = vmatmul.f32.gmra.mxu0 %v4830
      %v4971 = vpop.f32.mrf.mxu0
      %v4972 = vadd.f32 %v4813, %v4971
      %4973 = vmatmul.f32.gmra.mxu0 %v4832
      %v4974 = vpop.f32.mrf.mxu0
      %v4975 = vadd.f32 %v4818, %v4974
      %4976 = vmatmul.f32.gmra.mxu0 %v4834
      %v4977 = vpop.f32.mrf.mxu0
      %v4978 = vadd.f32 %v4823, %v4977
      %4979 = vmatmul.f32.gmra.mxu0 %v4836
      %v4980 = vpop.f32.mrf.mxu0
      %v4981 = vadd.f32 %v4828, %v4980
      %4982 = vdwg.mxu0
      %4983 = vmatpush.msra.mxu0 0.0
      %4984 = vmatpush.msra.mxu0 0.0
      %4985 = vmatpush.msra.mxu0 0.0
      %4986 = vmatpush.msra.mxu0 0.0
      %4987 = vmatpush.msra.mxu0 0.0
      %4988 = vmatpush.msra.mxu0 0.0
      %4989 = vmatpush.msra.mxu0 0.0
      %4990 = vmatpush.msra.mxu0 0.0
      %4991 = vmatpush.msra.mxu0 0.0
      %4992 = vmatpush.msra.mxu0 0.0
      %4993 = vmatpush.msra.mxu0 0.0
      %4994 = vmatpush.msra.mxu0 0.0
      %4995 = vmatpush.msra.mxu0 %v4803
      %4996 = vmatpush.msra.mxu0 %v4795
      %4997 = vmatpush.msra.mxu0 %v4787
      %4998 = vmatpush.msra.mxu0 %v4779
      %4999 = vmatmul.f32.gmra.mxu0 %v4830
      %v5000 = vpop.f32.mrf.mxu0
      %v5001 = vadd.f32 %v4813, %v5000
      %5002 = vmatmul.f32.gmra.mxu0 %v4832
      %v5003 = vpop.f32.mrf.mxu0
      %v5004 = vadd.f32 %v4818, %v5003
      %5005 = vmatmul.f32.gmra.mxu0 %v4834
      %v5006 = vpop.f32.mrf.mxu0
      %v5007 = vadd.f32 %v4823, %v5006
      %5008 = vmatmul.f32.gmra.mxu0 %v4836
      %v5009 = vpop.f32.mrf.mxu0
      %v5010 = vadd.f32 %v4828, %v5009
      %5011 = vdwg.mxu0
      %5012 = vmatpush.msra.mxu0 0.0
      %5013 = vmatpush.msra.mxu0 0.0
      %5014 = vmatpush.msra.mxu0 0.0
      %5015 = vmatpush.msra.mxu0 0.0
      %5016 = vmatpush.msra.mxu0 0.0
      %5017 = vmatpush.msra.mxu0 0.0
      %5018 = vmatpush.msra.mxu0 0.0
      %5019 = vmatpush.msra.mxu0 0.0
      %5020 = vmatpush.msra.mxu0 0.0
      %5021 = vmatpush.msra.mxu0 0.0
      %5022 = vmatpush.msra.mxu0 0.0
      %5023 = vmatpush.msra.mxu0 0.0
      %5024 = vmatpush.msra.mxu0 %v4804
      %5025 = vmatpush.msra.mxu0 %v4796
      %5026 = vmatpush.msra.mxu0 %v4788
      %5027 = vmatpush.msra.mxu0 %v4780
      %5028 = vmatmul.f32.gmra.mxu0 %v4830
      %v5029 = vpop.f32.mrf.mxu0
      %v5030 = vadd.f32 %v4813, %v5029
      %5031 = vmatmul.f32.gmra.mxu0 %v4832
      %v5032 = vpop.f32.mrf.mxu0
      %v5033 = vadd.f32 %v4818, %v5032
      %5034 = vmatmul.f32.gmra.mxu0 %v4834
      %v5035 = vpop.f32.mrf.mxu0
      %v5036 = vadd.f32 %v4823, %v5035
      %5037 = vmatmul.f32.gmra.mxu0 %v4836
      %v5038 = vpop.f32.mrf.mxu0
      %v5039 = vadd.f32 %v4828, %v5038
      %5040 = vdwg.mxu0
      %5041 = vmatpush.msra.mxu0 0.0
      %5042 = vmatpush.msra.mxu0 0.0
      %5043 = vmatpush.msra.mxu0 0.0
      %5044 = vmatpush.msra.mxu0 0.0
      %5045 = vmatpush.msra.mxu0 0.0
      %5046 = vmatpush.msra.mxu0 0.0
      %5047 = vmatpush.msra.mxu0 0.0
      %5048 = vmatpush.msra.mxu0 0.0
      %5049 = vmatpush.msra.mxu0 0.0
      %5050 = vmatpush.msra.mxu0 0.0
      %5051 = vmatpush.msra.mxu0 0.0
      %5052 = vmatpush.msra.mxu0 0.0
      %5053 = vmatpush.msra.mxu0 %v4805
      %5054 = vmatpush.msra.mxu0 %v4797
      %5055 = vmatpush.msra.mxu0 %v4789
      %5056 = vmatpush.msra.mxu0 %v4781
      %5057 = vmatmul.f32.gmra.mxu0 %v4830
      %v5058 = vpop.f32.mrf.mxu0
      %v5059 = vadd.f32 %v4813, %v5058
      %5060 = vmatmul.f32.gmra.mxu0 %v4832
      %v5061 = vpop.f32.mrf.mxu0
      %v5062 = vadd.f32 %v4818, %v5061
      %5063 = vmatmul.f32.gmra.mxu0 %v4834
      %v5064 = vpop.f32.mrf.mxu0
      %v5065 = vadd.f32 %v4823, %v5064
      %5066 = vmatmul.f32.gmra.mxu0 %v4836
      %v5067 = vpop.f32.mrf.mxu0
      %v5068 = vadd.f32 %v4828, %v5067
      %5069 = vdwg.mxu0
      %5070 = vrot.lane.b32.xlu0 %v4806, 96
      %v5071 = vpop.permute.xlu0 %5070
      %5072 = vrot.lane.b32.xlu0 %v4807, 96
      %v5073 = vpop.permute.xlu0 %5072
      %5074 = vrot.lane.b32.xlu0 %v4808, 96
      %v5075 = vpop.permute.xlu0 %5074
      %5076 = vrot.lane.b32.xlu0 %v4809, 96
      %v5077 = vpop.permute.xlu0 %5076
      %vm5078 = vcmask 39936
      %v5079 = vsel %vm5078, %v5071, 0
      %v5081 = vsel %vm5078, %v5073, 0
      %v5083 = vsel %vm5078, %v5075, 0
      %v5085 = vsel %vm5078, %v5077, 0
      %v5088 = vsel %vm1509, %v147, 0
      %v5091 = vsel %vm1509, %v148, 0
      %v5094 = vsel %vm1509, %v149, 0
      %v5097 = vsel %vm1509, %v150, 0
      %v5100 = vsel %vm1509, %v151, 0
      %v5103 = vsel %vm1509, %v152, 0
      %v5106 = vsel %vm1509, %v153, 0
      %v5109 = vsel %vm1509, %v154, 0
      %5111 = vmatpush.msra.mxu0 0.0
      %5112 = vmatpush.msra.mxu0 0.0
      %5113 = vmatpush.msra.mxu0 0.0
      %5114 = vmatpush.msra.mxu0 0.0
      %5115 = vmatpush.msra.mxu0 0.0
      %5116 = vmatpush.msra.mxu0 0.0
      %5117 = vmatpush.msra.mxu0 0.0
      %5118 = vmatpush.msra.mxu0 0.0
      %5119 = vmatpush.msra.mxu0 0.0
      %5120 = vmatpush.msra.mxu0 0.0
      %5121 = vmatpush.msra.mxu0 0.0
      %5122 = vmatpush.msra.mxu0 0.0
      %5123 = vmatpush.msra.mxu0 0.0
      %5124 = vmatpush.msra.mxu0 0.0
      %5125 = vmatpush.msra.mxu0 0.0
      %5126 = vmatpush.msra.mxu0 %v5088
      %5127 = vmatmul.f32.gmra.mxu0 %v5079
      %v5128 = vpop.f32.mrf.mxu0
      %v5129 = vadd.f32 0.0, %v5128
      %5130 = vmatmul.f32.gmra.mxu0 %v5081
      %v5131 = vpop.f32.mrf.mxu0
      %v5132 = vadd.f32 0.0, %v5131
      %5133 = vmatmul.f32.gmra.mxu0 %v5083
      %v5134 = vpop.f32.mrf.mxu0
      %v5135 = vadd.f32 0.0, %v5134
      %5136 = vmatmul.f32.gmra.mxu0 %v5085
      %v5137 = vpop.f32.mrf.mxu0
      %v5138 = vadd.f32 0.0, %v5137
      %5139 = vdwg.mxu0
      %5140 = vmatpush.msra.mxu0 0.0
      %5141 = vmatpush.msra.mxu0 0.0
      %5142 = vmatpush.msra.mxu0 0.0
      %5143 = vmatpush.msra.mxu0 0.0
      %5144 = vmatpush.msra.mxu0 0.0
      %5145 = vmatpush.msra.mxu0 0.0
      %5146 = vmatpush.msra.mxu0 0.0
      %5147 = vmatpush.msra.mxu0 0.0
      %5148 = vmatpush.msra.mxu0 0.0
      %5149 = vmatpush.msra.mxu0 0.0
      %5150 = vmatpush.msra.mxu0 0.0
      %5151 = vmatpush.msra.mxu0 0.0
      %5152 = vmatpush.msra.mxu0 0.0
      %5153 = vmatpush.msra.mxu0 0.0
      %5154 = vmatpush.msra.mxu0 0.0
      %5155 = vmatpush.msra.mxu0 %v5091
      %5156 = vmatmul.f32.gmra.mxu0 %v5079
      %v5157 = vpop.f32.mrf.mxu0
      %v5158 = vadd.f32 0.0, %v5157
      %5159 = vmatmul.f32.gmra.mxu0 %v5081
      %v5160 = vpop.f32.mrf.mxu0
      %v5161 = vadd.f32 0.0, %v5160
      %5162 = vmatmul.f32.gmra.mxu0 %v5083
      %v5163 = vpop.f32.mrf.mxu0
      %v5164 = vadd.f32 0.0, %v5163
      %5165 = vmatmul.f32.gmra.mxu0 %v5085
      %v5166 = vpop.f32.mrf.mxu0
      %v5167 = vadd.f32 0.0, %v5166
      %5168 = vdwg.mxu0
      %5169 = vmatpush.msra.mxu0 0.0
      %5170 = vmatpush.msra.mxu0 0.0
      %5171 = vmatpush.msra.mxu0 0.0
      %5172 = vmatpush.msra.mxu0 0.0
      %5173 = vmatpush.msra.mxu0 0.0
      %5174 = vmatpush.msra.mxu0 0.0
      %5175 = vmatpush.msra.mxu0 0.0
      %5176 = vmatpush.msra.mxu0 0.0
      %5177 = vmatpush.msra.mxu0 0.0
      %5178 = vmatpush.msra.mxu0 0.0
      %5179 = vmatpush.msra.mxu0 0.0
      %5180 = vmatpush.msra.mxu0 0.0
      %5181 = vmatpush.msra.mxu0 0.0
      %5182 = vmatpush.msra.mxu0 0.0
      %5183 = vmatpush.msra.mxu0 0.0
      %5184 = vmatpush.msra.mxu0 %v5094
      %5185 = vmatmul.f32.gmra.mxu0 %v5079
      %v5186 = vpop.f32.mrf.mxu0
      %v5187 = vadd.f32 0.0, %v5186
      %5188 = vmatmul.f32.gmra.mxu0 %v5081
      %v5189 = vpop.f32.mrf.mxu0
      %v5190 = vadd.f32 0.0, %v5189
      %5191 = vmatmul.f32.gmra.mxu0 %v5083
      %v5192 = vpop.f32.mrf.mxu0
      %v5193 = vadd.f32 0.0, %v5192
      %5194 = vmatmul.f32.gmra.mxu0 %v5085
      %v5195 = vpop.f32.mrf.mxu0
      %v5196 = vadd.f32 0.0, %v5195
      %5197 = vdwg.mxu0
      %5198 = vmatpush.msra.mxu0 0.0
      %5199 = vmatpush.msra.mxu0 0.0
      %5200 = vmatpush.msra.mxu0 0.0
      %5201 = vmatpush.msra.mxu0 0.0
      %5202 = vmatpush.msra.mxu0 0.0
      %5203 = vmatpush.msra.mxu0 0.0
      %5204 = vmatpush.msra.mxu0 0.0
      %5205 = vmatpush.msra.mxu0 0.0
      %5206 = vmatpush.msra.mxu0 0.0
      %5207 = vmatpush.msra.mxu0 0.0
      %5208 = vmatpush.msra.mxu0 0.0
      %5209 = vmatpush.msra.mxu0 0.0
      %5210 = vmatpush.msra.mxu0 0.0
      %5211 = vmatpush.msra.mxu0 0.0
      %5212 = vmatpush.msra.mxu0 0.0
      %5213 = vmatpush.msra.mxu0 %v5097
      %5214 = vmatmul.f32.gmra.mxu0 %v5079
      %v5215 = vpop.f32.mrf.mxu0
      %v5216 = vadd.f32 0.0, %v5215
      %5217 = vmatmul.f32.gmra.mxu0 %v5081
      %v5218 = vpop.f32.mrf.mxu0
      %v5219 = vadd.f32 0.0, %v5218
      %5220 = vmatmul.f32.gmra.mxu0 %v5083
      %v5221 = vpop.f32.mrf.mxu0
      %v5222 = vadd.f32 0.0, %v5221
      %5223 = vmatmul.f32.gmra.mxu0 %v5085
      %v5224 = vpop.f32.mrf.mxu0
      %v5225 = vadd.f32 0.0, %v5224
      %5226 = vdwg.mxu0
      %5227 = vmatpush.msra.mxu0 0.0
      %5228 = vmatpush.msra.mxu0 0.0
      %5229 = vmatpush.msra.mxu0 0.0
      %5230 = vmatpush.msra.mxu0 0.0
      %5231 = vmatpush.msra.mxu0 0.0
      %5232 = vmatpush.msra.mxu0 0.0
      %5233 = vmatpush.msra.mxu0 0.0
      %5234 = vmatpush.msra.mxu0 0.0
      %5235 = vmatpush.msra.mxu0 0.0
      %5236 = vmatpush.msra.mxu0 0.0
      %5237 = vmatpush.msra.mxu0 0.0
      %5238 = vmatpush.msra.mxu0 0.0
      %5239 = vmatpush.msra.mxu0 0.0
      %5240 = vmatpush.msra.mxu0 0.0
      %5241 = vmatpush.msra.mxu0 0.0
      %5242 = vmatpush.msra.mxu0 %v5100
      %5243 = vmatmul.f32.gmra.mxu0 %v5079
      %v5244 = vpop.f32.mrf.mxu0
      %v5245 = vadd.f32 0.0, %v5244
      %5246 = vmatmul.f32.gmra.mxu0 %v5081
      %v5247 = vpop.f32.mrf.mxu0
      %v5248 = vadd.f32 0.0, %v5247
      %5249 = vmatmul.f32.gmra.mxu0 %v5083
      %v5250 = vpop.f32.mrf.mxu0
      %v5251 = vadd.f32 0.0, %v5250
      %5252 = vmatmul.f32.gmra.mxu0 %v5085
      %v5253 = vpop.f32.mrf.mxu0
      %v5254 = vadd.f32 0.0, %v5253
      %5255 = vdwg.mxu0
      %5256 = vmatpush.msra.mxu0 0.0
      %5257 = vmatpush.msra.mxu0 0.0
      %5258 = vmatpush.msra.mxu0 0.0
      %5259 = vmatpush.msra.mxu0 0.0
      %5260 = vmatpush.msra.mxu0 0.0
      %5261 = vmatpush.msra.mxu0 0.0
      %5262 = vmatpush.msra.mxu0 0.0
      %5263 = vmatpush.msra.mxu0 0.0
      %5264 = vmatpush.msra.mxu0 0.0
      %5265 = vmatpush.msra.mxu0 0.0
      %5266 = vmatpush.msra.mxu0 0.0
      %5267 = vmatpush.msra.mxu0 0.0
      %5268 = vmatpush.msra.mxu0 0.0
      %5269 = vmatpush.msra.mxu0 0.0
      %5270 = vmatpush.msra.mxu0 0.0
      %5271 = vmatpush.msra.mxu0 %v5103
      %5272 = vmatmul.f32.gmra.mxu0 %v5079
      %v5273 = vpop.f32.mrf.mxu0
      %v5274 = vadd.f32 0.0, %v5273
      %5275 = vmatmul.f32.gmra.mxu0 %v5081
      %v5276 = vpop.f32.mrf.mxu0
      %v5277 = vadd.f32 0.0, %v5276
      %5278 = vmatmul.f32.gmra.mxu0 %v5083
      %v5279 = vpop.f32.mrf.mxu0
      %v5280 = vadd.f32 0.0, %v5279
      %5281 = vmatmul.f32.gmra.mxu0 %v5085
      %v5282 = vpop.f32.mrf.mxu0
      %v5283 = vadd.f32 0.0, %v5282
      %5284 = vdwg.mxu0
      %5285 = vmatpush.msra.mxu0 0.0
      %5286 = vmatpush.msra.mxu0 0.0
      %5287 = vmatpush.msra.mxu0 0.0
      %5288 = vmatpush.msra.mxu0 0.0
      %5289 = vmatpush.msra.mxu0 0.0
      %5290 = vmatpush.msra.mxu0 0.0
      %5291 = vmatpush.msra.mxu0 0.0
      %5292 = vmatpush.msra.mxu0 0.0
      %5293 = vmatpush.msra.mxu0 0.0
      %5294 = vmatpush.msra.mxu0 0.0
      %5295 = vmatpush.msra.mxu0 0.0
      %5296 = vmatpush.msra.mxu0 0.0
      %5297 = vmatpush.msra.mxu0 0.0
      %5298 = vmatpush.msra.mxu0 0.0
      %5299 = vmatpush.msra.mxu0 0.0
      %5300 = vmatpush.msra.mxu0 %v5106
      %5301 = vmatmul.f32.gmra.mxu0 %v5079
      %v5302 = vpop.f32.mrf.mxu0
      %v5303 = vadd.f32 0.0, %v5302
      %5304 = vmatmul.f32.gmra.mxu0 %v5081
      %v5305 = vpop.f32.mrf.mxu0
      %v5306 = vadd.f32 0.0, %v5305
      %5307 = vmatmul.f32.gmra.mxu0 %v5083
      %v5308 = vpop.f32.mrf.mxu0
      %v5309 = vadd.f32 0.0, %v5308
      %5310 = vmatmul.f32.gmra.mxu0 %v5085
      %v5311 = vpop.f32.mrf.mxu0
      %v5312 = vadd.f32 0.0, %v5311
      %5313 = vdwg.mxu0
      %5314 = vmatpush.msra.mxu0 0.0
      %5315 = vmatpush.msra.mxu0 0.0
      %5316 = vmatpush.msra.mxu0 0.0
      %5317 = vmatpush.msra.mxu0 0.0
      %5318 = vmatpush.msra.mxu0 0.0
      %5319 = vmatpush.msra.mxu0 0.0
      %5320 = vmatpush.msra.mxu0 0.0
      %5321 = vmatpush.msra.mxu0 0.0
      %5322 = vmatpush.msra.mxu0 0.0
      %5323 = vmatpush.msra.mxu0 0.0
      %5324 = vmatpush.msra.mxu0 0.0
      %5325 = vmatpush.msra.mxu0 0.0
      %5326 = vmatpush.msra.mxu0 0.0
      %5327 = vmatpush.msra.mxu0 0.0
      %5328 = vmatpush.msra.mxu0 0.0
      %5329 = vmatpush.msra.mxu0 %v5109
      %5330 = vmatmul.f32.gmra.mxu0 %v5079
      %v5331 = vpop.f32.mrf.mxu0
      %v5332 = vadd.f32 0.0, %v5331
      %5333 = vmatmul.f32.gmra.mxu0 %v5081
      %v5334 = vpop.f32.mrf.mxu0
      %v5335 = vadd.f32 0.0, %v5334
      %5336 = vmatmul.f32.gmra.mxu0 %v5083
      %v5337 = vpop.f32.mrf.mxu0
      %v5338 = vadd.f32 0.0, %v5337
      %5339 = vmatmul.f32.gmra.mxu0 %v5085
      %v5340 = vpop.f32.mrf.mxu0
      %v5341 = vadd.f32 0.0, %v5340
      %5342 = vdwg.mxu0
      %v5343 = vadd.f32 %v4856, %v5129
      %v5344 = vadd.f32 %v4885, %v5158
      %v5345 = vadd.f32 %v4914, %v5187
      %v5346 = vadd.f32 %v4943, %v5216
      %v5347 = vadd.f32 %v4972, %v5245
      %v5348 = vadd.f32 %v5001, %v5274
      %v5349 = vadd.f32 %v5030, %v5303
      %v5350 = vadd.f32 %v5059, %v5332
      %v5351 = vadd.f32 %v4859, %v5132
      %v5352 = vadd.f32 %v4888, %v5161
      %v5353 = vadd.f32 %v4917, %v5190
      %v5354 = vadd.f32 %v4946, %v5219
      %v5355 = vadd.f32 %v4975, %v5248
      %v5356 = vadd.f32 %v5004, %v5277
      %v5357 = vadd.f32 %v5033, %v5306
      %v5358 = vadd.f32 %v5062, %v5335
      %v5359 = vadd.f32 %v4862, %v5135
      %v5360 = vadd.f32 %v4891, %v5164
      %v5361 = vadd.f32 %v4920, %v5193
      %v5362 = vadd.f32 %v4949, %v5222
      %v5363 = vadd.f32 %v4978, %v5251
      %v5364 = vadd.f32 %v5007, %v5280
      %v5365 = vadd.f32 %v5036, %v5309
      %v5366 = vadd.f32 %v5065, %v5338
      %v5367 = vadd.f32 %v4865, %v5138
      %v5368 = vadd.f32 %v4894, %v5167
      %v5369 = vadd.f32 %v4923, %v5196
      %v5370 = vadd.f32 %v4952, %v5225
      %v5371 = vadd.f32 %v4981, %v5254
      %v5372 = vadd.f32 %v5010, %v5283
      %v5373 = vadd.f32 %v5039, %v5312
      %v5374 = vadd.f32 %v5068, %v5341
      %v5375 = vmax.f32 %v5343, 0.0
      %v5376 = vmax.f32 %v5344, 0.0
      %v5377 = vmax.f32 %v5345, 0.0
      %v5378 = vmax.f32 %v5346, 0.0
      %v5379 = vmax.f32 %v5347, 0.0
      %v5380 = vmax.f32 %v5348, 0.0
      %v5381 = vmax.f32 %v5349, 0.0
      %v5382 = vmax.f32 %v5350, 0.0
      %v5383 = vmax.f32 %v5351, 0.0
      %v5384 = vmax.f32 %v5352, 0.0
      %v5385 = vmax.f32 %v5353, 0.0
      %v5386 = vmax.f32 %v5354, 0.0
      %v5387 = vmax.f32 %v5355, 0.0
      %v5388 = vmax.f32 %v5356, 0.0
      %v5389 = vmax.f32 %v5357, 0.0
      %v5390 = vmax.f32 %v5358, 0.0
      %v5391 = vmax.f32 %v5359, 0.0
      %v5392 = vmax.f32 %v5360, 0.0
      %v5393 = vmax.f32 %v5361, 0.0
      %v5394 = vmax.f32 %v5362, 0.0
      %v5395 = vmax.f32 %v5363, 0.0
      %v5396 = vmax.f32 %v5364, 0.0
      %v5397 = vmax.f32 %v5365, 0.0
      %v5398 = vmax.f32 %v5366, 0.0
      %v5399 = vmax.f32 %v5367, 0.0
      %v5400 = vmax.f32 %v5368, 0.0
      %v5401 = vmax.f32 %v5369, 0.0
      %v5402 = vmax.f32 %v5370, 0.0
      %v5403 = vmax.f32 %v5371, 0.0
      %v5404 = vmax.f32 %v5372, 0.0
      %v5405 = vmax.f32 %v5373, 0.0
      %v5406 = vmax.f32 %v5374, 0.0
      %v5407 = vld [vmem:[%s1 + $0x70] sm:$0xff]
      %v5408 = vld [vmem:[%s1 + $0x78] sm:$0xff]
      %v5409 = vld [vmem:[%s1 + $0x80] sm:$0xff]
      %v5410 = vld [vmem:[%s1 + $0x88] sm:$0xff]
      %5412 = vset.pattern.permute.xlu0 37
      %5413 = vperm.xlu0 %5412, %v5407
      %v5414 = vpop.permute.xlu0 %5413
      %5417 = vset.pattern.permute.xlu0 37
      %5418 = vperm.xlu0 %5417, %v5408
      %v5419 = vpop.permute.xlu0 %5418
      %5422 = vset.pattern.permute.xlu0 37
      %5423 = vperm.xlu0 %5422, %v5409
      %v5424 = vpop.permute.xlu0 %5423
      %5427 = vset.pattern.permute.xlu0 37
      %5428 = vperm.xlu0 %5427, %v5410
      %v5429 = vpop.permute.xlu0 %5428
      %v5431 = vsel %vm4533, %v5407, 0
      %v5433 = vsel %vm4533, %v5408, 0
      %v5435 = vsel %vm4533, %v5409, 0
      %v5437 = vsel %vm4533, %v5410, 0
      %5439 = vmatpush.msra.mxu0 0.0
      %5440 = vmatpush.msra.mxu0 0.0
      %5441 = vmatpush.msra.mxu0 0.0
      %5442 = vmatpush.msra.mxu0 0.0
      %5443 = vmatpush.msra.mxu0 0.0
      %5444 = vmatpush.msra.mxu0 0.0
      %5445 = vmatpush.msra.mxu0 0.0
      %5446 = vmatpush.msra.mxu0 0.0
      %5447 = vmatpush.msra.mxu0 0.0
      %5448 = vmatpush.msra.mxu0 0.0
      %5449 = vmatpush.msra.mxu0 0.0
      %5450 = vmatpush.msra.mxu0 0.0
      %5451 = vmatpush.msra.mxu0 %v5399
      %5452 = vmatpush.msra.mxu0 %v5391
      %5453 = vmatpush.msra.mxu0 %v5383
      %5454 = vmatpush.msra.mxu0 %v5375
      %5455 = vmatmul.f32.gmra.mxu0 %v5431
      %v5456 = vpop.f32.mrf.mxu0
      %v5457 = vadd.f32 %v5414, %v5456
      %5458 = vmatmul.f32.gmra.mxu0 %v5433
      %v5459 = vpop.f32.mrf.mxu0
      %v5460 = vadd.f32 %v5419, %v5459
      %5461 = vmatmul.f32.gmra.mxu0 %v5435
      %v5462 = vpop.f32.mrf.mxu0
      %v5463 = vadd.f32 %v5424, %v5462
      %5464 = vmatmul.f32.gmra.mxu0 %v5437
      %v5465 = vpop.f32.mrf.mxu0
      %v5466 = vadd.f32 %v5429, %v5465
      %5467 = vdwg.mxu0
      %5468 = vmatpush.msra.mxu0 0.0
      %5469 = vmatpush.msra.mxu0 0.0
      %5470 = vmatpush.msra.mxu0 0.0
      %5471 = vmatpush.msra.mxu0 0.0
      %5472 = vmatpush.msra.mxu0 0.0
      %5473 = vmatpush.msra.mxu0 0.0
      %5474 = vmatpush.msra.mxu0 0.0
      %5475 = vmatpush.msra.mxu0 0.0
      %5476 = vmatpush.msra.mxu0 0.0
      %5477 = vmatpush.msra.mxu0 0.0
      %5478 = vmatpush.msra.mxu0 0.0
      %5479 = vmatpush.msra.mxu0 0.0
      %5480 = vmatpush.msra.mxu0 %v5400
      %5481 = vmatpush.msra.mxu0 %v5392
      %5482 = vmatpush.msra.mxu0 %v5384
      %5483 = vmatpush.msra.mxu0 %v5376
      %5484 = vmatmul.f32.gmra.mxu0 %v5431
      %v5485 = vpop.f32.mrf.mxu0
      %v5486 = vadd.f32 %v5414, %v5485
      %5487 = vmatmul.f32.gmra.mxu0 %v5433
      %v5488 = vpop.f32.mrf.mxu0
      %v5489 = vadd.f32 %v5419, %v5488
      %5490 = vmatmul.f32.gmra.mxu0 %v5435
      %v5491 = vpop.f32.mrf.mxu0
      %v5492 = vadd.f32 %v5424, %v5491
      %5493 = vmatmul.f32.gmra.mxu0 %v5437
      %v5494 = vpop.f32.mrf.mxu0
      %v5495 = vadd.f32 %v5429, %v5494
      %5496 = vdwg.mxu0
      %5497 = vmatpush.msra.mxu0 0.0
      %5498 = vmatpush.msra.mxu0 0.0
      %5499 = vmatpush.msra.mxu0 0.0
      %5500 = vmatpush.msra.mxu0 0.0
      %5501 = vmatpush.msra.mxu0 0.0
      %5502 = vmatpush.msra.mxu0 0.0
      %5503 = vmatpush.msra.mxu0 0.0
      %5504 = vmatpush.msra.mxu0 0.0
      %5505 = vmatpush.msra.mxu0 0.0
      %5506 = vmatpush.msra.mxu0 0.0
      %5507 = vmatpush.msra.mxu0 0.0
      %5508 = vmatpush.msra.mxu0 0.0
      %5509 = vmatpush.msra.mxu0 %v5401
      %5510 = vmatpush.msra.mxu0 %v5393
      %5511 = vmatpush.msra.mxu0 %v5385
      %5512 = vmatpush.msra.mxu0 %v5377
      %5513 = vmatmul.f32.gmra.mxu0 %v5431
      %v5514 = vpop.f32.mrf.mxu0
      %v5515 = vadd.f32 %v5414, %v5514
      %5516 = vmatmul.f32.gmra.mxu0 %v5433
      %v5517 = vpop.f32.mrf.mxu0
      %v5518 = vadd.f32 %v5419, %v5517
      %5519 = vmatmul.f32.gmra.mxu0 %v5435
      %v5520 = vpop.f32.mrf.mxu0
      %v5521 = vadd.f32 %v5424, %v5520
      %5522 = vmatmul.f32.gmra.mxu0 %v5437
      %v5523 = vpop.f32.mrf.mxu0
      %v5524 = vadd.f32 %v5429, %v5523
      %5525 = vdwg.mxu0
      %5526 = vmatpush.msra.mxu0 0.0
      %5527 = vmatpush.msra.mxu0 0.0
      %5528 = vmatpush.msra.mxu0 0.0
      %5529 = vmatpush.msra.mxu0 0.0
      %5530 = vmatpush.msra.mxu0 0.0
      %5531 = vmatpush.msra.mxu0 0.0
      %5532 = vmatpush.msra.mxu0 0.0
      %5533 = vmatpush.msra.mxu0 0.0
      %5534 = vmatpush.msra.mxu0 0.0
      %5535 = vmatpush.msra.mxu0 0.0
      %5536 = vmatpush.msra.mxu0 0.0
      %5537 = vmatpush.msra.mxu0 0.0
      %5538 = vmatpush.msra.mxu0 %v5402
      %5539 = vmatpush.msra.mxu0 %v5394
      %5540 = vmatpush.msra.mxu0 %v5386
      %5541 = vmatpush.msra.mxu0 %v5378
      %5542 = vmatmul.f32.gmra.mxu0 %v5431
      %v5543 = vpop.f32.mrf.mxu0
      %v5544 = vadd.f32 %v5414, %v5543
      %5545 = vmatmul.f32.gmra.mxu0 %v5433
      %v5546 = vpop.f32.mrf.mxu0
      %v5547 = vadd.f32 %v5419, %v5546
      %5548 = vmatmul.f32.gmra.mxu0 %v5435
      %v5549 = vpop.f32.mrf.mxu0
      %v5550 = vadd.f32 %v5424, %v5549
      %5551 = vmatmul.f32.gmra.mxu0 %v5437
      %v5552 = vpop.f32.mrf.mxu0
      %v5553 = vadd.f32 %v5429, %v5552
      %5554 = vdwg.mxu0
      %5555 = vmatpush.msra.mxu0 0.0
      %5556 = vmatpush.msra.mxu0 0.0
      %5557 = vmatpush.msra.mxu0 0.0
      %5558 = vmatpush.msra.mxu0 0.0
      %5559 = vmatpush.msra.mxu0 0.0
      %5560 = vmatpush.msra.mxu0 0.0
      %5561 = vmatpush.msra.mxu0 0.0
      %5562 = vmatpush.msra.mxu0 0.0
      %5563 = vmatpush.msra.mxu0 0.0
      %5564 = vmatpush.msra.mxu0 0.0
      %5565 = vmatpush.msra.mxu0 0.0
      %5566 = vmatpush.msra.mxu0 0.0
      %5567 = vmatpush.msra.mxu0 %v5403
      %5568 = vmatpush.msra.mxu0 %v5395
      %5569 = vmatpush.msra.mxu0 %v5387
      %5570 = vmatpush.msra.mxu0 %v5379
      %5571 = vmatmul.f32.gmra.mxu0 %v5431
      %v5572 = vpop.f32.mrf.mxu0
      %v5573 = vadd.f32 %v5414, %v5572
      %5574 = vmatmul.f32.gmra.mxu0 %v5433
      %v5575 = vpop.f32.mrf.mxu0
      %v5576 = vadd.f32 %v5419, %v5575
      %5577 = vmatmul.f32.gmra.mxu0 %v5435
      %v5578 = vpop.f32.mrf.mxu0
      %v5579 = vadd.f32 %v5424, %v5578
      %5580 = vmatmul.f32.gmra.mxu0 %v5437
      %v5581 = vpop.f32.mrf.mxu0
      %v5582 = vadd.f32 %v5429, %v5581
      %5583 = vdwg.mxu0
      %5584 = vmatpush.msra.mxu0 0.0
      %5585 = vmatpush.msra.mxu0 0.0
      %5586 = vmatpush.msra.mxu0 0.0
      %5587 = vmatpush.msra.mxu0 0.0
      %5588 = vmatpush.msra.mxu0 0.0
      %5589 = vmatpush.msra.mxu0 0.0
      %5590 = vmatpush.msra.mxu0 0.0
      %5591 = vmatpush.msra.mxu0 0.0
      %5592 = vmatpush.msra.mxu0 0.0
      %5593 = vmatpush.msra.mxu0 0.0
      %5594 = vmatpush.msra.mxu0 0.0
      %5595 = vmatpush.msra.mxu0 0.0
      %5596 = vmatpush.msra.mxu0 %v5404
      %5597 = vmatpush.msra.mxu0 %v5396
      %5598 = vmatpush.msra.mxu0 %v5388
      %5599 = vmatpush.msra.mxu0 %v5380
      %5600 = vmatmul.f32.gmra.mxu0 %v5431
      %v5601 = vpop.f32.mrf.mxu0
      %v5602 = vadd.f32 %v5414, %v5601
      %5603 = vmatmul.f32.gmra.mxu0 %v5433
      %v5604 = vpop.f32.mrf.mxu0
      %v5605 = vadd.f32 %v5419, %v5604
      %5606 = vmatmul.f32.gmra.mxu0 %v5435
      %v5607 = vpop.f32.mrf.mxu0
      %v5608 = vadd.f32 %v5424, %v5607
      %5609 = vmatmul.f32.gmra.mxu0 %v5437
      %v5610 = vpop.f32.mrf.mxu0
      %v5611 = vadd.f32 %v5429, %v5610
      %5612 = vdwg.mxu0
      %5613 = vmatpush.msra.mxu0 0.0
      %5614 = vmatpush.msra.mxu0 0.0
      %5615 = vmatpush.msra.mxu0 0.0
      %5616 = vmatpush.msra.mxu0 0.0
      %5617 = vmatpush.msra.mxu0 0.0
      %5618 = vmatpush.msra.mxu0 0.0
      %5619 = vmatpush.msra.mxu0 0.0
      %5620 = vmatpush.msra.mxu0 0.0
      %5621 = vmatpush.msra.mxu0 0.0
      %5622 = vmatpush.msra.mxu0 0.0
      %5623 = vmatpush.msra.mxu0 0.0
      %5624 = vmatpush.msra.mxu0 0.0
      %5625 = vmatpush.msra.mxu0 %v5405
      %5626 = vmatpush.msra.mxu0 %v5397
      %5627 = vmatpush.msra.mxu0 %v5389
      %5628 = vmatpush.msra.mxu0 %v5381
      %5629 = vmatmul.f32.gmra.mxu0 %v5431
      %v5630 = vpop.f32.mrf.mxu0
      %v5631 = vadd.f32 %v5414, %v5630
      %5632 = vmatmul.f32.gmra.mxu0 %v5433
      %v5633 = vpop.f32.mrf.mxu0
      %v5634 = vadd.f32 %v5419, %v5633
      %5635 = vmatmul.f32.gmra.mxu0 %v5435
      %v5636 = vpop.f32.mrf.mxu0
      %v5637 = vadd.f32 %v5424, %v5636
      %5638 = vmatmul.f32.gmra.mxu0 %v5437
      %v5639 = vpop.f32.mrf.mxu0
      %v5640 = vadd.f32 %v5429, %v5639
      %5641 = vdwg.mxu0
      %5642 = vmatpush.msra.mxu0 0.0
      %5643 = vmatpush.msra.mxu0 0.0
      %5644 = vmatpush.msra.mxu0 0.0
      %5645 = vmatpush.msra.mxu0 0.0
      %5646 = vmatpush.msra.mxu0 0.0
      %5647 = vmatpush.msra.mxu0 0.0
      %5648 = vmatpush.msra.mxu0 0.0
      %5649 = vmatpush.msra.mxu0 0.0
      %5650 = vmatpush.msra.mxu0 0.0
      %5651 = vmatpush.msra.mxu0 0.0
      %5652 = vmatpush.msra.mxu0 0.0
      %5653 = vmatpush.msra.mxu0 0.0
      %5654 = vmatpush.msra.mxu0 %v5406
      %5655 = vmatpush.msra.mxu0 %v5398
      %5656 = vmatpush.msra.mxu0 %v5390
      %5657 = vmatpush.msra.mxu0 %v5382
      %5658 = vmatmul.f32.gmra.mxu0 %v5431
      %v5659 = vpop.f32.mrf.mxu0
      %v5660 = vadd.f32 %v5414, %v5659
      %5661 = vmatmul.f32.gmra.mxu0 %v5433
      %v5662 = vpop.f32.mrf.mxu0
      %v5663 = vadd.f32 %v5419, %v5662
      %5664 = vmatmul.f32.gmra.mxu0 %v5435
      %v5665 = vpop.f32.mrf.mxu0
      %v5666 = vadd.f32 %v5424, %v5665
      %5667 = vmatmul.f32.gmra.mxu0 %v5437
      %v5668 = vpop.f32.mrf.mxu0
      %v5669 = vadd.f32 %v5429, %v5668
      %5670 = vdwg.mxu0
      %v5671 = vmax.f32 %v5457, 0.0
      %v5672 = vmax.f32 %v5486, 0.0
      %v5673 = vmax.f32 %v5515, 0.0
      %v5674 = vmax.f32 %v5544, 0.0
      %v5675 = vmax.f32 %v5573, 0.0
      %v5676 = vmax.f32 %v5602, 0.0
      %v5677 = vmax.f32 %v5631, 0.0
      %v5678 = vmax.f32 %v5660, 0.0
      %v5679 = vmax.f32 %v5460, 0.0
      %v5680 = vmax.f32 %v5489, 0.0
      %v5681 = vmax.f32 %v5518, 0.0
      %v5682 = vmax.f32 %v5547, 0.0
      %v5683 = vmax.f32 %v5576, 0.0
      %v5684 = vmax.f32 %v5605, 0.0
      %v5685 = vmax.f32 %v5634, 0.0
      %v5686 = vmax.f32 %v5663, 0.0
      %v5687 = vmax.f32 %v5463, 0.0
      %v5688 = vmax.f32 %v5492, 0.0
      %v5689 = vmax.f32 %v5521, 0.0
      %v5690 = vmax.f32 %v5550, 0.0
      %v5691 = vmax.f32 %v5579, 0.0
      %v5692 = vmax.f32 %v5608, 0.0
      %v5693 = vmax.f32 %v5637, 0.0
      %v5694 = vmax.f32 %v5666, 0.0
      %v5695 = vmax.f32 %v5466, 0.0
      %v5696 = vmax.f32 %v5495, 0.0
      %v5697 = vmax.f32 %v5524, 0.0
      %v5698 = vmax.f32 %v5553, 0.0
      %v5699 = vmax.f32 %v5582, 0.0
      %v5700 = vmax.f32 %v5611, 0.0
      %v5701 = vmax.f32 %v5640, 0.0
      %v5702 = vmax.f32 %v5669, 0.0
      %v5703 = vld [vmem:[%s1 + $0x90] sm:$0x7]
      %5705 = vset.pattern.permute.xlu0 37
      %5706 = vperm.xlu0 %5705, %v5703
      %v5707 = vpop.permute.xlu0 %5706
      %v5709 = vsel %vm4533, %v5703, 0
      %5711 = vmatpush.msra.mxu0 0.0
      %5712 = vmatpush.msra.mxu0 0.0
      %5713 = vmatpush.msra.mxu0 0.0
      %5714 = vmatpush.msra.mxu0 0.0
      %5715 = vmatpush.msra.mxu0 0.0
      %5716 = vmatpush.msra.mxu0 0.0
      %5717 = vmatpush.msra.mxu0 0.0
      %5718 = vmatpush.msra.mxu0 0.0
      %5719 = vmatpush.msra.mxu0 0.0
      %5720 = vmatpush.msra.mxu0 0.0
      %5721 = vmatpush.msra.mxu0 0.0
      %5722 = vmatpush.msra.mxu0 0.0
      %5723 = vmatpush.msra.mxu0 %v5695
      %5724 = vmatpush.msra.mxu0 %v5687
      %5725 = vmatpush.msra.mxu0 %v5679
      %5726 = vmatpush.msra.mxu0 %v5671
      %5727 = vmatmul.f32.gmra.mxu0 %v5709
      %v5728 = vpop.f32.mrf.mxu0
      %v5729 = vadd.f32 %v5707, %v5728
      %5730 = vdwg.mxu0
      %5731 = vmatpush.msra.mxu0 0.0
      %5732 = vmatpush.msra.mxu0 0.0
      %5733 = vmatpush.msra.mxu0 0.0
      %5734 = vmatpush.msra.mxu0 0.0
      %5735 = vmatpush.msra.mxu0 0.0
      %5736 = vmatpush.msra.mxu0 0.0
      %5737 = vmatpush.msra.mxu0 0.0
      %5738 = vmatpush.msra.mxu0 0.0
      %5739 = vmatpush.msra.mxu0 0.0
      %5740 = vmatpush.msra.mxu0 0.0
      %5741 = vmatpush.msra.mxu0 0.0
      %5742 = vmatpush.msra.mxu0 0.0
      %5743 = vmatpush.msra.mxu0 %v5696
      %5744 = vmatpush.msra.mxu0 %v5688
      %5745 = vmatpush.msra.mxu0 %v5680
      %5746 = vmatpush.msra.mxu0 %v5672
      %5747 = vmatmul.f32.gmra.mxu0 %v5709
      %v5748 = vpop.f32.mrf.mxu0
      %v5749 = vadd.f32 %v5707, %v5748
      %5750 = vdwg.mxu0
      %5751 = vmatpush.msra.mxu0 0.0
      %5752 = vmatpush.msra.mxu0 0.0
      %5753 = vmatpush.msra.mxu0 0.0
      %5754 = vmatpush.msra.mxu0 0.0
      %5755 = vmatpush.msra.mxu0 0.0
      %5756 = vmatpush.msra.mxu0 0.0
      %5757 = vmatpush.msra.mxu0 0.0
      %5758 = vmatpush.msra.mxu0 0.0
      %5759 = vmatpush.msra.mxu0 0.0
      %5760 = vmatpush.msra.mxu0 0.0
      %5761 = vmatpush.msra.mxu0 0.0
      %5762 = vmatpush.msra.mxu0 0.0
      %5763 = vmatpush.msra.mxu0 %v5697
      %5764 = vmatpush.msra.mxu0 %v5689
      %5765 = vmatpush.msra.mxu0 %v5681
      %5766 = vmatpush.msra.mxu0 %v5673
      %5767 = vmatmul.f32.gmra.mxu0 %v5709
      %v5768 = vpop.f32.mrf.mxu0
      %v5769 = vadd.f32 %v5707, %v5768
      %5770 = vdwg.mxu0
      %5771 = vmatpush.msra.mxu0 0.0
      %5772 = vmatpush.msra.mxu0 0.0
      %5773 = vmatpush.msra.mxu0 0.0
      %5774 = vmatpush.msra.mxu0 0.0
      %5775 = vmatpush.msra.mxu0 0.0
      %5776 = vmatpush.msra.mxu0 0.0
      %5777 = vmatpush.msra.mxu0 0.0
      %5778 = vmatpush.msra.mxu0 0.0
      %5779 = vmatpush.msra.mxu0 0.0
      %5780 = vmatpush.msra.mxu0 0.0
      %5781 = vmatpush.msra.mxu0 0.0
      %5782 = vmatpush.msra.mxu0 0.0
      %5783 = vmatpush.msra.mxu0 %v5698
      %5784 = vmatpush.msra.mxu0 %v5690
      %5785 = vmatpush.msra.mxu0 %v5682
      %5786 = vmatpush.msra.mxu0 %v5674
      %5787 = vmatmul.f32.gmra.mxu0 %v5709
      %v5788 = vpop.f32.mrf.mxu0
      %v5789 = vadd.f32 %v5707, %v5788
      %5790 = vdwg.mxu0
      %5791 = vmatpush.msra.mxu0 0.0
      %5792 = vmatpush.msra.mxu0 0.0
      %5793 = vmatpush.msra.mxu0 0.0
      %5794 = vmatpush.msra.mxu0 0.0
      %5795 = vmatpush.msra.mxu0 0.0
      %5796 = vmatpush.msra.mxu0 0.0
      %5797 = vmatpush.msra.mxu0 0.0
      %5798 = vmatpush.msra.mxu0 0.0
      %5799 = vmatpush.msra.mxu0 0.0
      %5800 = vmatpush.msra.mxu0 0.0
      %5801 = vmatpush.msra.mxu0 0.0
      %5802 = vmatpush.msra.mxu0 0.0
      %5803 = vmatpush.msra.mxu0 %v5699
      %5804 = vmatpush.msra.mxu0 %v5691
      %5805 = vmatpush.msra.mxu0 %v5683
      %5806 = vmatpush.msra.mxu0 %v5675
      %5807 = vmatmul.f32.gmra.mxu0 %v5709
      %v5808 = vpop.f32.mrf.mxu0
      %v5809 = vadd.f32 %v5707, %v5808
      %5810 = vdwg.mxu0
      %5811 = vmatpush.msra.mxu0 0.0
      %5812 = vmatpush.msra.mxu0 0.0
      %5813 = vmatpush.msra.mxu0 0.0
      %5814 = vmatpush.msra.mxu0 0.0
      %5815 = vmatpush.msra.mxu0 0.0
      %5816 = vmatpush.msra.mxu0 0.0
      %5817 = vmatpush.msra.mxu0 0.0
      %5818 = vmatpush.msra.mxu0 0.0
      %5819 = vmatpush.msra.mxu0 0.0
      %5820 = vmatpush.msra.mxu0 0.0
      %5821 = vmatpush.msra.mxu0 0.0
      %5822 = vmatpush.msra.mxu0 0.0
      %5823 = vmatpush.msra.mxu0 %v5700
      %5824 = vmatpush.msra.mxu0 %v5692
      %5825 = vmatpush.msra.mxu0 %v5684
      %5826 = vmatpush.msra.mxu0 %v5676
      %5827 = vmatmul.f32.gmra.mxu0 %v5709
      %v5828 = vpop.f32.mrf.mxu0
      %v5829 = vadd.f32 %v5707, %v5828
      %5830 = vdwg.mxu0
      %5831 = vmatpush.msra.mxu0 0.0
      %5832 = vmatpush.msra.mxu0 0.0
      %5833 = vmatpush.msra.mxu0 0.0
      %5834 = vmatpush.msra.mxu0 0.0
      %5835 = vmatpush.msra.mxu0 0.0
      %5836 = vmatpush.msra.mxu0 0.0
      %5837 = vmatpush.msra.mxu0 0.0
      %5838 = vmatpush.msra.mxu0 0.0
      %5839 = vmatpush.msra.mxu0 0.0
      %5840 = vmatpush.msra.mxu0 0.0
      %5841 = vmatpush.msra.mxu0 0.0
      %5842 = vmatpush.msra.mxu0 0.0
      %5843 = vmatpush.msra.mxu0 %v5701
      %5844 = vmatpush.msra.mxu0 %v5693
      %5845 = vmatpush.msra.mxu0 %v5685
      %5846 = vmatpush.msra.mxu0 %v5677
      %5847 = vmatmul.f32.gmra.mxu0 %v5709
      %v5848 = vpop.f32.mrf.mxu0
      %v5849 = vadd.f32 %v5707, %v5848
      %5850 = vdwg.mxu0
      %5851 = vmatpush.msra.mxu0 0.0
      %5852 = vmatpush.msra.mxu0 0.0
      %5853 = vmatpush.msra.mxu0 0.0
      %5854 = vmatpush.msra.mxu0 0.0
      %5855 = vmatpush.msra.mxu0 0.0
      %5856 = vmatpush.msra.mxu0 0.0
      %5857 = vmatpush.msra.mxu0 0.0
      %5858 = vmatpush.msra.mxu0 0.0
      %5859 = vmatpush.msra.mxu0 0.0
      %5860 = vmatpush.msra.mxu0 0.0
      %5861 = vmatpush.msra.mxu0 0.0
      %5862 = vmatpush.msra.mxu0 0.0
      %5863 = vmatpush.msra.mxu0 %v5702
      %5864 = vmatpush.msra.mxu0 %v5694
      %5865 = vmatpush.msra.mxu0 %v5686
      %5866 = vmatpush.msra.mxu0 %v5678
      %5867 = vmatmul.f32.gmra.mxu0 %v5709
      %v5868 = vpop.f32.mrf.mxu0
      %v5869 = vadd.f32 %v5707, %v5868
      %5870 = vdwg.mxu0
      %v5879 = vrot.slane %v5749, 4
      %v5880 = vrot.slane %v5789, 4
      %v5881 = vrot.slane %v5829, 4
      %v5882 = vrot.slane %v5869, 4
      %v5883 = vsel %vm1500, %v5729, %v5879
      %v5884 = vsel %vm1500, %v5769, %v5880
      %v5885 = vsel %vm1500, %v5809, %v5881
      %v5886 = vsel %vm1500, %v5849, %v5882
      %5891 = vst [vmem:[%s145] sm:$0x77] %v5883
      %5892 = vst [vmem:[%s145 + $0x8] sm:$0x77] %v5884
      %5893 = vst [vmem:[%s145 + $0x10] sm:$0x77] %v5885
      %5894 = vst [vmem:[%s145 + $0x18] sm:$0x77] %v5886
      %s5895 = smul.u32 8, %s13
      %p5896 = scmp.lt.s32.totalorder %s5895, 15
      %s5897 = scalar_select %p5896, %s5895, 15
      %s5898 = smul.addr %s5897, 4
      %s5899 = scalar_lea.vmem %s2, %s5898
      // Predicated region
      $region29: #{inr_forward.1} parent=27 // pred_check
        %p5900 = pneg %p78
      $region30: #{inr_forward.1} parent=27 // pred_check_branch
        %5902 = sbr.rel (%p5900) target = $region32
      $region31: #{inr_forward.1} parent=27 // pred_region
        %s5903 = smul.u32 8, %s13
      $region32: #{inr_forward.1} parent=27 // pred_fallthru
        _
    $region28: #{inr_forward.1} parent=5 // pred_fallthru
      _
    %p5904 = scmp.le.s32.totalorder 2, %s8
    // Predicated region
    $region33: #{inr_forward.1} parent=5 // pred_check
      %p5905 = pneg %p5904
    $region34: #{inr_forward.1} parent=5 // pred_check_branch
      %5907 = sbr.rel (%p5905) target = $region36
    $region35: #{inr_forward.1} parent=5 // pred_region
      %s5908 = ssub.s32 %s8, 2
      // Predicated region
      $region37: #{inr_forward.1} parent=35 // pred_check
        %p5909 = pneg %p84
      $region38: #{inr_forward.1} parent=35 // pred_check_branch
        %5911 = sbr.rel (%p5909) target = $region40
      $region39: #{inr_forward.1} parent=35 // pred_region
        %s5912 = smul.u32 8, %s14
        %p5913 = scmp.lt.s32.totalorder %s5912, 15
        %s5914 = scalar_select %p5913, %s5912, 15
        %s5915 = smul.addr %s5914, 4
        %s5916 = scalar_lea.vmem %s2, %s5915
      $region40: #{inr_forward.1} parent=35 // pred_fallthru
        _
    $region36: #{inr_forward.1} parent=5 // pred_fallthru
      _
  $region6: #{inr_forward.1} parent=0 // loop_footer
    %s12 = sadd.s32 1, %s8
  $region7: #{inr_forward.1} parent=0 // loop_footer_branch
    %7 = sbr.rel target = $region3
  $region8: #{inr_forward.1} parent=0 // loop_exit
    _

</llo_original>
